<compile_context>
chip_gen: v7x
topology: tpu7x:2x2x1
jax: 0.10.0
libtpu: 0.0.40
codegen_flags: <defaults>
</compile_context>

<pallas_src>
import numpy as np

import jax
import jax.numpy as jnp
from jax.experimental import pallas as pl
from jax.experimental.pallas import tpu as pltpu


def _downsample_conv_relu_kernel(x_ref, r_ref, w_ref, b_ref, o_ref):
    """One (n, ho-tile) grid step.

    x_ref : (1, Cin, tile_ho, k*W)   input row-groups, straight from NCHW (f32)
    r_ref : (k*W, k*k*Wo)            bf16 0/1 unfold matrix (VMEM resident)
    w_ref : (k*k, Cout, Cin)         bf16 conv weights per (kh, kw) tap (resident)
    b_ref : (Cout, 1)                f32 bias (resident)
    o_ref : (1, Cout, tile_ho, Wo)   output tile (bf16 by default)
    """
    tile_ho = x_ref.shape[2]
    k2 = w_ref.shape[0]
    wo = o_ref.shape[3]

    fold = r_ref[...]                     # hoisted: loaded once per grid step
    w_all = w_ref[...]
    bias = b_ref[...]
    cdt = fold.dtype

    for iho in range(tile_ho):            # static unroll (tile_ho is small, <= cap)
        row = x_ref[0, :, iho, :].astype(cdt)                 # (Cin, k*W)
        # MXU "unfold": taps[ci, (kh*k+kw)*Wo + wo] = row[ci, kh*W + k*wo + kw]
        taps = jnp.dot(row, fold,
                       preferred_element_type=jnp.float32).astype(cdt)  # (Cin, k2*Wo)
        acc = jnp.dot(w_all[0], taps[:, :wo],
                      preferred_element_type=jnp.float32)               # (Cout, Wo)
        for q in range(1, k2):
            acc = acc + jnp.dot(w_all[q], taps[:, q * wo:(q + 1) * wo],
                                preferred_element_type=jnp.float32)
        o_ref[0, :, iho, :] = jnp.maximum(acc + bias, 0.0).astype(o_ref.dtype)


def _fold_matrix(k, W, Wo, dtype):
    """0/1 matrix R with R[kh*W + k*wo + kw, (kh*k + kw)*Wo + wo] = 1."""
    R = np.zeros((k * W, k * k * Wo), np.float32)
    kh, kw, wo = np.meshgrid(np.arange(k), np.arange(k), np.arange(Wo), indexing="ij")
    rows = (kh * W + k * wo + kw).ravel()
    cols = ((kh * k + kw) * Wo + wo).ravel()
    R[rows, cols] = 1.0
    return jnp.asarray(R, dtype=dtype)


def _physical_vmem_bytes():
    try:
        info = pltpu.get_tpu_info()
        v = getattr(info, "vmem_capacity_bytes", None)
        if v:
            return int(v)
    except Exception:
        pass
    return 64 * 2**20      # conservative fallback = v7x per-core VMEM


def _pick_tile_ho(N, Ho, row_bytes, block_budget, cap=32):
    """Largest tile_ho that divides Ho, satisfies the (8,128) block constraint
    (tile_ho % 8 == 0 or tile_ho == Ho), keeps the double-buffered in+out blocks
    under block_budget, and leaves >= 2 grid steps for v7x megacore balance."""
    valid = [t for t in range(1, Ho + 1)
             if Ho % t == 0 and (t % 8 == 0 or t == Ho)]
    fit = [t for t in valid if t <= cap and 2 * t * row_bytes <= block_budget]
    tile = max(fit) if fit else min(valid)
    if N * (Ho // tile) < 2:
        smaller = [t for t in valid if t < tile]
        if smaller:
            tile = max(smaller)
    return tile


def downsampling_conv_block(x_nchw, weight, bias, stride=2,
                            compute_dtype=jnp.bfloat16,
                            out_dtype=jnp.bfloat16,
                            max_tile_ho=32):
    """Forward pass of DownsamplingConvBlock (normalization='none').

    x_nchw : (N, Cin, H, W) float32
    weight : (Cout, Cin, k, k) float32   (PyTorch Conv2d layout), k == stride
    bias   : (Cout,) float32
    returns: (N, Cout, H//k, W//k) in out_dtype (bf16 by default)
    """
    N, Cin, H, W = x_nchw.shape
    Cout = weight.shape[0]
    k = stride
    assert H % k == 0 and W % k == 0
    Ho, Wo = H // k, W // k
    kW = k * W
    k2 = k * k

    # FREE reshape: groups the k input rows feeding each output row into one flat
    # trailing axis of length k*W.  No HBM shuffle, no im2col materialization.
    x4 = x_nchw.reshape(N, Cin, Ho, kW)

    # weight (Cout, Cin, kh, kw) -> (k*k, Cout, Cin); tap index q = kh*k + kw.
    w_stack = weight.transpose(2, 3, 0, 1).reshape(k2, Cout, Cin).astype(compute_dtype)
    b_col = bias.reshape(Cout, 1).astype(jnp.float32)
    fold = _fold_matrix(k, W, Wo, compute_dtype)          # (k*W, k*k*Wo)

    # ---- generation-aware tile sizing / VMEM budget ----
    in_itm = x_nchw.dtype.itemsize
    out_itm = jnp.dtype(out_dtype).itemsize
    row_bytes = Cin * kW * in_itm + Cout * Wo * out_itm   # in+out bytes per output row
    resident = (fold.size + w_stack.size) * jnp.dtype(compute_dtype).itemsize \
        + b_col.size * 4
    phys = _physical_vmem_bytes()
    tile_ho = _pick_tile_ho(N, Ho, row_bytes, block_budget=phys // 4, cap=max_tile_ho)
    wset = 2 * tile_ho * row_bytes + 2 * resident
    vmem_limit = int(min(0.75 * phys, max(32 * 2**20, 3 * wset)))

    grid = (N, Ho // tile_ho)

    out = pl.pallas_call(
        _downsample_conv_relu_kernel,
        out_shape=jax.ShapeDtypeStruct((N, Cout, Ho, Wo), out_dtype),
        grid=grid,
        in_specs=[
            pl.BlockSpec((1, Cin, tile_ho, kW), lambda n, t: (n, 0, t, 0)),
            pl.BlockSpec((kW, k2 * Wo), lambda n, t: (0, 0)),       # unfold, resident
            pl.BlockSpec((k2, Cout, Cin), lambda n, t: (0, 0, 0)),  # weights, resident
            pl.BlockSpec((Cout, 1), lambda n, t: (0, 0)),           # bias, resident
        ],
        out_specs=pl.BlockSpec((1, Cout, tile_ho, Wo), lambda n, t: (n, 0, t, 0)),
        compiler_params=pltpu.CompilerParams(
            dimension_semantics=("parallel", "parallel"),
            vmem_limit_bytes=vmem_limit),
    )(x4, fold, w_stack, b_col)

    return out   # already NCHW: (N, Cout, Ho, Wo)


def _reference_conv(x_nchw, weight, bias, stride=2):
    """Pure-JAX reference (lax conv) for correctness checking."""
    out = jax.lax.conv_general_dilated(
        x_nchw, weight,
        window_strides=(stride, stride),
        padding="VALID",
        dimension_numbers=("NCHW", "OIHW", "NCHW"),
    )
    out = out + bias.reshape(1, -1, 1, 1)
    return jnp.maximum(out, 0.0)


if __name__ == "__main__":
    # Shapes consistent with DownsamplingConvBlock(n_filters_in=4, n_filters_out=8, stride=2)
    N, Cin, H, W = 2, 4, 16, 16
    Cout, stride = 8, 2

    key = jax.random.PRNGKey(0)
    kx, kwt, kb = jax.random.split(key, 3)

    x = jax.random.normal(kx, (N, Cin, H, W), dtype=jnp.float32)
    weight = 0.1 * jax.random.normal(kwt, (Cout, Cin, stride, stride),
                                     dtype=jnp.float32)
    bias = 0.1 * jax.random.normal(kb, (Cout,), dtype=jnp.float32)

    out = jax.block_until_ready(
        downsampling_conv_block(x, weight, bias, stride=stride))
    assert out.shape == (N, Cout, H // stride, W // stride), out.shape
    out_f32 = out.astype(jnp.float32)

    # Tight check vs a reference using bf16-rounded inputs (matches the kernel's
    # compute dtype; extra slack for the bf16 output rounding), plus a looser
    # sanity check against the full-f32 reference.
    x_b = x.astype(jnp.bfloat16).astype(jnp.float32)
    w_b = weight.astype(jnp.bfloat16).astype(jnp.float32)
    ref_b = jax.block_until_ready(_reference_conv(x_b, w_b, bias, stride=stride))
    ref_f32 = jax.block_until_ready(_reference_conv(x, weight, bias, stride=stride))

    assert jnp.allclose(out_f32, ref_b, atol=2e-2, rtol=2e-2), "mismatch vs bf16 reference"
    assert jnp.allclose(out_f32, ref_f32, atol=1e-1, rtol=1e-1), "mismatch vs f32 reference"

    print("KERNEL_OK")
</pallas_src>

<mosaic_0001>
module attributes {stable_mosaic.version = 11 : i64} {
  func.func @_downsample_conv_relu_kernel(%arg0: i32, %arg1: i32, %arg2: memref<1x4x8x32xf32, #tpu.memory_space<vmem>>, %arg3: memref<32x32xbf16, #tpu.memory_space<vmem>>, %arg4: memref<4x8x4xbf16, #tpu.memory_space<vmem>>, %arg5: memref<8x1xf32, #tpu.memory_space<vmem>>, %arg6: memref<1x8x8x8xbf16, #tpu.memory_space<vmem>>) attributes {dimension_semantics = [#tpu.dimension_semantics<parallel>, #tpu.dimension_semantics<parallel>], iteration_bounds = array<i64: 2, 1>, scalar_prefetch = 0 : i64, scratch_operands = 0 : i64, tpu.core_type = #tpu.core_type<tc>, window_params = [{transform_indices = @transform_0, window_bounds = array<i64: 1, 4, 8, 32>}, {pipeline_mode = #tpu.pipeline_mode<synchronous>, transform_indices = @transform_1, window_bounds = array<i64: 32, 32>}, {pipeline_mode = #tpu.pipeline_mode<synchronous>, transform_indices = @transform_2, window_bounds = array<i64: 4, 8, 4>}, {pipeline_mode = #tpu.pipeline_mode<synchronous>, transform_indices = @transform_3, window_bounds = array<i64: 8, 1>}, {transform_indices = @transform_4, window_bounds = array<i64: 1, 8, 8, 8>}]} {
    %c0 = arith.constant 0 : index
    %c0_0 = arith.constant 0 : index
    %0 = vector.load %arg3[%c0, %c0_0] : memref<32x32xbf16, #tpu.memory_space<vmem>>, vector<32x32xbf16>
    %c0_1 = arith.constant 0 : index
    %c0_2 = arith.constant 0 : index
    %c0_3 = arith.constant 0 : index
    %1 = vector.load %arg4[%c0_1, %c0_2, %c0_3] : memref<4x8x4xbf16, #tpu.memory_space<vmem>>, vector<4x8x4xbf16>
    %c0_4 = arith.constant 0 : index
    %c0_5 = arith.constant 0 : index
    %2 = vector.load %arg5[%c0_4, %c0_5] : memref<8x1xf32, #tpu.memory_space<vmem>>, vector<8x1xf32>
    %c0_6 = arith.constant 0 : index
    %c0_7 = arith.constant 0 : index
    %c0_8 = arith.constant 0 : index
    %c0_9 = arith.constant 0 : index
    %3 = vector.load %arg2[%c0_6, %c0_7, %c0_8, %c0_9] : memref<1x4x8x32xf32, #tpu.memory_space<vmem>>, vector<1x4x1x32xf32>
    %4 = vector.shape_cast %3 : vector<1x4x1x32xf32> to vector<4x32xf32>
    %5 = arith.truncf %4 : vector<4x32xf32> to vector<4x32xbf16>
    %cst = arith.constant dense<0.000000e+00> : vector<4x32xf32>
    %6 = tpu.matmul %5, %0, %cst {dimension_numbers = #tpu.dot_dimension_numbers<[1], [0], [0], [1], [0, 0, 1, 1], [], []>} : vector<4x32xbf16>, vector<32x32xbf16>, vector<4x32xf32> -> vector<4x32xf32>
    %7 = arith.truncf %6 : vector<4x32xf32> to vector<4x32xbf16>
    %8 = vector.extract_strided_slice %1 {offsets = [0, 0, 0], sizes = [1, 8, 4], strides = [1, 1, 1]} : vector<4x8x4xbf16> to vector<1x8x4xbf16>
    %9 = vector.shape_cast %8 : vector<1x8x4xbf16> to vector<8x4xbf16>
    %10 = vector.extract_strided_slice %7 {offsets = [0, 0], sizes = [4, 8], strides = [1, 1]} : vector<4x32xbf16> to vector<4x8xbf16>
    %cst_10 = arith.constant dense<0.000000e+00> : vector<8x8xf32>
    %11 = tpu.matmul %9, %10, %cst_10 {dimension_numbers = #tpu.dot_dimension_numbers<[1], [0], [0], [1], [0, 0, 1, 1], [], []>} : vector<8x4xbf16>, vector<4x8xbf16>, vector<8x8xf32> -> vector<8x8xf32>
    %12 = vector.extract_strided_slice %1 {offsets = [1, 0, 0], sizes = [1, 8, 4], strides = [1, 1, 1]} : vector<4x8x4xbf16> to vector<1x8x4xbf16>
    %13 = vector.shape_cast %12 : vector<1x8x4xbf16> to vector<8x4xbf16>
    %14 = vector.extract_strided_slice %7 {offsets = [0, 8], sizes = [4, 8], strides = [1, 1]} : vector<4x32xbf16> to vector<4x8xbf16>
    %cst_11 = arith.constant dense<0.000000e+00> : vector<8x8xf32>
    %15 = tpu.matmul %13, %14, %cst_11 {dimension_numbers = #tpu.dot_dimension_numbers<[1], [0], [0], [1], [0, 0, 1, 1], [], []>} : vector<8x4xbf16>, vector<4x8xbf16>, vector<8x8xf32> -> vector<8x8xf32>
    %16 = arith.addf %11, %15 : vector<8x8xf32>
    %17 = vector.extract_strided_slice %1 {offsets = [2, 0, 0], sizes = [1, 8, 4], strides = [1, 1, 1]} : vector<4x8x4xbf16> to vector<1x8x4xbf16>
    %18 = vector.shape_cast %17 : vector<1x8x4xbf16> to vector<8x4xbf16>
    %19 = vector.extract_strided_slice %7 {offsets = [0, 16], sizes = [4, 8], strides = [1, 1]} : vector<4x32xbf16> to vector<4x8xbf16>
    %cst_12 = arith.constant dense<0.000000e+00> : vector<8x8xf32>
    %20 = tpu.matmul %18, %19, %cst_12 {dimension_numbers = #tpu.dot_dimension_numbers<[1], [0], [0], [1], [0, 0, 1, 1], [], []>} : vector<8x4xbf16>, vector<4x8xbf16>, vector<8x8xf32> -> vector<8x8xf32>
    %21 = arith.addf %16, %20 : vector<8x8xf32>
    %22 = vector.extract_strided_slice %1 {offsets = [3, 0, 0], sizes = [1, 8, 4], strides = [1, 1, 1]} : vector<4x8x4xbf16> to vector<1x8x4xbf16>
    %23 = vector.shape_cast %22 : vector<1x8x4xbf16> to vector<8x4xbf16>
    %24 = vector.extract_strided_slice %7 {offsets = [0, 24], sizes = [4, 8], strides = [1, 1]} : vector<4x32xbf16> to vector<4x8xbf16>
    %cst_13 = arith.constant dense<0.000000e+00> : vector<8x8xf32>
    %25 = tpu.matmul %23, %24, %cst_13 {dimension_numbers = #tpu.dot_dimension_numbers<[1], [0], [0], [1], [0, 0, 1, 1], [], []>} : vector<8x4xbf16>, vector<4x8xbf16>, vector<8x8xf32> -> vector<8x8xf32>
    %26 = arith.addf %21, %25 : vector<8x8xf32>
    %27 = vector.broadcast %2 : vector<8x1xf32> to vector<8x8xf32>
    %28 = arith.addf %26, %27 : vector<8x8xf32>
    %cst_14 = arith.constant 0.000000e+00 : f32
    %29 = vector.broadcast %cst_14 : f32 to vector<8x8xf32>
    %30 = arith.maximumf %28, %29 : vector<8x8xf32>
    %31 = arith.truncf %30 : vector<8x8xf32> to vector<8x8xbf16>
    %c0_15 = arith.constant 0 : index
    %c0_16 = arith.constant 0 : index
    %c0_17 = arith.constant 0 : index
    %c0_18 = arith.constant 0 : index
    %32 = vector.load %arg6[%c0_15, %c0_16, %c0_17, %c0_18] : memref<1x8x8x8xbf16, #tpu.memory_space<vmem>>, vector<1x8x1x8xbf16>
    %33 = vector.shape_cast %32 : vector<1x8x1x8xbf16> to vector<8x8xbf16>
    %34 = vector.shape_cast %31 : vector<8x8xbf16> to vector<1x8x1x8xbf16>
    tpu.vector_store %arg6[%c0_15, %c0_16, %c0_17, %c0_18], %34 {strides = array<i32>} : memref<1x8x8x8xbf16, #tpu.memory_space<vmem>>, vector<1x8x1x8xbf16>,
    %c0_19 = arith.constant 0 : index
    %c0_20 = arith.constant 0 : index
    %c1 = arith.constant 1 : index
    %c0_21 = arith.constant 0 : index
    %35 = vector.load %arg2[%c0_19, %c0_20, %c1, %c0_21] : memref<1x4x8x32xf32, #tpu.memory_space<vmem>>, vector<1x4x1x32xf32>
    %36 = vector.shape_cast %35 : vector<1x4x1x32xf32> to vector<4x32xf32>
    %37 = arith.truncf %36 : vector<4x32xf32> to vector<4x32xbf16>
    %cst_22 = arith.constant dense<0.000000e+00> : vector<4x32xf32>
    %38 = tpu.matmul %37, %0, %cst_22 {dimension_numbers = #tpu.dot_dimension_numbers<[1], [0], [0], [1], [0, 0, 1, 1], [], []>} : vector<4x32xbf16>, vector<32x32xbf16>, vector<4x32xf32> -> vector<4x32xf32>
    %39 = arith.truncf %38 : vector<4x32xf32> to vector<4x32xbf16>
    %40 = vector.extract_strided_slice %1 {offsets = [0, 0, 0], sizes = [1, 8, 4], strides = [1, 1, 1]} : vector<4x8x4xbf16> to vector<1x8x4xbf16>
    %41 = vector.shape_cast %40 : vector<1x8x4xbf16> to vector<8x4xbf16>
    %42 = vector.extract_strided_slice %39 {offsets = [0, 0], sizes = [4, 8], strides = [1, 1]} : vector<4x32xbf16> to vector<4x8xbf16>
    %cst_23 = arith.constant dense<0.000000e+00> : vector<8x8xf32>
    %43 = tpu.matmul %41, %42, %cst_23 {dimension_numbers = #tpu.dot_dimension_numbers<[1], [0], [0], [1], [0, 0, 1, 1], [], []>} : vector<8x4xbf16>, vector<4x8xbf16>, vector<8x8xf32> -> vector<8x8xf32>
    %44 = vector.extract_strided_slice %1 {offsets = [1, 0, 0], sizes = [1, 8, 4], strides = [1, 1, 1]} : vector<4x8x4xbf16> to vector<1x8x4xbf16>
    %45 = vector.shape_cast %44 : vector<1x8x4xbf16> to vector<8x4xbf16>
    %46 = vector.extract_strided_slice %39 {offsets = [0, 8], sizes = [4, 8], strides = [1, 1]} : vector<4x32xbf16> to vector<4x8xbf16>
    %cst_24 = arith.constant dense<0.000000e+00> : vector<8x8xf32>
    %47 = tpu.matmul %45, %46, %cst_24 {dimension_numbers = #tpu.dot_dimension_numbers<[1], [0], [0], [1], [0, 0, 1, 1], [], []>} : vector<8x4xbf16>, vector<4x8xbf16>, vector<8x8xf32> -> vector<8x8xf32>
    %48 = arith.addf %43, %47 : vector<8x8xf32>
    %49 = vector.extract_strided_slice %1 {offsets = [2, 0, 0], sizes = [1, 8, 4], strides = [1, 1, 1]} : vector<4x8x4xbf16> to vector<1x8x4xbf16>
    %50 = vector.shape_cast %49 : vector<1x8x4xbf16> to vector<8x4xbf16>
    %51 = vector.extract_strided_slice %39 {offsets = [0, 16], sizes = [4, 8], strides = [1, 1]} : vector<4x32xbf16> to vector<4x8xbf16>
    %cst_25 = arith.constant dense<0.000000e+00> : vector<8x8xf32>
    %52 = tpu.matmul %50, %51, %cst_25 {dimension_numbers = #tpu.dot_dimension_numbers<[1], [0], [0], [1], [0, 0, 1, 1], [], []>} : vector<8x4xbf16>, vector<4x8xbf16>, vector<8x8xf32> -> vector<8x8xf32>
    %53 = arith.addf %48, %52 : vector<8x8xf32>
    %54 = vector.extract_strided_slice %1 {offsets = [3, 0, 0], sizes = [1, 8, 4], strides = [1, 1, 1]} : vector<4x8x4xbf16> to vector<1x8x4xbf16>
    %55 = vector.shape_cast %54 : vector<1x8x4xbf16> to vector<8x4xbf16>
    %56 = vector.extract_strided_slice %39 {offsets = [0, 24], sizes = [4, 8], strides = [1, 1]} : vector<4x32xbf16> to vector<4x8xbf16>
    %cst_26 = arith.constant dense<0.000000e+00> : vector<8x8xf32>
    %57 = tpu.matmul %55, %56, %cst_26 {dimension_numbers = #tpu.dot_dimension_numbers<[1], [0], [0], [1], [0, 0, 1, 1], [], []>} : vector<8x4xbf16>, vector<4x8xbf16>, vector<8x8xf32> -> vector<8x8xf32>
    %58 = arith.addf %53, %57 : vector<8x8xf32>
    %59 = vector.broadcast %2 : vector<8x1xf32> to vector<8x8xf32>
    %60 = arith.addf %58, %59 : vector<8x8xf32>
    %cst_27 = arith.constant 0.000000e+00 : f32
    %61 = vector.broadcast %cst_27 : f32 to vector<8x8xf32>
    %62 = arith.maximumf %60, %61 : vector<8x8xf32>
    %63 = arith.truncf %62 : vector<8x8xf32> to vector<8x8xbf16>
    %c0_28 = arith.constant 0 : index
    %c0_29 = arith.constant 0 : index
    %c1_30 = arith.constant 1 : index
    %c0_31 = arith.constant 0 : index
    %64 = vector.load %arg6[%c0_28, %c0_29, %c1_30, %c0_31] : memref<1x8x8x8xbf16, #tpu.memory_space<vmem>>, vector<1x8x1x8xbf16>
    %65 = vector.shape_cast %64 : vector<1x8x1x8xbf16> to vector<8x8xbf16>
    %66 = vector.shape_cast %63 : vector<8x8xbf16> to vector<1x8x1x8xbf16>
    tpu.vector_store %arg6[%c0_28, %c0_29, %c1_30, %c0_31], %66 {strides = array<i32>} : memref<1x8x8x8xbf16, #tpu.memory_space<vmem>>, vector<1x8x1x8xbf16>,
    %c0_32 = arith.constant 0 : index
    %c0_33 = arith.constant 0 : index
    %c2 = arith.constant 2 : index
    %c0_34 = arith.constant 0 : index
    %67 = vector.load %arg2[%c0_32, %c0_33, %c2, %c0_34] : memref<1x4x8x32xf32, #tpu.memory_space<vmem>>, vector<1x4x1x32xf32>
    %68 = vector.shape_cast %67 : vector<1x4x1x32xf32> to vector<4x32xf32>
    %69 = arith.truncf %68 : vector<4x32xf32> to vector<4x32xbf16>
    %cst_35 = arith.constant dense<0.000000e+00> : vector<4x32xf32>
    %70 = tpu.matmul %69, %0, %cst_35 {dimension_numbers = #tpu.dot_dimension_numbers<[1], [0], [0], [1], [0, 0, 1, 1], [], []>} : vector<4x32xbf16>, vector<32x32xbf16>, vector<4x32xf32> -> vector<4x32xf32>
    %71 = arith.truncf %70 : vector<4x32xf32> to vector<4x32xbf16>
    %72 = vector.extract_strided_slice %1 {offsets = [0, 0, 0], sizes = [1, 8, 4], strides = [1, 1, 1]} : vector<4x8x4xbf16> to vector<1x8x4xbf16>
    %73 = vector.shape_cast %72 : vector<1x8x4xbf16> to vector<8x4xbf16>
    %74 = vector.extract_strided_slice %71 {offsets = [0, 0], sizes = [4, 8], strides = [1, 1]} : vector<4x32xbf16> to vector<4x8xbf16>
    %cst_36 = arith.constant dense<0.000000e+00> : vector<8x8xf32>
    %75 = tpu.matmul %73, %74, %cst_36 {dimension_numbers = #tpu.dot_dimension_numbers<[1], [0], [0], [1], [0, 0, 1, 1], [], []>} : vector<8x4xbf16>, vector<4x8xbf16>, vector<8x8xf32> -> vector<8x8xf32>
    %76 = vector.extract_strided_slice %1 {offsets = [1, 0, 0], sizes = [1, 8, 4], strides = [1, 1, 1]} : vector<4x8x4xbf16> to vector<1x8x4xbf16>
    %77 = vector.shape_cast %76 : vector<1x8x4xbf16> to vector<8x4xbf16>
    %78 = vector.extract_strided_slice %71 {offsets = [0, 8], sizes = [4, 8], strides = [1, 1]} : vector<4x32xbf16> to vector<4x8xbf16>
    %cst_37 = arith.constant dense<0.000000e+00> : vector<8x8xf32>
    %79 = tpu.matmul %77, %78, %cst_37 {dimension_numbers = #tpu.dot_dimension_numbers<[1], [0], [0], [1], [0, 0, 1, 1], [], []>} : vector<8x4xbf16>, vector<4x8xbf16>, vector<8x8xf32> -> vector<8x8xf32>
    %80 = arith.addf %75, %79 : vector<8x8xf32>
    %81 = vector.extract_strided_slice %1 {offsets = [2, 0, 0], sizes = [1, 8, 4], strides = [1, 1, 1]} : vector<4x8x4xbf16> to vector<1x8x4xbf16>
    %82 = vector.shape_cast %81 : vector<1x8x4xbf16> to vector<8x4xbf16>
    %83 = vector.extract_strided_slice %71 {offsets = [0, 16], sizes = [4, 8], strides = [1, 1]} : vector<4x32xbf16> to vector<4x8xbf16>
    %cst_38 = arith.constant dense<0.000000e+00> : vector<8x8xf32>
    %84 = tpu.matmul %82, %83, %cst_38 {dimension_numbers = #tpu.dot_dimension_numbers<[1], [0], [0], [1], [0, 0, 1, 1], [], []>} : vector<8x4xbf16>, vector<4x8xbf16>, vector<8x8xf32> -> vector<8x8xf32>
    %85 = arith.addf %80, %84 : vector<8x8xf32>
    %86 = vector.extract_strided_slice %1 {offsets = [3, 0, 0], sizes = [1, 8, 4], strides = [1, 1, 1]} : vector<4x8x4xbf16> to vector<1x8x4xbf16>
    %87 = vector.shape_cast %86 : vector<1x8x4xbf16> to vector<8x4xbf16>
    %88 = vector.extract_strided_slice %71 {offsets = [0, 24], sizes = [4, 8], strides = [1, 1]} : vector<4x32xbf16> to vector<4x8xbf16>
    %cst_39 = arith.constant dense<0.000000e+00> : vector<8x8xf32>
    %89 = tpu.matmul %87, %88, %cst_39 {dimension_numbers = #tpu.dot_dimension_numbers<[1], [0], [0], [1], [0, 0, 1, 1], [], []>} : vector<8x4xbf16>, vector<4x8xbf16>, vector<8x8xf32> -> vector<8x8xf32>
    %90 = arith.addf %85, %89 : vector<8x8xf32>
    %91 = vector.broadcast %2 : vector<8x1xf32> to vector<8x8xf32>
    %92 = arith.addf %90, %91 : vector<8x8xf32>
    %cst_40 = arith.constant 0.000000e+00 : f32
    %93 = vector.broadcast %cst_40 : f32 to vector<8x8xf32>
    %94 = arith.maximumf %92, %93 : vector<8x8xf32>
    %95 = arith.truncf %94 : vector<8x8xf32> to vector<8x8xbf16>
    %c0_41 = arith.constant 0 : index
    %c0_42 = arith.constant 0 : index
    %c2_43 = arith.constant 2 : index
    %c0_44 = arith.constant 0 : index
    %96 = vector.load %arg6[%c0_41, %c0_42, %c2_43, %c0_44] : memref<1x8x8x8xbf16, #tpu.memory_space<vmem>>, vector<1x8x1x8xbf16>
    %97 = vector.shape_cast %96 : vector<1x8x1x8xbf16> to vector<8x8xbf16>
    %98 = vector.shape_cast %95 : vector<8x8xbf16> to vector<1x8x1x8xbf16>
    tpu.vector_store %arg6[%c0_41, %c0_42, %c2_43, %c0_44], %98 {strides = array<i32>} : memref<1x8x8x8xbf16, #tpu.memory_space<vmem>>, vector<1x8x1x8xbf16>,
    %c0_45 = arith.constant 0 : index
    %c0_46 = arith.constant 0 : index
    %c3 = arith.constant 3 : index
    %c0_47 = arith.constant 0 : index
    %99 = vector.load %arg2[%c0_45, %c0_46, %c3, %c0_47] : memref<1x4x8x32xf32, #tpu.memory_space<vmem>>, vector<1x4x1x32xf32>
    %100 = vector.shape_cast %99 : vector<1x4x1x32xf32> to vector<4x32xf32>
    %101 = arith.truncf %100 : vector<4x32xf32> to vector<4x32xbf16>
    %cst_48 = arith.constant dense<0.000000e+00> : vector<4x32xf32>
    %102 = tpu.matmul %101, %0, %cst_48 {dimension_numbers = #tpu.dot_dimension_numbers<[1], [0], [0], [1], [0, 0, 1, 1], [], []>} : vector<4x32xbf16>, vector<32x32xbf16>, vector<4x32xf32> -> vector<4x32xf32>
    %103 = arith.truncf %102 : vector<4x32xf32> to vector<4x32xbf16>
    %104 = vector.extract_strided_slice %1 {offsets = [0, 0, 0], sizes = [1, 8, 4], strides = [1, 1, 1]} : vector<4x8x4xbf16> to vector<1x8x4xbf16>
    %105 = vector.shape_cast %104 : vector<1x8x4xbf16> to vector<8x4xbf16>
    %106 = vector.extract_strided_slice %103 {offsets = [0, 0], sizes = [4, 8], strides = [1, 1]} : vector<4x32xbf16> to vector<4x8xbf16>
    %cst_49 = arith.constant dense<0.000000e+00> : vector<8x8xf32>
    %107 = tpu.matmul %105, %106, %cst_49 {dimension_numbers = #tpu.dot_dimension_numbers<[1], [0], [0], [1], [0, 0, 1, 1], [], []>} : vector<8x4xbf16>, vector<4x8xbf16>, vector<8x8xf32> -> vector<8x8xf32>
    %108 = vector.extract_strided_slice %1 {offsets = [1, 0, 0], sizes = [1, 8, 4], strides = [1, 1, 1]} : vector<4x8x4xbf16> to vector<1x8x4xbf16>
    %109 = vector.shape_cast %108 : vector<1x8x4xbf16> to vector<8x4xbf16>
    %110 = vector.extract_strided_slice %103 {offsets = [0, 8], sizes = [4, 8], strides = [1, 1]} : vector<4x32xbf16> to vector<4x8xbf16>
    %cst_50 = arith.constant dense<0.000000e+00> : vector<8x8xf32>
    %111 = tpu.matmul %109, %110, %cst_50 {dimension_numbers = #tpu.dot_dimension_numbers<[1], [0], [0], [1], [0, 0, 1, 1], [], []>} : vector<8x4xbf16>, vector<4x8xbf16>, vector<8x8xf32> -> vector<8x8xf32>
    %112 = arith.addf %107, %111 : vector<8x8xf32>
    %113 = vector.extract_strided_slice %1 {offsets = [2, 0, 0], sizes = [1, 8, 4], strides = [1, 1, 1]} : vector<4x8x4xbf16> to vector<1x8x4xbf16>
    %114 = vector.shape_cast %113 : vector<1x8x4xbf16> to vector<8x4xbf16>
    %115 = vector.extract_strided_slice %103 {offsets = [0, 16], sizes = [4, 8], strides = [1, 1]} : vector<4x32xbf16> to vector<4x8xbf16>
    %cst_51 = arith.constant dense<0.000000e+00> : vector<8x8xf32>
    %116 = tpu.matmul %114, %115, %cst_51 {dimension_numbers = #tpu.dot_dimension_numbers<[1], [0], [0], [1], [0, 0, 1, 1], [], []>} : vector<8x4xbf16>, vector<4x8xbf16>, vector<8x8xf32> -> vector<8x8xf32>
    %117 = arith.addf %112, %116 : vector<8x8xf32>
    %118 = vector.extract_strided_slice %1 {offsets = [3, 0, 0], sizes = [1, 8, 4], strides = [1, 1, 1]} : vector<4x8x4xbf16> to vector<1x8x4xbf16>
    %119 = vector.shape_cast %118 : vector<1x8x4xbf16> to vector<8x4xbf16>
    %120 = vector.extract_strided_slice %103 {offsets = [0, 24], sizes = [4, 8], strides = [1, 1]} : vector<4x32xbf16> to vector<4x8xbf16>
    %cst_52 = arith.constant dense<0.000000e+00> : vector<8x8xf32>
    %121 = tpu.matmul %119, %120, %cst_52 {dimension_numbers = #tpu.dot_dimension_numbers<[1], [0], [0], [1], [0, 0, 1, 1], [], []>} : vector<8x4xbf16>, vector<4x8xbf16>, vector<8x8xf32> -> vector<8x8xf32>
    %122 = arith.addf %117, %121 : vector<8x8xf32>
    %123 = vector.broadcast %2 : vector<8x1xf32> to vector<8x8xf32>
    %124 = arith.addf %122, %123 : vector<8x8xf32>
    %cst_53 = arith.constant 0.000000e+00 : f32
    %125 = vector.broadcast %cst_53 : f32 to vector<8x8xf32>
    %126 = arith.maximumf %124, %125 : vector<8x8xf32>
    %127 = arith.truncf %126 : vector<8x8xf32> to vector<8x8xbf16>
    %c0_54 = arith.constant 0 : index
    %c0_55 = arith.constant 0 : index
    %c3_56 = arith.constant 3 : index
    %c0_57 = arith.constant 0 : index
    %128 = vector.load %arg6[%c0_54, %c0_55, %c3_56, %c0_57] : memref<1x8x8x8xbf16, #tpu.memory_space<vmem>>, vector<1x8x1x8xbf16>
    %129 = vector.shape_cast %128 : vector<1x8x1x8xbf16> to vector<8x8xbf16>
    %130 = vector.shape_cast %127 : vector<8x8xbf16> to vector<1x8x1x8xbf16>
    tpu.vector_store %arg6[%c0_54, %c0_55, %c3_56, %c0_57], %130 {strides = array<i32>} : memref<1x8x8x8xbf16, #tpu.memory_space<vmem>>, vector<1x8x1x8xbf16>,
    %c0_58 = arith.constant 0 : index
    %c0_59 = arith.constant 0 : index
    %c4 = arith.constant 4 : index
    %c0_60 = arith.constant 0 : index
    %131 = vector.load %arg2[%c0_58, %c0_59, %c4, %c0_60] : memref<1x4x8x32xf32, #tpu.memory_space<vmem>>, vector<1x4x1x32xf32>
    %132 = vector.shape_cast %131 : vector<1x4x1x32xf32> to vector<4x32xf32>
    %133 = arith.truncf %132 : vector<4x32xf32> to vector<4x32xbf16>
    %cst_61 = arith.constant dense<0.000000e+00> : vector<4x32xf32>
    %134 = tpu.matmul %133, %0, %cst_61 {dimension_numbers = #tpu.dot_dimension_numbers<[1], [0], [0], [1], [0, 0, 1, 1], [], []>} : vector<4x32xbf16>, vector<32x32xbf16>, vector<4x32xf32> -> vector<4x32xf32>
    %135 = arith.truncf %134 : vector<4x32xf32> to vector<4x32xbf16>
    %136 = vector.extract_strided_slice %1 {offsets = [0, 0, 0], sizes = [1, 8, 4], strides = [1, 1, 1]} : vector<4x8x4xbf16> to vector<1x8x4xbf16>
    %137 = vector.shape_cast %136 : vector<1x8x4xbf16> to vector<8x4xbf16>
    %138 = vector.extract_strided_slice %135 {offsets = [0, 0], sizes = [4, 8], strides = [1, 1]} : vector<4x32xbf16> to vector<4x8xbf16>
    %cst_62 = arith.constant dense<0.000000e+00> : vector<8x8xf32>
    %139 = tpu.matmul %137, %138, %cst_62 {dimension_numbers = #tpu.dot_dimension_numbers<[1], [0], [0], [1], [0, 0, 1, 1], [], []>} : vector<8x4xbf16>, vector<4x8xbf16>, vector<8x8xf32> -> vector<8x8xf32>
    %140 = vector.extract_strided_slice %1 {offsets = [1, 0, 0], sizes = [1, 8, 4], strides = [1, 1, 1]} : vector<4x8x4xbf16> to vector<1x8x4xbf16>
    %141 = vector.shape_cast %140 : vector<1x8x4xbf16> to vector<8x4xbf16>
    %142 = vector.extract_strided_slice %135 {offsets = [0, 8], sizes = [4, 8], strides = [1, 1]} : vector<4x32xbf16> to vector<4x8xbf16>
    %cst_63 = arith.constant dense<0.000000e+00> : vector<8x8xf32>
    %143 = tpu.matmul %141, %142, %cst_63 {dimension_numbers = #tpu.dot_dimension_numbers<[1], [0], [0], [1], [0, 0, 1, 1], [], []>} : vector<8x4xbf16>, vector<4x8xbf16>, vector<8x8xf32> -> vector<8x8xf32>
    %144 = arith.addf %139, %143 : vector<8x8xf32>
    %145 = vector.extract_strided_slice %1 {offsets = [2, 0, 0], sizes = [1, 8, 4], strides = [1, 1, 1]} : vector<4x8x4xbf16> to vector<1x8x4xbf16>
    %146 = vector.shape_cast %145 : vector<1x8x4xbf16> to vector<8x4xbf16>
    %147 = vector.extract_strided_slice %135 {offsets = [0, 16], sizes = [4, 8], strides = [1, 1]} : vector<4x32xbf16> to vector<4x8xbf16>
    %cst_64 = arith.constant dense<0.000000e+00> : vector<8x8xf32>
    %148 = tpu.matmul %146, %147, %cst_64 {dimension_numbers = #tpu.dot_dimension_numbers<[1], [0], [0], [1], [0, 0, 1, 1], [], []>} : vector<8x4xbf16>, vector<4x8xbf16>, vector<8x8xf32> -> vector<8x8xf32>
    %149 = arith.addf %144, %148 : vector<8x8xf32>
    %150 = vector.extract_strided_slice %1 {offsets = [3, 0, 0], sizes = [1, 8, 4], strides = [1, 1, 1]} : vector<4x8x4xbf16> to vector<1x8x4xbf16>
    %151 = vector.shape_cast %150 : vector<1x8x4xbf16> to vector<8x4xbf16>
    %152 = vector.extract_strided_slice %135 {offsets = [0, 24], sizes = [4, 8], strides = [1, 1]} : vector<4x32xbf16> to vector<4x8xbf16>
    %cst_65 = arith.constant dense<0.000000e+00> : vector<8x8xf32>
    %153 = tpu.matmul %151, %152, %cst_65 {dimension_numbers = #tpu.dot_dimension_numbers<[1], [0], [0], [1], [0, 0, 1, 1], [], []>} : vector<8x4xbf16>, vector<4x8xbf16>, vector<8x8xf32> -> vector<8x8xf32>
    %154 = arith.addf %149, %153 : vector<8x8xf32>
    %155 = vector.broadcast %2 : vector<8x1xf32> to vector<8x8xf32>
    %156 = arith.addf %154, %155 : vector<8x8xf32>
    %cst_66 = arith.constant 0.000000e+00 : f32
    %157 = vector.broadcast %cst_66 : f32 to vector<8x8xf32>
    %158 = arith.maximumf %156, %157 : vector<8x8xf32>
    %159 = arith.truncf %158 : vector<8x8xf32> to vector<8x8xbf16>
    %c0_67 = arith.constant 0 : index
    %c0_68 = arith.constant 0 : index
    %c4_69 = arith.constant 4 : index
    %c0_70 = arith.constant 0 : index
    %160 = vector.load %arg6[%c0_67, %c0_68, %c4_69, %c0_70] : memref<1x8x8x8xbf16, #tpu.memory_space<vmem>>, vector<1x8x1x8xbf16>
    %161 = vector.shape_cast %160 : vector<1x8x1x8xbf16> to vector<8x8xbf16>
    %162 = vector.shape_cast %159 : vector<8x8xbf16> to vector<1x8x1x8xbf16>
    tpu.vector_store %arg6[%c0_67, %c0_68, %c4_69, %c0_70], %162 {strides = array<i32>} : memref<1x8x8x8xbf16, #tpu.memory_space<vmem>>, vector<1x8x1x8xbf16>,
    %c0_71 = arith.constant 0 : index
    %c0_72 = arith.constant 0 : index
    %c5 = arith.constant 5 : index
    %c0_73 = arith.constant 0 : index
    %163 = vector.load %arg2[%c0_71, %c0_72, %c5, %c0_73] : memref<1x4x8x32xf32, #tpu.memory_space<vmem>>, vector<1x4x1x32xf32>
    %164 = vector.shape_cast %163 : vector<1x4x1x32xf32> to vector<4x32xf32>
    %165 = arith.truncf %164 : vector<4x32xf32> to vector<4x32xbf16>
    %cst_74 = arith.constant dense<0.000000e+00> : vector<4x32xf32>
    %166 = tpu.matmul %165, %0, %cst_74 {dimension_numbers = #tpu.dot_dimension_numbers<[1], [0], [0], [1], [0, 0, 1, 1], [], []>} : vector<4x32xbf16>, vector<32x32xbf16>, vector<4x32xf32> -> vector<4x32xf32>
    %167 = arith.truncf %166 : vector<4x32xf32> to vector<4x32xbf16>
    %168 = vector.extract_strided_slice %1 {offsets = [0, 0, 0], sizes = [1, 8, 4], strides = [1, 1, 1]} : vector<4x8x4xbf16> to vector<1x8x4xbf16>
    %169 = vector.shape_cast %168 : vector<1x8x4xbf16> to vector<8x4xbf16>
    %170 = vector.extract_strided_slice %167 {offsets = [0, 0], sizes = [4, 8], strides = [1, 1]} : vector<4x32xbf16> to vector<4x8xbf16>
    %cst_75 = arith.constant dense<0.000000e+00> : vector<8x8xf32>
    %171 = tpu.matmul %169, %170, %cst_75 {dimension_numbers = #tpu.dot_dimension_numbers<[1], [0], [0], [1], [0, 0, 1, 1], [], []>} : vector<8x4xbf16>, vector<4x8xbf16>, vector<8x8xf32> -> vector<8x8xf32>
    %172 = vector.extract_strided_slice %1 {offsets = [1, 0, 0], sizes = [1, 8, 4], strides = [1, 1, 1]} : vector<4x8x4xbf16> to vector<1x8x4xbf16>
    %173 = vector.shape_cast %172 : vector<1x8x4xbf16> to vector<8x4xbf16>
    %174 = vector.extract_strided_slice %167 {offsets = [0, 8], sizes = [4, 8], strides = [1, 1]} : vector<4x32xbf16> to vector<4x8xbf16>
    %cst_76 = arith.constant dense<0.000000e+00> : vector<8x8xf32>
    %175 = tpu.matmul %173, %174, %cst_76 {dimension_numbers = #tpu.dot_dimension_numbers<[1], [0], [0], [1], [0, 0, 1, 1], [], []>} : vector<8x4xbf16>, vector<4x8xbf16>, vector<8x8xf32> -> vector<8x8xf32>
    %176 = arith.addf %171, %175 : vector<8x8xf32>
    %177 = vector.extract_strided_slice %1 {offsets = [2, 0, 0], sizes = [1, 8, 4], strides = [1, 1, 1]} : vector<4x8x4xbf16> to vector<1x8x4xbf16>
    %178 = vector.shape_cast %177 : vector<1x8x4xbf16> to vector<8x4xbf16>
    %179 = vector.extract_strided_slice %167 {offsets = [0, 16], sizes = [4, 8], strides = [1, 1]} : vector<4x32xbf16> to vector<4x8xbf16>
    %cst_77 = arith.constant dense<0.000000e+00> : vector<8x8xf32>
    %180 = tpu.matmul %178, %179, %cst_77 {dimension_numbers = #tpu.dot_dimension_numbers<[1], [0], [0], [1], [0, 0, 1, 1], [], []>} : vector<8x4xbf16>, vector<4x8xbf16>, vector<8x8xf32> -> vector<8x8xf32>
    %181 = arith.addf %176, %180 : vector<8x8xf32>
    %182 = vector.extract_strided_slice %1 {offsets = [3, 0, 0], sizes = [1, 8, 4], strides = [1, 1, 1]} : vector<4x8x4xbf16> to vector<1x8x4xbf16>
    %183 = vector.shape_cast %182 : vector<1x8x4xbf16> to vector<8x4xbf16>
    %184 = vector.extract_strided_slice %167 {offsets = [0, 24], sizes = [4, 8], strides = [1, 1]} : vector<4x32xbf16> to vector<4x8xbf16>
    %cst_78 = arith.constant dense<0.000000e+00> : vector<8x8xf32>
    %185 = tpu.matmul %183, %184, %cst_78 {dimension_numbers = #tpu.dot_dimension_numbers<[1], [0], [0], [1], [0, 0, 1, 1], [], []>} : vector<8x4xbf16>, vector<4x8xbf16>, vector<8x8xf32> -> vector<8x8xf32>
    %186 = arith.addf %181, %185 : vector<8x8xf32>
    %187 = vector.broadcast %2 : vector<8x1xf32> to vector<8x8xf32>
    %188 = arith.addf %186, %187 : vector<8x8xf32>
    %cst_79 = arith.constant 0.000000e+00 : f32
    %189 = vector.broadcast %cst_79 : f32 to vector<8x8xf32>
    %190 = arith.maximumf %188, %189 : vector<8x8xf32>
    %191 = arith.truncf %190 : vector<8x8xf32> to vector<8x8xbf16>
    %c0_80 = arith.constant 0 : index
    %c0_81 = arith.constant 0 : index
    %c5_82 = arith.constant 5 : index
    %c0_83 = arith.constant 0 : index
    %192 = vector.load %arg6[%c0_80, %c0_81, %c5_82, %c0_83] : memref<1x8x8x8xbf16, #tpu.memory_space<vmem>>, vector<1x8x1x8xbf16>
    %193 = vector.shape_cast %192 : vector<1x8x1x8xbf16> to vector<8x8xbf16>
    %194 = vector.shape_cast %191 : vector<8x8xbf16> to vector<1x8x1x8xbf16>
    tpu.vector_store %arg6[%c0_80, %c0_81, %c5_82, %c0_83], %194 {strides = array<i32>} : memref<1x8x8x8xbf16, #tpu.memory_space<vmem>>, vector<1x8x1x8xbf16>,
    %c0_84 = arith.constant 0 : index
    %c0_85 = arith.constant 0 : index
    %c6 = arith.constant 6 : index
    %c0_86 = arith.constant 0 : index
    %195 = vector.load %arg2[%c0_84, %c0_85, %c6, %c0_86] : memref<1x4x8x32xf32, #tpu.memory_space<vmem>>, vector<1x4x1x32xf32>
    %196 = vector.shape_cast %195 : vector<1x4x1x32xf32> to vector<4x32xf32>
    %197 = arith.truncf %196 : vector<4x32xf32> to vector<4x32xbf16>
    %cst_87 = arith.constant dense<0.000000e+00> : vector<4x32xf32>
    %198 = tpu.matmul %197, %0, %cst_87 {dimension_numbers = #tpu.dot_dimension_numbers<[1], [0], [0], [1], [0, 0, 1, 1], [], []>} : vector<4x32xbf16>, vector<32x32xbf16>, vector<4x32xf32> -> vector<4x32xf32>
    %199 = arith.truncf %198 : vector<4x32xf32> to vector<4x32xbf16>
    %200 = vector.extract_strided_slice %1 {offsets = [0, 0, 0], sizes = [1, 8, 4], strides = [1, 1, 1]} : vector<4x8x4xbf16> to vector<1x8x4xbf16>
    %201 = vector.shape_cast %200 : vector<1x8x4xbf16> to vector<8x4xbf16>
    %202 = vector.extract_strided_slice %199 {offsets = [0, 0], sizes = [4, 8], strides = [1, 1]} : vector<4x32xbf16> to vector<4x8xbf16>
    %cst_88 = arith.constant dense<0.000000e+00> : vector<8x8xf32>
    %203 = tpu.matmul %201, %202, %cst_88 {dimension_numbers = #tpu.dot_dimension_numbers<[1], [0], [0], [1], [0, 0, 1, 1], [], []>} : vector<8x4xbf16>, vector<4x8xbf16>, vector<8x8xf32> -> vector<8x8xf32>
    %204 = vector.extract_strided_slice %1 {offsets = [1, 0, 0], sizes = [1, 8, 4], strides = [1, 1, 1]} : vector<4x8x4xbf16> to vector<1x8x4xbf16>
    %205 = vector.shape_cast %204 : vector<1x8x4xbf16> to vector<8x4xbf16>
    %206 = vector.extract_strided_slice %199 {offsets = [0, 8], sizes = [4, 8], strides = [1, 1]} : vector<4x32xbf16> to vector<4x8xbf16>
    %cst_89 = arith.constant dense<0.000000e+00> : vector<8x8xf32>
    %207 = tpu.matmul %205, %206, %cst_89 {dimension_numbers = #tpu.dot_dimension_numbers<[1], [0], [0], [1], [0, 0, 1, 1], [], []>} : vector<8x4xbf16>, vector<4x8xbf16>, vector<8x8xf32> -> vector<8x8xf32>
    %208 = arith.addf %203, %207 : vector<8x8xf32>
    %209 = vector.extract_strided_slice %1 {offsets = [2, 0, 0], sizes = [1, 8, 4], strides = [1, 1, 1]} : vector<4x8x4xbf16> to vector<1x8x4xbf16>
    %210 = vector.shape_cast %209 : vector<1x8x4xbf16> to vector<8x4xbf16>
    %211 = vector.extract_strided_slice %199 {offsets = [0, 16], sizes = [4, 8], strides = [1, 1]} : vector<4x32xbf16> to vector<4x8xbf16>
    %cst_90 = arith.constant dense<0.000000e+00> : vector<8x8xf32>
    %212 = tpu.matmul %210, %211, %cst_90 {dimension_numbers = #tpu.dot_dimension_numbers<[1], [0], [0], [1], [0, 0, 1, 1], [], []>} : vector<8x4xbf16>, vector<4x8xbf16>, vector<8x8xf32> -> vector<8x8xf32>
    %213 = arith.addf %208, %212 : vector<8x8xf32>
    %214 = vector.extract_strided_slice %1 {offsets = [3, 0, 0], sizes = [1, 8, 4], strides = [1, 1, 1]} : vector<4x8x4xbf16> to vector<1x8x4xbf16>
    %215 = vector.shape_cast %214 : vector<1x8x4xbf16> to vector<8x4xbf16>
    %216 = vector.extract_strided_slice %199 {offsets = [0, 24], sizes = [4, 8], strides = [1, 1]} : vector<4x32xbf16> to vector<4x8xbf16>
    %cst_91 = arith.constant dense<0.000000e+00> : vector<8x8xf32>
    %217 = tpu.matmul %215, %216, %cst_91 {dimension_numbers = #tpu.dot_dimension_numbers<[1], [0], [0], [1], [0, 0, 1, 1], [], []>} : vector<8x4xbf16>, vector<4x8xbf16>, vector<8x8xf32> -> vector<8x8xf32>
    %218 = arith.addf %213, %217 : vector<8x8xf32>
    %219 = vector.broadcast %2 : vector<8x1xf32> to vector<8x8xf32>
    %220 = arith.addf %218, %219 : vector<8x8xf32>
    %cst_92 = arith.constant 0.000000e+00 : f32
    %221 = vector.broadcast %cst_92 : f32 to vector<8x8xf32>
    %222 = arith.maximumf %220, %221 : vector<8x8xf32>
    %223 = arith.truncf %222 : vector<8x8xf32> to vector<8x8xbf16>
    %c0_93 = arith.constant 0 : index
    %c0_94 = arith.constant 0 : index
    %c6_95 = arith.constant 6 : index
    %c0_96 = arith.constant 0 : index
    %224 = vector.load %arg6[%c0_93, %c0_94, %c6_95, %c0_96] : memref<1x8x8x8xbf16, #tpu.memory_space<vmem>>, vector<1x8x1x8xbf16>
    %225 = vector.shape_cast %224 : vector<1x8x1x8xbf16> to vector<8x8xbf16>
    %226 = vector.shape_cast %223 : vector<8x8xbf16> to vector<1x8x1x8xbf16>
    tpu.vector_store %arg6[%c0_93, %c0_94, %c6_95, %c0_96], %226 {strides = array<i32>} : memref<1x8x8x8xbf16, #tpu.memory_space<vmem>>, vector<1x8x1x8xbf16>,
    %c0_97 = arith.constant 0 : index
    %c0_98 = arith.constant 0 : index
    %c7 = arith.constant 7 : index
    %c0_99 = arith.constant 0 : index
    %227 = vector.load %arg2[%c0_97, %c0_98, %c7, %c0_99] : memref<1x4x8x32xf32, #tpu.memory_space<vmem>>, vector<1x4x1x32xf32>
    %228 = vector.shape_cast %227 : vector<1x4x1x32xf32> to vector<4x32xf32>
    %229 = arith.truncf %228 : vector<4x32xf32> to vector<4x32xbf16>
    %cst_100 = arith.constant dense<0.000000e+00> : vector<4x32xf32>
    %230 = tpu.matmul %229, %0, %cst_100 {dimension_numbers = #tpu.dot_dimension_numbers<[1], [0], [0], [1], [0, 0, 1, 1], [], []>} : vector<4x32xbf16>, vector<32x32xbf16>, vector<4x32xf32> -> vector<4x32xf32>
    %231 = arith.truncf %230 : vector<4x32xf32> to vector<4x32xbf16>
    %232 = vector.extract_strided_slice %1 {offsets = [0, 0, 0], sizes = [1, 8, 4], strides = [1, 1, 1]} : vector<4x8x4xbf16> to vector<1x8x4xbf16>
    %233 = vector.shape_cast %232 : vector<1x8x4xbf16> to vector<8x4xbf16>
    %234 = vector.extract_strided_slice %231 {offsets = [0, 0], sizes = [4, 8], strides = [1, 1]} : vector<4x32xbf16> to vector<4x8xbf16>
    %cst_101 = arith.constant dense<0.000000e+00> : vector<8x8xf32>
    %235 = tpu.matmul %233, %234, %cst_101 {dimension_numbers = #tpu.dot_dimension_numbers<[1], [0], [0], [1], [0, 0, 1, 1], [], []>} : vector<8x4xbf16>, vector<4x8xbf16>, vector<8x8xf32> -> vector<8x8xf32>
    %236 = vector.extract_strided_slice %1 {offsets = [1, 0, 0], sizes = [1, 8, 4], strides = [1, 1, 1]} : vector<4x8x4xbf16> to vector<1x8x4xbf16>
    %237 = vector.shape_cast %236 : vector<1x8x4xbf16> to vector<8x4xbf16>
    %238 = vector.extract_strided_slice %231 {offsets = [0, 8], sizes = [4, 8], strides = [1, 1]} : vector<4x32xbf16> to vector<4x8xbf16>
    %cst_102 = arith.constant dense<0.000000e+00> : vector<8x8xf32>
    %239 = tpu.matmul %237, %238, %cst_102 {dimension_numbers = #tpu.dot_dimension_numbers<[1], [0], [0], [1], [0, 0, 1, 1], [], []>} : vector<8x4xbf16>, vector<4x8xbf16>, vector<8x8xf32> -> vector<8x8xf32>
    %240 = arith.addf %235, %239 : vector<8x8xf32>
    %241 = vector.extract_strided_slice %1 {offsets = [2, 0, 0], sizes = [1, 8, 4], strides = [1, 1, 1]} : vector<4x8x4xbf16> to vector<1x8x4xbf16>
    %242 = vector.shape_cast %241 : vector<1x8x4xbf16> to vector<8x4xbf16>
    %243 = vector.extract_strided_slice %231 {offsets = [0, 16], sizes = [4, 8], strides = [1, 1]} : vector<4x32xbf16> to vector<4x8xbf16>
    %cst_103 = arith.constant dense<0.000000e+00> : vector<8x8xf32>
    %244 = tpu.matmul %242, %243, %cst_103 {dimension_numbers = #tpu.dot_dimension_numbers<[1], [0], [0], [1], [0, 0, 1, 1], [], []>} : vector<8x4xbf16>, vector<4x8xbf16>, vector<8x8xf32> -> vector<8x8xf32>
    %245 = arith.addf %240, %244 : vector<8x8xf32>
    %246 = vector.extract_strided_slice %1 {offsets = [3, 0, 0], sizes = [1, 8, 4], strides = [1, 1, 1]} : vector<4x8x4xbf16> to vector<1x8x4xbf16>
    %247 = vector.shape_cast %246 : vector<1x8x4xbf16> to vector<8x4xbf16>
    %248 = vector.extract_strided_slice %231 {offsets = [0, 24], sizes = [4, 8], strides = [1, 1]} : vector<4x32xbf16> to vector<4x8xbf16>
    %cst_104 = arith.constant dense<0.000000e+00> : vector<8x8xf32>
    %249 = tpu.matmul %247, %248, %cst_104 {dimension_numbers = #tpu.dot_dimension_numbers<[1], [0], [0], [1], [0, 0, 1, 1], [], []>} : vector<8x4xbf16>, vector<4x8xbf16>, vector<8x8xf32> -> vector<8x8xf32>
    %250 = arith.addf %245, %249 : vector<8x8xf32>
    %251 = vector.broadcast %2 : vector<8x1xf32> to vector<8x8xf32>
    %252 = arith.addf %250, %251 : vector<8x8xf32>
    %cst_105 = arith.constant 0.000000e+00 : f32
    %253 = vector.broadcast %cst_105 : f32 to vector<8x8xf32>
    %254 = arith.maximumf %252, %253 : vector<8x8xf32>
    %255 = arith.truncf %254 : vector<8x8xf32> to vector<8x8xbf16>
    %c0_106 = arith.constant 0 : index
    %c0_107 = arith.constant 0 : index
    %c7_108 = arith.constant 7 : index
    %c0_109 = arith.constant 0 : index
    %256 = vector.load %arg6[%c0_106, %c0_107, %c7_108, %c0_109] : memref<1x8x8x8xbf16, #tpu.memory_space<vmem>>, vector<1x8x1x8xbf16>
    %257 = vector.shape_cast %256 : vector<1x8x1x8xbf16> to vector<8x8xbf16>
    %258 = vector.shape_cast %255 : vector<8x8xbf16> to vector<1x8x1x8xbf16>
    tpu.vector_store %arg6[%c0_106, %c0_107, %c7_108, %c0_109], %258 {strides = array<i32>} : memref<1x8x8x8xbf16, #tpu.memory_space<vmem>>, vector<1x8x1x8xbf16>,
    return
  }
  func.func @transform_0(%arg0: i32, %arg1: i32) -> (i32, i32, i32, i32) {
    %c0_i32 = arith.constant 0 : i32
    %c0_i32_0 = arith.constant 0 : i32
    %c0_i32_1 = arith.constant 0 : i32
    return %arg0, %c0_i32, %arg1, %c0_i32_0 : i32, i32, i32, i32
  }
  func.func @transform_1(%arg0: i32, %arg1: i32) -> (i32, i32) {
    %c0_i32 = arith.constant 0 : i32
    %c0_i32_0 = arith.constant 0 : i32
    %c0_i32_1 = arith.constant 0 : i32
    return %c0_i32, %c0_i32_0 : i32, i32
  }
  func.func @transform_2(%arg0: i32, %arg1: i32) -> (i32, i32, i32) {
    %c0_i32 = arith.constant 0 : i32
    %c0_i32_0 = arith.constant 0 : i32
    %c0_i32_1 = arith.constant 0 : i32
    %c0_i32_2 = arith.constant 0 : i32
    return %c0_i32, %c0_i32_0, %c0_i32_1 : i32, i32, i32
  }
  func.func @transform_3(%arg0: i32, %arg1: i32) -> (i32, i32) {
    %c0_i32 = arith.constant 0 : i32
    %c0_i32_0 = arith.constant 0 : i32
    %c0_i32_1 = arith.constant 0 : i32
    return %c0_i32, %c0_i32_0 : i32, i32
  }
  func.func @transform_4(%arg0: i32, %arg1: i32) -> (i32, i32, i32, i32) {
    %c0_i32 = arith.constant 0 : i32
    %c0_i32_0 = arith.constant 0 : i32
    %c0_i32_1 = arith.constant 0 : i32
    return %arg0, %c0_i32, %arg1, %c0_i32_0 : i32, i32, i32, i32
  }
}

</mosaic_0001>

<llo_original>
// kernel: tpu_custom_call.1
$region0: #{tpu_custom_call.1}
  #allocation0 [shape = 'u32[]', space=smem, size = 0x4, offset = 0x4, fixed_abs, tag = 'smem constant byte address 0x4 - core index']
  #allocation1 [shape = 'u32[144,128]{1,0:T(1,128)}', space=vmem, size = 0x12000, scoped, tag = 'internal scratch']
  %s0 = inlined_call_operand.hbm [shape: f32[2,4,8,32], index: 0, kind: input, shape index: {}]
  %s1 = inlined_call_operand.vmem [shape: bf16[32,32], index: 1, kind: input, shape index: {}]
  %s2 = inlined_call_operand.vmem [shape: bf16[4,8,4], index: 2, kind: input, shape index: {}]
  %s3 = inlined_call_operand.vmem [shape: f32[8,1], index: 3, kind: input, shape index: {}]
  %s4 = inlined_call_operand.hbm [shape: bf16[2,8,8,8], index: 4, kind: output, shape index: {}]
  %s5 = sld [smem:[#allocation0]]
  $region53: #{tpu_custom_call.1} parent=0
    _
  %s7 = ssub.s32 1, %s5
  %s8 = scalar_select 0, %s7, %s5
  $region1: #{tpu_custom_call.1} parent=0
    #allocation2 [shape = 'u8[32768]{0}', space=vmem, size = 0x8000, scoped, tag = 'input window, operand 0']
    #allocation3 [shape = 's32[2]{0}', space=sflag, size = 0x8, scoped, tag = 'scoped memory for tpu_custom_call.1']
    #allocation4 [shape = 's32[2]{0}', space=sflag, size = 0x8, scoped, tag = 'scoped memory for tpu_custom_call.1']
    #allocation5 [shape = 'u8[32768]{0}', space=vmem, size = 0x8000, scoped, tag = 'output window, operand 0']
    %9 = vsyncpa [#allocation3], 0
    %s10 = scalar_lea.sflag [#allocation3], 1
    %11 = vsyncpa %s10, 0
    %12 = vsyncpa [#allocation4], 0
    %s13 = scalar_lea.sflag [#allocation4], 1
    %14 = vsyncpa %s13, 0
    loop: start=0, step=1, limit=4
    $region2: #{tpu_custom_call.1} parent=1 // loop_pre_header
      _
    $region3: #{tpu_custom_call.1} parent=1 // loop_header
      %s16 = sphi 0, %s20
      %p17 = scmp.ge.s32.totalorder %s16, 4
      %s23 = sphi 0, %s35
      %s24 = sphi 0, %s31
      %s25 = sphi 0, %s23
      %s26 = sphi 0, %s24
      %s27 = sphi 0, %s25
      %s28 = sphi 0, %s26
      %s40 = sphi 0, %s42
      %s43 = sphi 0, %s40
      %s44 = sphi 0, %s43
      %s60 = sphi 0, %s44
      %s64 = sphi 0, %s64
      %s66 = sphi 0, %s64
      %s67 = sphi 0, %s66
      %s81 = sphi 0, %s67
      %s85 = sphi 0, %s85
      %s87 = sphi 0, %s85
      %s88 = sphi 0, %s87
      %s102 = sphi 0, %s88
      %s106 = sphi 0, %s106
      %s108 = sphi 0, %s106
      %s109 = sphi 0, %s108
      %s123 = sphi 0, %s109
      %s131 = sphi 0, %s133
      %s134 = sphi 0, %s131
      %s135 = sphi 0, %s134
      %s151 = sphi 0, %s135
    $region4: #{tpu_custom_call.1} parent=1 // loop_header_branch
      %19 = sbr.rel (%p17) target = $region8
    $region5: #{tpu_custom_call.1} parent=1 // loop_body
      %s21 = ssub.s32 %s16, 1
      %s22 = ssub.s32 %s16, 2
      %s29 = sadd.s32 1, %s24
      %p30 = scmp.ge.s32.totalorder %s29, 1
      %s31 = scalar_select %p30, 0, %s29
      %s32 = sadd.s32 1, %s23
      %s33 = scalar_select %p30, %s32, %s23
      %p34 = scmp.ge.s32.totalorder %s33, 2
      %s35 = scalar_select %p34, 0, %s33
      %s36 = ssub.s32 %s23, %s35
      %s37 = ssub.s32 %s24, %s31
      %s38 = sor.u32 %s36, %s37
      %p39 = scmp.eq.s32.totalorder %s38, 0
      %s41 = sadd.s32 %s40, 1
      %s42 = scalar_select %p39, %s40, %s41
      %p45 = pneg %p39
      %p46 = scmp.eq.s32.totalorder %s16, 1
      %p47 = por %p45, %p46
      %p48 = scmp.ne.s32.totalorder %s40, %s43
      %p49 = scmp.eq.s32.totalorder %s16, 0
      %p50 = por %p48, %p49
      %p51 = scmp.ne.s32.totalorder %s40, %s43
      %p52 = scmp.eq.s32.totalorder %s21, 1
      %p53 = por %p51, %p52
      %p54 = scmp.ne.s32.totalorder %s43, %s44
      %p55 = scmp.eq.s32.totalorder %s21, 0
      %p56 = por %p54, %p55
      %p57 = scmp.ne.s32.totalorder %s43, %s44
      %p58 = scmp.eq.s32.totalorder %s22, 1
      %p59 = por %p57, %p58
      %p61 = scmp.ne.s32.totalorder %s44, %s60
      %p62 = scmp.eq.s32.totalorder %s22, 0
      %p63 = por %p61, %p62
      %s65 = sadd.s32 %s64, 1
      %p68 = scmp.eq.s32.totalorder %s16, 1
      %p69 = scmp.ne.s32.totalorder %s64, %s66
      %p70 = scmp.eq.s32.totalorder %s16, 0
      %p71 = por %p69, %p70
      %p72 = scmp.ne.s32.totalorder %s64, %s66
      %p73 = scmp.eq.s32.totalorder %s21, 1
      %p74 = por %p72, %p73
      %p75 = scmp.ne.s32.totalorder %s66, %s67
      %p76 = scmp.eq.s32.totalorder %s21, 0
      %p77 = por %p75, %p76
      %p78 = scmp.ne.s32.totalorder %s66, %s67
      %p79 = scmp.eq.s32.totalorder %s22, 1
      %p80 = por %p78, %p79
      %p82 = scmp.ne.s32.totalorder %s67, %s81
      %p83 = scmp.eq.s32.totalorder %s22, 0
      %p84 = por %p82, %p83
      %s86 = sadd.s32 %s85, 1
      %p89 = scmp.eq.s32.totalorder %s16, 1
      %p90 = scmp.ne.s32.totalorder %s85, %s87
      %p91 = scmp.eq.s32.totalorder %s16, 0
      %p92 = por %p90, %p91
      %p93 = scmp.ne.s32.totalorder %s85, %s87
      %p94 = scmp.eq.s32.totalorder %s21, 1
      %p95 = por %p93, %p94
      %p96 = scmp.ne.s32.totalorder %s87, %s88
      %p97 = scmp.eq.s32.totalorder %s21, 0
      %p98 = por %p96, %p97
      %p99 = scmp.ne.s32.totalorder %s87, %s88
      %p100 = scmp.eq.s32.totalorder %s22, 1
      %p101 = por %p99, %p100
      %p103 = scmp.ne.s32.totalorder %s88, %s102
      %p104 = scmp.eq.s32.totalorder %s22, 0
      %p105 = por %p103, %p104
      %s107 = sadd.s32 %s106, 1
      %p110 = scmp.eq.s32.totalorder %s16, 1
      %p111 = scmp.ne.s32.totalorder %s106, %s108
      %p112 = scmp.eq.s32.totalorder %s16, 0
      %p113 = por %p111, %p112
      %p114 = scmp.ne.s32.totalorder %s106, %s108
      %p115 = scmp.eq.s32.totalorder %s21, 1
      %p116 = por %p114, %p115
      %p117 = scmp.ne.s32.totalorder %s108, %s109
      %p118 = scmp.eq.s32.totalorder %s21, 0
      %p119 = por %p117, %p118
      %p120 = scmp.ne.s32.totalorder %s108, %s109
      %p121 = scmp.eq.s32.totalorder %s22, 1
      %p122 = por %p120, %p121
      %p124 = scmp.ne.s32.totalorder %s109, %s123
      %p125 = scmp.eq.s32.totalorder %s22, 0
      %p126 = por %p124, %p125
      %s127 = ssub.s32 %s23, %s35
      %s128 = ssub.s32 %s24, %s31
      %s129 = sor.u32 %s127, %s128
      %p130 = scmp.eq.s32.totalorder %s129, 0
      %s132 = sadd.s32 %s131, 1
      %s133 = scalar_select %p130, %s131, %s132
      %p136 = pneg %p130
      %p137 = scmp.eq.s32.totalorder %s16, 1
      %p138 = por %p136, %p137
      %p139 = scmp.ne.s32.totalorder %s131, %s134
      %p140 = scmp.eq.s32.totalorder %s16, 0
      %p141 = por %p139, %p140
      %p142 = scmp.ne.s32.totalorder %s131, %s134
      %p143 = scmp.eq.s32.totalorder %s21, 1
      %p144 = por %p142, %p143
      %p145 = scmp.ne.s32.totalorder %s134, %s135
      %p146 = scmp.eq.s32.totalorder %s21, 0
      %p147 = por %p145, %p146
      %p148 = scmp.ne.s32.totalorder %s134, %s135
      %p149 = scmp.eq.s32.totalorder %s22, 1
      %p150 = por %p148, %p149
      %p152 = scmp.ne.s32.totalorder %s135, %s151
      %p153 = scmp.eq.s32.totalorder %s22, 0
      %p154 = por %p152, %p153
      %p155 = scmp.le.s32.totalorder 1, %s16
      %p156 = scmp.lt.s32.totalorder %s16, 3
      %p157 = pnand %p155, %p156
      %p158 = pneg %p157
      // Predicated region
      $region9: #{tpu_custom_call.1} parent=5 // pred_check
        _
      $region10: #{tpu_custom_call.1} parent=5 // pred_check_branch
        %160 = sbr.rel (%p157) target = $region12
      $region11: #{tpu_custom_call.1} parent=5 // pred_region
        %s161 = ssub.s32 %s16, 1
        // Predicated region
        $region13: #{tpu_custom_call.1} parent=11 // pred_check
          %p162 = pneg %p77
        $region14: #{tpu_custom_call.1} parent=11 // pred_check_branch
          %164 = sbr.rel (%p162) target = $region16
        $region15: #{tpu_custom_call.1} parent=11 // pred_region
          _
        $region16: #{tpu_custom_call.1} parent=11 // pred_fallthru
          _
        // Predicated region
        $region17: #{tpu_custom_call.1} parent=11 // pred_check
          %p165 = pneg %p98
        $region18: #{tpu_custom_call.1} parent=11 // pred_check_branch
          %167 = sbr.rel (%p165) target = $region20
        $region19: #{tpu_custom_call.1} parent=11 // pred_region
          _
        $region20: #{tpu_custom_call.1} parent=11 // pred_fallthru
          _
        // Predicated region
        $region21: #{tpu_custom_call.1} parent=11 // pred_check
          %p168 = pneg %p119
        $region22: #{tpu_custom_call.1} parent=11 // pred_check_branch
          %170 = sbr.rel (%p168) target = $region24
        $region23: #{tpu_custom_call.1} parent=11 // pred_region
          _
        $region24: #{tpu_custom_call.1} parent=11 // pred_fallthru
          _
      $region12: #{tpu_custom_call.1} parent=5 // pred_fallthru
        _
      %p171 = scmp.lt.s32.totalorder %s16, 2
      // Predicated region
      $region25: #{tpu_custom_call.1} parent=5 // pred_check
        %p172 = pneg %p171
      $region26: #{tpu_custom_call.1} parent=5 // pred_check_branch
        %174 = sbr.rel (%p172) target = $region28
      $region27: #{tpu_custom_call.1} parent=5 // pred_region
        // Predicated region
        $region29: #{tpu_custom_call.1} parent=27 // pred_check
          %p175 = pneg %p50
        $region30: #{tpu_custom_call.1} parent=27 // pred_check_branch
          %177 = sbr.rel (%p175) target = $region32
        $region31: #{tpu_custom_call.1} parent=27 // pred_region
          %s178 = sand.u32 %s40, 1
          %s179 = scalar_lea.sflag [#allocation3], %s178
          %s180 = sand.u32 %s40, 1
          %s181 = smul.addr %s180, 32
          %s182 = scalar_lea.vmem [#allocation2], %s181
          %s184 = ssub.s32 512, 512
          %185 = vsyncadd %s179, %s184
          %s186 = smul.addr %s23, 4
          %s187 = sadd.s32 %s24, %s186
          %s188 = smul.addr %s187, 128
          %s189 = scalar_lea.hbm %s0, %s188
          %s190 = sshll.u32 %s182, 4
          %s191 = int_to_ptr.vmem [resolvable:$true] %s190
          %196 = dma.hbm_to_vmem [thread:$0]  %s189, 512, %s191, %s179, 128, 128, 8
        $region32: #{tpu_custom_call.1} parent=27 // pred_fallthru
          _
      $region28: #{tpu_custom_call.1} parent=5 // pred_fallthru
        _
      %p197 = scmp.le.s32.totalorder 1, %s16
      %p198 = scmp.lt.s32.totalorder %s16, 3
      %p199 = pnand %p197, %p198
      %p200 = pneg %p199
      // Predicated region
      $region33: #{tpu_custom_call.1} parent=5 // pred_check
        _
      $region34: #{tpu_custom_call.1} parent=5 // pred_check_branch
        %202 = sbr.rel (%p199) target = $region36
      $region35: #{tpu_custom_call.1} parent=5 // pred_region
        %s203 = ssub.s32 %s16, 1
        %s204 = sand.u32 %s43, 1
        %s205 = scalar_lea.sflag [#allocation3], %s204
        %s206 = sand.u32 %s43, 1
        %s207 = smul.addr %s206, 32
        %s208 = scalar_lea.vmem [#allocation2], %s207
        // Predicated region
        $region37: #{tpu_custom_call.1} parent=35 // pred_check
          %p209 = pneg %p56
        $region38: #{tpu_custom_call.1} parent=35 // pred_check_branch
          %211 = sbr.rel (%p209) target = $region40
        $region39: #{tpu_custom_call.1} parent=35 // pred_region
          %212 = dma.done %s205, 512
        $region40: #{tpu_custom_call.1} parent=35 // pred_fallthru
          _
        %s213 = sand.u32 %s43, 1
        %s214 = scalar_lea.sflag [#allocation3], %s213
        %s215 = sand.u32 %s43, 1
        %s216 = smul.addr %s215, 32
        %s217 = scalar_lea.vmem [#allocation2], %s216
        %p218 = pneg %p56
        %p219 = pneg %p53
        %p220 = pneg %p77
        %p221 = pneg %p74
        %p222 = pneg %p98
        %p223 = pneg %p95
        %p224 = pneg %p119
        %p225 = pneg %p116
        %p226 = pneg %p147
        %p227 = pneg %p144
        %s228 = sand.u32 %s134, 1
        %s229 = scalar_lea.sflag [#allocation4], %s228
        %s230 = sand.u32 %s134, 1
        %s231 = smul.addr %s230, 32
        %s232 = scalar_lea.vmem [#allocation5], %s231
        %v234 = vld [vmem:[%s1] sm:$0xf]
        %v235 = vld [vmem:[%s1 + $0x4] sm:$0xf]
        %v236 = vld [vmem:[%s1 + $0x8] sm:$0xf]
        %v237 = vld [vmem:[%s1 + $0xc] sm:$0xf]
        %v238 = vld [vmem:[%s2] sm:$0xf]
        %v239 = vld [vmem:[%s2 + $0x4] sm:$0xf]
        %v240 = vld [vmem:[%s2 + $0x8] sm:$0xf]
        %v241 = vld [vmem:[%s2 + $0xc] sm:$0xf]
        %v242 = vld [vmem:[%s3] sm:$0xff]
        %v243 = vld [vmem:[%s208] sm:$0x1]
        %v244 = vld [vmem:[%s208 + $0x8] sm:$0x1]
        %v245 = vld [vmem:[%s208 + $0x10] sm:$0x1]
        %v246 = vld [vmem:[%s208 + $0x18] sm:$0x1]
        %v247 = vpack.c.bf16 %v243, %v243
        %v248 = vpack.c.bf16 %v244, %v244
        %v249 = vpack.c.bf16 %v245, %v245
        %v250 = vpack.c.bf16 %v246, %v246
        %v255 = vunpack.c.l.b16 %v247
        %v256 = vunpack.c.l.b16 %v248
        %v257 = vunpack.c.l.b16 %v249
        %v258 = vunpack.c.l.b16 %v250
        %v259 = vrot.slane %v256, 7
        %vm260 = vcmask 1041409
        %v261 = vsel %vm260, %v259, %v255
        %v262 = vrot.slane %v257, 6
        %vm263 = vcmask 1042434
        %v264 = vsel %vm263, %v262, %v261
        %v265 = vrot.slane %v258, 5
        %vm266 = vcmask 1043459
        %v267 = vsel %vm266, %v265, %v264
        %v268 = vpack.c.b16 %v267, %v267
        %v273 = vunpack.c.l.b16 %v234
        %v274 = vunpack.c.l.b16 %v235
        %v275 = vunpack.c.l.b16 %v236
        %v276 = vunpack.c.l.b16 %v237
        %v277 = vpack.c.b16 %v274, %v273
        %v278 = vpack.c.b16 %v276, %v275
        %vm281 = vcmask 261120
        %v283 = vsel %vm281, %v268, 0
        %285 = vmatprep.subr.bf16.mxu0 0
        %286 = vmatpush1.bf16.msra.mxu0 %v277
        %287 = vmatprep.subr.bf16.mxu0 0
        %288 = vmatpush1.bf16.msra.mxu0 %v278
        %289 = vmatprep.subr.bf16.mxu0 0
        %290 = vmatpush1.bf16.msra.mxu0 0
        %291 = vmatprep.subr.bf16.mxu0 0
        %292 = vmatpush1.bf16.msra.mxu0 0
        %293 = vmatprep.subr.bf16.mxu0 0
        %294 = vmatpush1.bf16.msra.mxu0 0
        %295 = vmatprep.subr.bf16.mxu0 0
        %296 = vmatpush1.bf16.msra.mxu0 0
        %297 = vmatprep.subr.bf16.mxu0 0
        %298 = vmatpush1.bf16.msra.mxu0 0
        %299 = vmatprep.subr.bf16.mxu0 0
        %300 = vmatpush1.bf16.msra.mxu0 0
        %301 = vmatprep.subr.bf16.mxu0 0
        %302 = vmatpush1.bf16.msra.mxu0 0
        %303 = vmatprep.subr.bf16.mxu0 0
        %304 = vmatpush1.bf16.msra.mxu0 0
        %305 = vmatprep.subr.bf16.mxu0 0
        %306 = vmatpush1.bf16.msra.mxu0 0
        %307 = vmatprep.subr.bf16.mxu0 0
        %308 = vmatpush1.bf16.msra.mxu0 0
        %309 = vmatprep.subr.bf16.mxu0 0
        %310 = vmatpush1.bf16.msra.mxu0 0
        %311 = vmatprep.subr.bf16.mxu0 0
        %312 = vmatpush1.bf16.msra.mxu0 0
        %313 = vmatprep.subr.bf16.mxu0 0
        %314 = vmatpush1.bf16.msra.mxu0 0
        %315 = vmatprep.subr.bf16.mxu0 0
        %316 = vmatpush1.bf16.msra.mxu0 0
        %317 = vmatprep.mubr.bf16.mxu0 0
        %318 = vmatmul.mubr.bf16.gmra.mrb[0].mxu0 %v283
        %v319 = vpop.f32.mrb[0].mxu0
        %v320 = vadd.f32 0.0, %v319
        %v321 = vpop.f32.mrb[0].mxu0
        %v322 = vpop.f32.mrb[0].mxu0
        %v323 = vpop.f32.mrb[0].mxu0
        %324 = vdwg.mxu0
        %v325 = vpack.c.bf16 %v320, %v320
        %327 = vrot.lane.b32.xlu0 %v325, 120
        %v328 = vpop.permute.xlu0 %327
        %vm329 = vcmask 31744
        %v331 = vsel %vm329, %v239, 0
        %vm333 = vcmask 1041408
        %v335 = vsel %vm333, %v328, 0
        %337 = vmatprep.subr.bf16.mxu0 0
        %338 = vmatpush1.bf16.msra.mxu0 %v335
        %339 = vmatprep.subr.bf16.mxu0 0
        %340 = vmatpush1.bf16.msra.mxu0 0
        %341 = vmatprep.subr.bf16.mxu0 0
        %342 = vmatpush1.bf16.msra.mxu0 0
        %343 = vmatprep.subr.bf16.mxu0 0
        %344 = vmatpush1.bf16.msra.mxu0 0
        %345 = vmatprep.subr.bf16.mxu0 0
        %346 = vmatpush1.bf16.msra.mxu0 0
        %347 = vmatprep.subr.bf16.mxu0 0
        %348 = vmatpush1.bf16.msra.mxu0 0
        %349 = vmatprep.subr.bf16.mxu0 0
        %350 = vmatpush1.bf16.msra.mxu0 0
        %351 = vmatprep.subr.bf16.mxu0 0
        %352 = vmatpush1.bf16.msra.mxu0 0
        %353 = vmatprep.subr.bf16.mxu0 0
        %354 = vmatpush1.bf16.msra.mxu0 0
        %355 = vmatprep.subr.bf16.mxu0 0
        %356 = vmatpush1.bf16.msra.mxu0 0
        %357 = vmatprep.subr.bf16.mxu0 0
        %358 = vmatpush1.bf16.msra.mxu0 0
        %359 = vmatprep.subr.bf16.mxu0 0
        %360 = vmatpush1.bf16.msra.mxu0 0
        %361 = vmatprep.subr.bf16.mxu0 0
        %362 = vmatpush1.bf16.msra.mxu0 0
        %363 = vmatprep.subr.bf16.mxu0 0
        %364 = vmatpush1.bf16.msra.mxu0 0
        %365 = vmatprep.subr.bf16.mxu0 0
        %366 = vmatpush1.bf16.msra.mxu0 0
        %367 = vmatprep.subr.bf16.mxu0 0
        %368 = vmatpush1.bf16.msra.mxu0 0
        %369 = vmatprep.mubr.bf16.mxu0 0
        %370 = vmatmul.mubr.bf16.gmra.mrb[0].mxu0 %v331
        %v371 = vpop.f32.mrb[0].mxu0
        %v372 = vadd.f32 0.0, %v371
        %v373 = vpop.f32.mrb[0].mxu0
        %v374 = vpop.f32.mrb[0].mxu0
        %v375 = vpop.f32.mrb[0].mxu0
        %376 = vdwg.mxu0
        %v378 = vsel %vm329, %v238, 0
        %v381 = vsel %vm333, %v325, 0
        %383 = vmatprep.subr.bf16.mxu0 0
        %384 = vmatpush1.bf16.msra.mxu0 %v381
        %385 = vmatprep.subr.bf16.mxu0 0
        %386 = vmatpush1.bf16.msra.mxu0 0
        %387 = vmatprep.subr.bf16.mxu0 0
        %388 = vmatpush1.bf16.msra.mxu0 0
        %389 = vmatprep.subr.bf16.mxu0 0
        %390 = vmatpush1.bf16.msra.mxu0 0
        %391 = vmatprep.subr.bf16.mxu0 0
        %392 = vmatpush1.bf16.msra.mxu0 0
        %393 = vmatprep.subr.bf16.mxu0 0
        %394 = vmatpush1.bf16.msra.mxu0 0
        %395 = vmatprep.subr.bf16.mxu0 0
        %396 = vmatpush1.bf16.msra.mxu0 0
        %397 = vmatprep.subr.bf16.mxu0 0
        %398 = vmatpush1.bf16.msra.mxu0 0
        %399 = vmatprep.subr.bf16.mxu0 0
        %400 = vmatpush1.bf16.msra.mxu0 0
        %401 = vmatprep.subr.bf16.mxu0 0
        %402 = vmatpush1.bf16.msra.mxu0 0
        %403 = vmatprep.subr.bf16.mxu0 0
        %404 = vmatpush1.bf16.msra.mxu0 0
        %405 = vmatprep.subr.bf16.mxu0 0
        %406 = vmatpush1.bf16.msra.mxu0 0
        %407 = vmatprep.subr.bf16.mxu0 0
        %408 = vmatpush1.bf16.msra.mxu0 0
        %409 = vmatprep.subr.bf16.mxu0 0
        %410 = vmatpush1.bf16.msra.mxu0 0
        %411 = vmatprep.subr.bf16.mxu0 0
        %412 = vmatpush1.bf16.msra.mxu0 0
        %413 = vmatprep.subr.bf16.mxu0 0
        %414 = vmatpush1.bf16.msra.mxu0 0
        %415 = vmatprep.mubr.bf16.mxu0 0
        %416 = vmatmul.mubr.bf16.gmra.mrb[0].mxu0 %v378
        %v417 = vpop.f32.mrb[0].mxu0
        %v418 = vadd.f32 %v372, %v417
        %v419 = vpop.f32.mrb[0].mxu0
        %v420 = vpop.f32.mrb[0].mxu0
        %v421 = vpop.f32.mrb[0].mxu0
        %422 = vdwg.mxu0
        %423 = vrot.lane.b32.xlu0 %v325, 112
        %v424 = vpop.permute.xlu0 %423
        %v426 = vsel %vm329, %v240, 0
        %v429 = vsel %vm333, %v424, 0
        %431 = vmatprep.subr.bf16.mxu0 0
        %432 = vmatpush1.bf16.msra.mxu0 %v429
        %433 = vmatprep.subr.bf16.mxu0 0
        %434 = vmatpush1.bf16.msra.mxu0 0
        %435 = vmatprep.subr.bf16.mxu0 0
        %436 = vmatpush1.bf16.msra.mxu0 0
        %437 = vmatprep.subr.bf16.mxu0 0
        %438 = vmatpush1.bf16.msra.mxu0 0
        %439 = vmatprep.subr.bf16.mxu0 0
        %440 = vmatpush1.bf16.msra.mxu0 0
        %441 = vmatprep.subr.bf16.mxu0 0
        %442 = vmatpush1.bf16.msra.mxu0 0
        %443 = vmatprep.subr.bf16.mxu0 0
        %444 = vmatpush1.bf16.msra.mxu0 0
        %445 = vmatprep.subr.bf16.mxu0 0
        %446 = vmatpush1.bf16.msra.mxu0 0
        %447 = vmatprep.subr.bf16.mxu0 0
        %448 = vmatpush1.bf16.msra.mxu0 0
        %449 = vmatprep.subr.bf16.mxu0 0
        %450 = vmatpush1.bf16.msra.mxu0 0
        %451 = vmatprep.subr.bf16.mxu0 0
        %452 = vmatpush1.bf16.msra.mxu0 0
        %453 = vmatprep.subr.bf16.mxu0 0
        %454 = vmatpush1.bf16.msra.mxu0 0
        %455 = vmatprep.subr.bf16.mxu0 0
        %456 = vmatpush1.bf16.msra.mxu0 0
        %457 = vmatprep.subr.bf16.mxu0 0
        %458 = vmatpush1.bf16.msra.mxu0 0
        %459 = vmatprep.subr.bf16.mxu0 0
        %460 = vmatpush1.bf16.msra.mxu0 0
        %461 = vmatprep.subr.bf16.mxu0 0
        %462 = vmatpush1.bf16.msra.mxu0 0
        %463 = vmatprep.mubr.bf16.mxu0 0
        %464 = vmatmul.mubr.bf16.gmra.mrb[0].mxu0 %v426
        %v465 = vpop.f32.mrb[0].mxu0
        %v466 = vadd.f32 0.0, %v465
        %v467 = vpop.f32.mrb[0].mxu0
        %v468 = vpop.f32.mrb[0].mxu0
        %v469 = vpop.f32.mrb[0].mxu0
        %470 = vdwg.mxu0
        %v471 = vadd.f32 %v418, %v466
        %472 = vrot.lane.b32.xlu0 %v325, 104
        %v473 = vpop.permute.xlu0 %472
        %v475 = vsel %vm329, %v241, 0
        %v478 = vsel %vm333, %v473, 0
        %480 = vmatprep.subr.bf16.mxu0 0
        %481 = vmatpush1.bf16.msra.mxu0 %v478
        %482 = vmatprep.subr.bf16.mxu0 0
        %483 = vmatpush1.bf16.msra.mxu0 0
        %484 = vmatprep.subr.bf16.mxu0 0
        %485 = vmatpush1.bf16.msra.mxu0 0
        %486 = vmatprep.subr.bf16.mxu0 0
        %487 = vmatpush1.bf16.msra.mxu0 0
        %488 = vmatprep.subr.bf16.mxu0 0
        %489 = vmatpush1.bf16.msra.mxu0 0
        %490 = vmatprep.subr.bf16.mxu0 0
        %491 = vmatpush1.bf16.msra.mxu0 0
        %492 = vmatprep.subr.bf16.mxu0 0
        %493 = vmatpush1.bf16.msra.mxu0 0
        %494 = vmatprep.subr.bf16.mxu0 0
        %495 = vmatpush1.bf16.msra.mxu0 0
        %496 = vmatprep.subr.bf16.mxu0 0
        %497 = vmatpush1.bf16.msra.mxu0 0
        %498 = vmatprep.subr.bf16.mxu0 0
        %499 = vmatpush1.bf16.msra.mxu0 0
        %500 = vmatprep.subr.bf16.mxu0 0
        %501 = vmatpush1.bf16.msra.mxu0 0
        %502 = vmatprep.subr.bf16.mxu0 0
        %503 = vmatpush1.bf16.msra.mxu0 0
        %504 = vmatprep.subr.bf16.mxu0 0
        %505 = vmatpush1.bf16.msra.mxu0 0
        %506 = vmatprep.subr.bf16.mxu0 0
        %507 = vmatpush1.bf16.msra.mxu0 0
        %508 = vmatprep.subr.bf16.mxu0 0
        %509 = vmatpush1.bf16.msra.mxu0 0
        %510 = vmatprep.subr.bf16.mxu0 0
        %511 = vmatpush1.bf16.msra.mxu0 0
        %512 = vmatprep.mubr.bf16.mxu0 0
        %513 = vmatmul.mubr.bf16.gmra.mrb[0].mxu0 %v475
        %v514 = vpop.f32.mrb[0].mxu0
        %v515 = vadd.f32 0.0, %v514
        %v516 = vpop.f32.mrb[0].mxu0
        %v517 = vpop.f32.mrb[0].mxu0
        %v518 = vpop.f32.mrb[0].mxu0
        %519 = vdwg.mxu0
        %v520 = vadd.f32 %v471, %v515
        %522 = vset.pattern.permute.xlu0 0
        %523 = vperm.xlu0 %522, %v242
        %v524 = vpop.permute.xlu0 %523
        %v526 = vadd.f32 %v520, %v524
        %v527 = vmax.f32 %v526, 0.0
        %v528 = vpack.c.bf16 %v527, %v527
        %v531 = vunpack.c.l.s4 1966171168
        %v532 = vunpack.c.0.s8 %v531
        %v533 = vlaneseq
        %v534 = vshrl.u32 %v533, 7
        %v535 = vsub.s32 %v532, %v534
        %v536 = vrot.slane %v528, %v535
        %v537 = vcombine.high %v536, %v536
        %v539 = vunpack.c.l.s4 1966171168
        %v540 = vunpack.c.0.s8 %v539
        %v541 = vlaneseq
        %v542 = vshrl.u32 %v541, 7
        %v543 = vsub.s32 %v540, %v542
        %v544 = vrot.slane %v536, %v543
        %v546 = vunpack.c.l.s4 1966171168
        %v547 = vunpack.c.0.s8 %v546
        %v548 = vlaneseq
        %v549 = vshrl.u32 %v548, 7
        %v550 = vsub.s32 %v547, %v549
        %v551 = vrot.slane %v537, %v550
        %v552 = vcombine.high %v544, %v544
        %v553 = vcombine.high %v551, %v551
        %v554 = vunpack.i.l.s16 %v544
        %v555 = vunpack.i.h.s16 %v544
        %v556 = vunpack.i.l.s16 %v551
        %v557 = vunpack.i.h.s16 %v551
        %v558 = vunpack.i.l.s16 %v552
        %v559 = vunpack.i.h.s16 %v552
        %v560 = vunpack.i.l.s16 %v553
        %v561 = vunpack.i.h.s16 %v553
        %v562 = vpack.i.b16 %v554, %v554
        %v563 = vpack.i.b16 %v555, %v555
        %v564 = vpack.i.b16 %v556, %v556
        %v565 = vpack.i.b16 %v557, %v557
        %v566 = vpack.i.b16 %v558, %v558
        %v567 = vpack.i.b16 %v559, %v559
        %v568 = vpack.i.b16 %v560, %v560
        %v569 = vpack.i.b16 %v561, %v561
        %v571 = vunpack.c.l.s4 286326784
        %v572 = vunpack.c.0.s8 %v571
        %v573 = vlaneseq
        %v574 = vshrl.u32 %v573, 7
        %v575 = vsub.s32 %v572, %v574
        %v576 = vrot.slane %v562, %v575
        %v578 = vunpack.c.l.s4 286326784
        %v579 = vunpack.c.0.s8 %v578
        %v580 = vlaneseq
        %v581 = vshrl.u32 %v580, 7
        %v582 = vsub.s32 %v579, %v581
        %v583 = vrot.slane %v563, %v582
        %v585 = vunpack.c.l.s4 286326784
        %v586 = vunpack.c.0.s8 %v585
        %v587 = vlaneseq
        %v588 = vshrl.u32 %v587, 7
        %v589 = vsub.s32 %v586, %v588
        %v590 = vrot.slane %v564, %v589
        %v592 = vunpack.c.l.s4 286326784
        %v593 = vunpack.c.0.s8 %v592
        %v594 = vlaneseq
        %v595 = vshrl.u32 %v594, 7
        %v596 = vsub.s32 %v593, %v595
        %v597 = vrot.slane %v565, %v596
        %v599 = vunpack.c.l.s4 286326784
        %v600 = vunpack.c.0.s8 %v599
        %v601 = vlaneseq
        %v602 = vshrl.u32 %v601, 7
        %v603 = vsub.s32 %v600, %v602
        %v604 = vrot.slane %v566, %v603
        %v606 = vunpack.c.l.s4 286326784
        %v607 = vunpack.c.0.s8 %v606
        %v608 = vlaneseq
        %v609 = vshrl.u32 %v608, 7
        %v610 = vsub.s32 %v607, %v609
        %v611 = vrot.slane %v567, %v610
        %v613 = vunpack.c.l.s4 286326784
        %v614 = vunpack.c.0.s8 %v613
        %v615 = vlaneseq
        %v616 = vshrl.u32 %v615, 7
        %v617 = vsub.s32 %v614, %v616
        %v618 = vrot.slane %v568, %v617
        %v620 = vunpack.c.l.s4 286326784
        %v621 = vunpack.c.0.s8 %v620
        %v622 = vlaneseq
        %v623 = vshrl.u32 %v622, 7
        %v624 = vsub.s32 %v621, %v623
        %v625 = vrot.slane %v569, %v624
        %vm634 = vcmask 57344
        %vm635 = vsmask.f32 256
        %vm636 = vmand %vm634, %vm635
        %v637 = vld [vmem:[%s232] sm:$0x1]
        %v638 = vsel %vm636, %v576, %v637
        %639 = vst [vmem:[%s232] sm:$0x1] %v638
        %v640 = vld [vmem:[%s232 + $0x4] sm:$0x1]
        %v641 = vsel %vm636, %v583, %v640
        %642 = vst [vmem:[%s232 + $0x4] sm:$0x1] %v641
        %v643 = vld [vmem:[%s232 + $0x8] sm:$0x1]
        %v644 = vsel %vm636, %v590, %v643
        %645 = vst [vmem:[%s232 + $0x8] sm:$0x1] %v644
        %v646 = vld [vmem:[%s232 + $0xc] sm:$0x1]
        %v647 = vsel %vm636, %v597, %v646
        %648 = vst [vmem:[%s232 + $0xc] sm:$0x1] %v647
        %v649 = vld [vmem:[%s232 + $0x10] sm:$0x1]
        %v650 = vsel %vm636, %v604, %v649
        %651 = vst [vmem:[%s232 + $0x10] sm:$0x1] %v650
        %v652 = vld [vmem:[%s232 + $0x14] sm:$0x1]
        %v653 = vsel %vm636, %v611, %v652
        %654 = vst [vmem:[%s232 + $0x14] sm:$0x1] %v653
        %v655 = vld [vmem:[%s232 + $0x18] sm:$0x1]
        %v656 = vsel %vm636, %v618, %v655
        %657 = vst [vmem:[%s232 + $0x18] sm:$0x1] %v656
        %v658 = vld [vmem:[%s232 + $0x1c] sm:$0x1]
        %v659 = vsel %vm636, %v625, %v658
        %660 = vst [vmem:[%s232 + $0x1c] sm:$0x1] %v659
        %v661 = vld [vmem:[%s208 + $0x1] sm:$0x1]
        %v662 = vld [vmem:[%s208 + $0x9] sm:$0x1]
        %v663 = vld [vmem:[%s208 + $0x11] sm:$0x1]
        %v664 = vld [vmem:[%s208 + $0x19] sm:$0x1]
        %v665 = vpack.c.bf16 %v661, %v661
        %v666 = vpack.c.bf16 %v662, %v662
        %v667 = vpack.c.bf16 %v663, %v663
        %v668 = vpack.c.bf16 %v664, %v664
        %v673 = vunpack.c.l.b16 %v665
        %v674 = vunpack.c.l.b16 %v666
        %v675 = vunpack.c.l.b16 %v667
        %v676 = vunpack.c.l.b16 %v668
        %v677 = vrot.slane %v674, 7
        %v678 = vsel %vm260, %v677, %v673
        %v679 = vrot.slane %v675, 6
        %v680 = vsel %vm263, %v679, %v678
        %v681 = vrot.slane %v676, 5
        %v682 = vsel %vm266, %v681, %v680
        %v683 = vpack.c.b16 %v682, %v682
        %v685 = vsel %vm281, %v683, 0
        %687 = vmatprep.subr.bf16.mxu0 0
        %688 = vmatpush1.bf16.msra.mxu0 %v277
        %689 = vmatprep.subr.bf16.mxu0 0
        %690 = vmatpush1.bf16.msra.mxu0 %v278
        %691 = vmatprep.subr.bf16.mxu0 0
        %692 = vmatpush1.bf16.msra.mxu0 0
        %693 = vmatprep.subr.bf16.mxu0 0
        %694 = vmatpush1.bf16.msra.mxu0 0
        %695 = vmatprep.subr.bf16.mxu0 0
        %696 = vmatpush1.bf16.msra.mxu0 0
        %697 = vmatprep.subr.bf16.mxu0 0
        %698 = vmatpush1.bf16.msra.mxu0 0
        %699 = vmatprep.subr.bf16.mxu0 0
        %700 = vmatpush1.bf16.msra.mxu0 0
        %701 = vmatprep.subr.bf16.mxu0 0
        %702 = vmatpush1.bf16.msra.mxu0 0
        %703 = vmatprep.subr.bf16.mxu0 0
        %704 = vmatpush1.bf16.msra.mxu0 0
        %705 = vmatprep.subr.bf16.mxu0 0
        %706 = vmatpush1.bf16.msra.mxu0 0
        %707 = vmatprep.subr.bf16.mxu0 0
        %708 = vmatpush1.bf16.msra.mxu0 0
        %709 = vmatprep.subr.bf16.mxu0 0
        %710 = vmatpush1.bf16.msra.mxu0 0
        %711 = vmatprep.subr.bf16.mxu0 0
        %712 = vmatpush1.bf16.msra.mxu0 0
        %713 = vmatprep.subr.bf16.mxu0 0
        %714 = vmatpush1.bf16.msra.mxu0 0
        %715 = vmatprep.subr.bf16.mxu0 0
        %716 = vmatpush1.bf16.msra.mxu0 0
        %717 = vmatprep.subr.bf16.mxu0 0
        %718 = vmatpush1.bf16.msra.mxu0 0
        %719 = vmatprep.mubr.bf16.mxu0 0
        %720 = vmatmul.mubr.bf16.gmra.mrb[0].mxu0 %v685
        %v721 = vpop.f32.mrb[0].mxu0
        %v722 = vadd.f32 0.0, %v721
        %v723 = vpop.f32.mrb[0].mxu0
        %v724 = vpop.f32.mrb[0].mxu0
        %v725 = vpop.f32.mrb[0].mxu0
        %726 = vdwg.mxu0
        %v727 = vpack.c.bf16 %v722, %v722
        %729 = vrot.lane.b32.xlu0 %v727, 120
        %v730 = vpop.permute.xlu0 %729
        %v732 = vsel %vm333, %v730, 0
        %734 = vmatprep.subr.bf16.mxu0 0
        %735 = vmatpush1.bf16.msra.mxu0 %v732
        %736 = vmatprep.subr.bf16.mxu0 0
        %737 = vmatpush1.bf16.msra.mxu0 0
        %738 = vmatprep.subr.bf16.mxu0 0
        %739 = vmatpush1.bf16.msra.mxu0 0
        %740 = vmatprep.subr.bf16.mxu0 0
        %741 = vmatpush1.bf16.msra.mxu0 0
        %742 = vmatprep.subr.bf16.mxu0 0
        %743 = vmatpush1.bf16.msra.mxu0 0
        %744 = vmatprep.subr.bf16.mxu0 0
        %745 = vmatpush1.bf16.msra.mxu0 0
        %746 = vmatprep.subr.bf16.mxu0 0
        %747 = vmatpush1.bf16.msra.mxu0 0
        %748 = vmatprep.subr.bf16.mxu0 0
        %749 = vmatpush1.bf16.msra.mxu0 0
        %750 = vmatprep.subr.bf16.mxu0 0
        %751 = vmatpush1.bf16.msra.mxu0 0
        %752 = vmatprep.subr.bf16.mxu0 0
        %753 = vmatpush1.bf16.msra.mxu0 0
        %754 = vmatprep.subr.bf16.mxu0 0
        %755 = vmatpush1.bf16.msra.mxu0 0
        %756 = vmatprep.subr.bf16.mxu0 0
        %757 = vmatpush1.bf16.msra.mxu0 0
        %758 = vmatprep.subr.bf16.mxu0 0
        %759 = vmatpush1.bf16.msra.mxu0 0
        %760 = vmatprep.subr.bf16.mxu0 0
        %761 = vmatpush1.bf16.msra.mxu0 0
        %762 = vmatprep.subr.bf16.mxu0 0
        %763 = vmatpush1.bf16.msra.mxu0 0
        %764 = vmatprep.subr.bf16.mxu0 0
        %765 = vmatpush1.bf16.msra.mxu0 0
        %766 = vmatprep.mubr.bf16.mxu0 0
        %767 = vmatmul.mubr.bf16.gmra.mrb[0].mxu0 %v331
        %v768 = vpop.f32.mrb[0].mxu0
        %v769 = vadd.f32 0.0, %v768
        %v770 = vpop.f32.mrb[0].mxu0
        %v771 = vpop.f32.mrb[0].mxu0
        %v772 = vpop.f32.mrb[0].mxu0
        %773 = vdwg.mxu0
        %v775 = vsel %vm333, %v727, 0
        %777 = vmatprep.subr.bf16.mxu0 0
        %778 = vmatpush1.bf16.msra.mxu0 %v775
        %779 = vmatprep.subr.bf16.mxu0 0
        %780 = vmatpush1.bf16.msra.mxu0 0
        %781 = vmatprep.subr.bf16.mxu0 0
        %782 = vmatpush1.bf16.msra.mxu0 0
        %783 = vmatprep.subr.bf16.mxu0 0
        %784 = vmatpush1.bf16.msra.mxu0 0
        %785 = vmatprep.subr.bf16.mxu0 0
        %786 = vmatpush1.bf16.msra.mxu0 0
        %787 = vmatprep.subr.bf16.mxu0 0
        %788 = vmatpush1.bf16.msra.mxu0 0
        %789 = vmatprep.subr.bf16.mxu0 0
        %790 = vmatpush1.bf16.msra.mxu0 0
        %791 = vmatprep.subr.bf16.mxu0 0
        %792 = vmatpush1.bf16.msra.mxu0 0
        %793 = vmatprep.subr.bf16.mxu0 0
        %794 = vmatpush1.bf16.msra.mxu0 0
        %795 = vmatprep.subr.bf16.mxu0 0
        %796 = vmatpush1.bf16.msra.mxu0 0
        %797 = vmatprep.subr.bf16.mxu0 0
        %798 = vmatpush1.bf16.msra.mxu0 0
        %799 = vmatprep.subr.bf16.mxu0 0
        %800 = vmatpush1.bf16.msra.mxu0 0
        %801 = vmatprep.subr.bf16.mxu0 0
        %802 = vmatpush1.bf16.msra.mxu0 0
        %803 = vmatprep.subr.bf16.mxu0 0
        %804 = vmatpush1.bf16.msra.mxu0 0
        %805 = vmatprep.subr.bf16.mxu0 0
        %806 = vmatpush1.bf16.msra.mxu0 0
        %807 = vmatprep.subr.bf16.mxu0 0
        %808 = vmatpush1.bf16.msra.mxu0 0
        %809 = vmatprep.mubr.bf16.mxu0 0
        %810 = vmatmul.mubr.bf16.gmra.mrb[0].mxu0 %v378
        %v811 = vpop.f32.mrb[0].mxu0
        %v812 = vadd.f32 %v769, %v811
        %v813 = vpop.f32.mrb[0].mxu0
        %v814 = vpop.f32.mrb[0].mxu0
        %v815 = vpop.f32.mrb[0].mxu0
        %816 = vdwg.mxu0
        %817 = vrot.lane.b32.xlu0 %v727, 112
        %v818 = vpop.permute.xlu0 %817
        %v820 = vsel %vm333, %v818, 0
        %822 = vmatprep.subr.bf16.mxu0 0
        %823 = vmatpush1.bf16.msra.mxu0 %v820
        %824 = vmatprep.subr.bf16.mxu0 0
        %825 = vmatpush1.bf16.msra.mxu0 0
        %826 = vmatprep.subr.bf16.mxu0 0
        %827 = vmatpush1.bf16.msra.mxu0 0
        %828 = vmatprep.subr.bf16.mxu0 0
        %829 = vmatpush1.bf16.msra.mxu0 0
        %830 = vmatprep.subr.bf16.mxu0 0
        %831 = vmatpush1.bf16.msra.mxu0 0
        %832 = vmatprep.subr.bf16.mxu0 0
        %833 = vmatpush1.bf16.msra.mxu0 0
        %834 = vmatprep.subr.bf16.mxu0 0
        %835 = vmatpush1.bf16.msra.mxu0 0
        %836 = vmatprep.subr.bf16.mxu0 0
        %837 = vmatpush1.bf16.msra.mxu0 0
        %838 = vmatprep.subr.bf16.mxu0 0
        %839 = vmatpush1.bf16.msra.mxu0 0
        %840 = vmatprep.subr.bf16.mxu0 0
        %841 = vmatpush1.bf16.msra.mxu0 0
        %842 = vmatprep.subr.bf16.mxu0 0
        %843 = vmatpush1.bf16.msra.mxu0 0
        %844 = vmatprep.subr.bf16.mxu0 0
        %845 = vmatpush1.bf16.msra.mxu0 0
        %846 = vmatprep.subr.bf16.mxu0 0
        %847 = vmatpush1.bf16.msra.mxu0 0
        %848 = vmatprep.subr.bf16.mxu0 0
        %849 = vmatpush1.bf16.msra.mxu0 0
        %850 = vmatprep.subr.bf16.mxu0 0
        %851 = vmatpush1.bf16.msra.mxu0 0
        %852 = vmatprep.subr.bf16.mxu0 0
        %853 = vmatpush1.bf16.msra.mxu0 0
        %854 = vmatprep.mubr.bf16.mxu0 0
        %855 = vmatmul.mubr.bf16.gmra.mrb[0].mxu0 %v426
        %v856 = vpop.f32.mrb[0].mxu0
        %v857 = vadd.f32 0.0, %v856
        %v858 = vpop.f32.mrb[0].mxu0
        %v859 = vpop.f32.mrb[0].mxu0
        %v860 = vpop.f32.mrb[0].mxu0
        %861 = vdwg.mxu0
        %v862 = vadd.f32 %v812, %v857
        %863 = vrot.lane.b32.xlu0 %v727, 104
        %v864 = vpop.permute.xlu0 %863
        %v866 = vsel %vm333, %v864, 0
        %868 = vmatprep.subr.bf16.mxu0 0
        %869 = vmatpush1.bf16.msra.mxu0 %v866
        %870 = vmatprep.subr.bf16.mxu0 0
        %871 = vmatpush1.bf16.msra.mxu0 0
        %872 = vmatprep.subr.bf16.mxu0 0
        %873 = vmatpush1.bf16.msra.mxu0 0
        %874 = vmatprep.subr.bf16.mxu0 0
        %875 = vmatpush1.bf16.msra.mxu0 0
        %876 = vmatprep.subr.bf16.mxu0 0
        %877 = vmatpush1.bf16.msra.mxu0 0
        %878 = vmatprep.subr.bf16.mxu0 0
        %879 = vmatpush1.bf16.msra.mxu0 0
        %880 = vmatprep.subr.bf16.mxu0 0
        %881 = vmatpush1.bf16.msra.mxu0 0
        %882 = vmatprep.subr.bf16.mxu0 0
        %883 = vmatpush1.bf16.msra.mxu0 0
        %884 = vmatprep.subr.bf16.mxu0 0
        %885 = vmatpush1.bf16.msra.mxu0 0
        %886 = vmatprep.subr.bf16.mxu0 0
        %887 = vmatpush1.bf16.msra.mxu0 0
        %888 = vmatprep.subr.bf16.mxu0 0
        %889 = vmatpush1.bf16.msra.mxu0 0
        %890 = vmatprep.subr.bf16.mxu0 0
        %891 = vmatpush1.bf16.msra.mxu0 0
        %892 = vmatprep.subr.bf16.mxu0 0
        %893 = vmatpush1.bf16.msra.mxu0 0
        %894 = vmatprep.subr.bf16.mxu0 0
        %895 = vmatpush1.bf16.msra.mxu0 0
        %896 = vmatprep.subr.bf16.mxu0 0
        %897 = vmatpush1.bf16.msra.mxu0 0
        %898 = vmatprep.subr.bf16.mxu0 0
        %899 = vmatpush1.bf16.msra.mxu0 0
        %900 = vmatprep.mubr.bf16.mxu0 0
        %901 = vmatmul.mubr.bf16.gmra.mrb[0].mxu0 %v475
        %v902 = vpop.f32.mrb[0].mxu0
        %v903 = vadd.f32 0.0, %v902
        %v904 = vpop.f32.mrb[0].mxu0
        %v905 = vpop.f32.mrb[0].mxu0
        %v906 = vpop.f32.mrb[0].mxu0
        %907 = vdwg.mxu0
        %v908 = vadd.f32 %v862, %v903
        %v909 = vadd.f32 %v908, %v524
        %v910 = vmax.f32 %v909, 0.0
        %v911 = vpack.c.bf16 %v910, %v910
        %v914 = vunpack.c.l.s4 1966171168
        %v915 = vunpack.c.0.s8 %v914
        %v916 = vlaneseq
        %v917 = vshrl.u32 %v916, 7
        %v918 = vsub.s32 %v915, %v917
        %v919 = vrot.slane %v911, %v918
        %v920 = vcombine.high %v919, %v919
        %v922 = vunpack.c.l.s4 1966171168
        %v923 = vunpack.c.0.s8 %v922
        %v924 = vlaneseq
        %v925 = vshrl.u32 %v924, 7
        %v926 = vsub.s32 %v923, %v925
        %v927 = vrot.slane %v919, %v926
        %v929 = vunpack.c.l.s4 1966171168
        %v930 = vunpack.c.0.s8 %v929
        %v931 = vlaneseq
        %v932 = vshrl.u32 %v931, 7
        %v933 = vsub.s32 %v930, %v932
        %v934 = vrot.slane %v920, %v933
        %v935 = vcombine.high %v927, %v927
        %v936 = vcombine.high %v934, %v934
        %v937 = vunpack.i.l.s16 %v927
        %v938 = vunpack.i.h.s16 %v927
        %v939 = vunpack.i.l.s16 %v934
        %v940 = vunpack.i.h.s16 %v934
        %v941 = vunpack.i.l.s16 %v935
        %v942 = vunpack.i.h.s16 %v935
        %v943 = vunpack.i.l.s16 %v936
        %v944 = vunpack.i.h.s16 %v936
        %v945 = vpack.i.b16 %v937, %v937
        %v946 = vpack.i.b16 %v938, %v938
        %v947 = vpack.i.b16 %v939, %v939
        %v948 = vpack.i.b16 %v940, %v940
        %v949 = vpack.i.b16 %v941, %v941
        %v950 = vpack.i.b16 %v942, %v942
        %v951 = vpack.i.b16 %v943, %v943
        %v952 = vpack.i.b16 %v944, %v944
        %v954 = vunpack.c.l.s4 286326784
        %v955 = vunpack.c.0.s8 %v954
        %v956 = vlaneseq
        %v957 = vshrl.u32 %v956, 7
        %v958 = vsub.s32 %v955, %v957
        %v959 = vrot.slane %v945, %v958
        %v961 = vunpack.c.l.s4 286326784
        %v962 = vunpack.c.0.s8 %v961
        %v963 = vlaneseq
        %v964 = vshrl.u32 %v963, 7
        %v965 = vsub.s32 %v962, %v964
        %v966 = vrot.slane %v946, %v965
        %v968 = vunpack.c.l.s4 286326784
        %v969 = vunpack.c.0.s8 %v968
        %v970 = vlaneseq
        %v971 = vshrl.u32 %v970, 7
        %v972 = vsub.s32 %v969, %v971
        %v973 = vrot.slane %v947, %v972
        %v975 = vunpack.c.l.s4 286326784
        %v976 = vunpack.c.0.s8 %v975
        %v977 = vlaneseq
        %v978 = vshrl.u32 %v977, 7
        %v979 = vsub.s32 %v976, %v978
        %v980 = vrot.slane %v948, %v979
        %v982 = vunpack.c.l.s4 286326784
        %v983 = vunpack.c.0.s8 %v982
        %v984 = vlaneseq
        %v985 = vshrl.u32 %v984, 7
        %v986 = vsub.s32 %v983, %v985
        %v987 = vrot.slane %v949, %v986
        %v989 = vunpack.c.l.s4 286326784
        %v990 = vunpack.c.0.s8 %v989
        %v991 = vlaneseq
        %v992 = vshrl.u32 %v991, 7
        %v993 = vsub.s32 %v990, %v992
        %v994 = vrot.slane %v950, %v993
        %v996 = vunpack.c.l.s4 286326784
        %v997 = vunpack.c.0.s8 %v996
        %v998 = vlaneseq
        %v999 = vshrl.u32 %v998, 7
        %v1000 = vsub.s32 %v997, %v999
        %v1001 = vrot.slane %v951, %v1000
        %v1003 = vunpack.c.l.s4 286326784
        %v1004 = vunpack.c.0.s8 %v1003
        %v1005 = vlaneseq
        %v1006 = vshrl.u32 %v1005, 7
        %v1007 = vsub.s32 %v1004, %v1006
        %v1008 = vrot.slane %v952, %v1007
        %vm1017 = vsmask.f32 7938
        %vm1018 = vmand %vm634, %vm1017
        %v1019 = vld [vmem:[%s232] sm:$0x1]
        %v1020 = vsel %vm1018, %v959, %v1019
        %1021 = vst [vmem:[%s232] sm:$0x1] %v1020
        %v1022 = vld [vmem:[%s232 + $0x4] sm:$0x1]
        %v1023 = vsel %vm1018, %v966, %v1022
        %1024 = vst [vmem:[%s232 + $0x4] sm:$0x1] %v1023
        %v1025 = vld [vmem:[%s232 + $0x8] sm:$0x1]
        %v1026 = vsel %vm1018, %v973, %v1025
        %1027 = vst [vmem:[%s232 + $0x8] sm:$0x1] %v1026
        %v1028 = vld [vmem:[%s232 + $0xc] sm:$0x1]
        %v1029 = vsel %vm1018, %v980, %v1028
        %1030 = vst [vmem:[%s232 + $0xc] sm:$0x1] %v1029
        %v1031 = vld [vmem:[%s232 + $0x10] sm:$0x1]
        %v1032 = vsel %vm1018, %v987, %v1031
        %1033 = vst [vmem:[%s232 + $0x10] sm:$0x1] %v1032
        %v1034 = vld [vmem:[%s232 + $0x14] sm:$0x1]
        %v1035 = vsel %vm1018, %v994, %v1034
        %1036 = vst [vmem:[%s232 + $0x14] sm:$0x1] %v1035
        %v1037 = vld [vmem:[%s232 + $0x18] sm:$0x1]
        %v1038 = vsel %vm1018, %v1001, %v1037
        %1039 = vst [vmem:[%s232 + $0x18] sm:$0x1] %v1038
        %v1040 = vld [vmem:[%s232 + $0x1c] sm:$0x1]
        %v1041 = vsel %vm1018, %v1008, %v1040
        %1042 = vst [vmem:[%s232 + $0x1c] sm:$0x1] %v1041
        %v1043 = vld [vmem:[%s208 + $0x2] sm:$0x1]
        %v1044 = vld [vmem:[%s208 + $0xa] sm:$0x1]
        %v1045 = vld [vmem:[%s208 + $0x12] sm:$0x1]
        %v1046 = vld [vmem:[%s208 + $0x1a] sm:$0x1]
        %v1047 = vpack.c.bf16 %v1043, %v1043
        %v1048 = vpack.c.bf16 %v1044, %v1044
        %v1049 = vpack.c.bf16 %v1045, %v1045
        %v1050 = vpack.c.bf16 %v1046, %v1046
        %v1055 = vunpack.c.l.b16 %v1047
        %v1056 = vunpack.c.l.b16 %v1048
        %v1057 = vunpack.c.l.b16 %v1049
        %v1058 = vunpack.c.l.b16 %v1050
        %v1059 = vrot.slane %v1056, 7
        %v1060 = vsel %vm260, %v1059, %v1055
        %v1061 = vrot.slane %v1057, 6
        %v1062 = vsel %vm263, %v1061, %v1060
        %v1063 = vrot.slane %v1058, 5
        %v1064 = vsel %vm266, %v1063, %v1062
        %v1065 = vpack.c.b16 %v1064, %v1064
        %v1067 = vsel %vm281, %v1065, 0
        %1069 = vmatprep.subr.bf16.mxu0 0
        %1070 = vmatpush1.bf16.msra.mxu0 %v277
        %1071 = vmatprep.subr.bf16.mxu0 0
        %1072 = vmatpush1.bf16.msra.mxu0 %v278
        %1073 = vmatprep.subr.bf16.mxu0 0
        %1074 = vmatpush1.bf16.msra.mxu0 0
        %1075 = vmatprep.subr.bf16.mxu0 0
        %1076 = vmatpush1.bf16.msra.mxu0 0
        %1077 = vmatprep.subr.bf16.mxu0 0
        %1078 = vmatpush1.bf16.msra.mxu0 0
        %1079 = vmatprep.subr.bf16.mxu0 0
        %1080 = vmatpush1.bf16.msra.mxu0 0
        %1081 = vmatprep.subr.bf16.mxu0 0
        %1082 = vmatpush1.bf16.msra.mxu0 0
        %1083 = vmatprep.subr.bf16.mxu0 0
        %1084 = vmatpush1.bf16.msra.mxu0 0
        %1085 = vmatprep.subr.bf16.mxu0 0
        %1086 = vmatpush1.bf16.msra.mxu0 0
        %1087 = vmatprep.subr.bf16.mxu0 0
        %1088 = vmatpush1.bf16.msra.mxu0 0
        %1089 = vmatprep.subr.bf16.mxu0 0
        %1090 = vmatpush1.bf16.msra.mxu0 0
        %1091 = vmatprep.subr.bf16.mxu0 0
        %1092 = vmatpush1.bf16.msra.mxu0 0
        %1093 = vmatprep.subr.bf16.mxu0 0
        %1094 = vmatpush1.bf16.msra.mxu0 0
        %1095 = vmatprep.subr.bf16.mxu0 0
        %1096 = vmatpush1.bf16.msra.mxu0 0
        %1097 = vmatprep.subr.bf16.mxu0 0
        %1098 = vmatpush1.bf16.msra.mxu0 0
        %1099 = vmatprep.subr.bf16.mxu0 0
        %1100 = vmatpush1.bf16.msra.mxu0 0
        %1101 = vmatprep.mubr.bf16.mxu0 0
        %1102 = vmatmul.mubr.bf16.gmra.mrb[0].mxu0 %v1067
        %v1103 = vpop.f32.mrb[0].mxu0
        %v1104 = vadd.f32 0.0, %v1103
        %v1105 = vpop.f32.mrb[0].mxu0
        %v1106 = vpop.f32.mrb[0].mxu0
        %v1107 = vpop.f32.mrb[0].mxu0
        %1108 = vdwg.mxu0
        %v1109 = vpack.c.bf16 %v1104, %v1104
        %1111 = vrot.lane.b32.xlu0 %v1109, 120
        %v1112 = vpop.permute.xlu0 %1111
        %v1114 = vsel %vm333, %v1112, 0
        %1116 = vmatprep.subr.bf16.mxu0 0
        %1117 = vmatpush1.bf16.msra.mxu0 %v1114
        %1118 = vmatprep.subr.bf16.mxu0 0
        %1119 = vmatpush1.bf16.msra.mxu0 0
        %1120 = vmatprep.subr.bf16.mxu0 0
        %1121 = vmatpush1.bf16.msra.mxu0 0
        %1122 = vmatprep.subr.bf16.mxu0 0
        %1123 = vmatpush1.bf16.msra.mxu0 0
        %1124 = vmatprep.subr.bf16.mxu0 0
        %1125 = vmatpush1.bf16.msra.mxu0 0
        %1126 = vmatprep.subr.bf16.mxu0 0
        %1127 = vmatpush1.bf16.msra.mxu0 0
        %1128 = vmatprep.subr.bf16.mxu0 0
        %1129 = vmatpush1.bf16.msra.mxu0 0
        %1130 = vmatprep.subr.bf16.mxu0 0
        %1131 = vmatpush1.bf16.msra.mxu0 0
        %1132 = vmatprep.subr.bf16.mxu0 0
        %1133 = vmatpush1.bf16.msra.mxu0 0
        %1134 = vmatprep.subr.bf16.mxu0 0
        %1135 = vmatpush1.bf16.msra.mxu0 0
        %1136 = vmatprep.subr.bf16.mxu0 0
        %1137 = vmatpush1.bf16.msra.mxu0 0
        %1138 = vmatprep.subr.bf16.mxu0 0
        %1139 = vmatpush1.bf16.msra.mxu0 0
        %1140 = vmatprep.subr.bf16.mxu0 0
        %1141 = vmatpush1.bf16.msra.mxu0 0
        %1142 = vmatprep.subr.bf16.mxu0 0
        %1143 = vmatpush1.bf16.msra.mxu0 0
        %1144 = vmatprep.subr.bf16.mxu0 0
        %1145 = vmatpush1.bf16.msra.mxu0 0
        %1146 = vmatprep.subr.bf16.mxu0 0
        %1147 = vmatpush1.bf16.msra.mxu0 0
        %1148 = vmatprep.mubr.bf16.mxu0 0
        %1149 = vmatmul.mubr.bf16.gmra.mrb[0].mxu0 %v331
        %v1150 = vpop.f32.mrb[0].mxu0
        %v1151 = vadd.f32 0.0, %v1150
        %v1152 = vpop.f32.mrb[0].mxu0
        %v1153 = vpop.f32.mrb[0].mxu0
        %v1154 = vpop.f32.mrb[0].mxu0
        %1155 = vdwg.mxu0
        %v1157 = vsel %vm333, %v1109, 0
        %1159 = vmatprep.subr.bf16.mxu0 0
        %1160 = vmatpush1.bf16.msra.mxu0 %v1157
        %1161 = vmatprep.subr.bf16.mxu0 0
        %1162 = vmatpush1.bf16.msra.mxu0 0
        %1163 = vmatprep.subr.bf16.mxu0 0
        %1164 = vmatpush1.bf16.msra.mxu0 0
        %1165 = vmatprep.subr.bf16.mxu0 0
        %1166 = vmatpush1.bf16.msra.mxu0 0
        %1167 = vmatprep.subr.bf16.mxu0 0
        %1168 = vmatpush1.bf16.msra.mxu0 0
        %1169 = vmatprep.subr.bf16.mxu0 0
        %1170 = vmatpush1.bf16.msra.mxu0 0
        %1171 = vmatprep.subr.bf16.mxu0 0
        %1172 = vmatpush1.bf16.msra.mxu0 0
        %1173 = vmatprep.subr.bf16.mxu0 0
        %1174 = vmatpush1.bf16.msra.mxu0 0
        %1175 = vmatprep.subr.bf16.mxu0 0
        %1176 = vmatpush1.bf16.msra.mxu0 0
        %1177 = vmatprep.subr.bf16.mxu0 0
        %1178 = vmatpush1.bf16.msra.mxu0 0
        %1179 = vmatprep.subr.bf16.mxu0 0
        %1180 = vmatpush1.bf16.msra.mxu0 0
        %1181 = vmatprep.subr.bf16.mxu0 0
        %1182 = vmatpush1.bf16.msra.mxu0 0
        %1183 = vmatprep.subr.bf16.mxu0 0
        %1184 = vmatpush1.bf16.msra.mxu0 0
        %1185 = vmatprep.subr.bf16.mxu0 0
        %1186 = vmatpush1.bf16.msra.mxu0 0
        %1187 = vmatprep.subr.bf16.mxu0 0
        %1188 = vmatpush1.bf16.msra.mxu0 0
        %1189 = vmatprep.subr.bf16.mxu0 0
        %1190 = vmatpush1.bf16.msra.mxu0 0
        %1191 = vmatprep.mubr.bf16.mxu0 0
        %1192 = vmatmul.mubr.bf16.gmra.mrb[0].mxu0 %v378
        %v1193 = vpop.f32.mrb[0].mxu0
        %v1194 = vadd.f32 %v1151, %v1193
        %v1195 = vpop.f32.mrb[0].mxu0
        %v1196 = vpop.f32.mrb[0].mxu0
        %v1197 = vpop.f32.mrb[0].mxu0
        %1198 = vdwg.mxu0
        %1199 = vrot.lane.b32.xlu0 %v1109, 112
        %v1200 = vpop.permute.xlu0 %1199
        %v1202 = vsel %vm333, %v1200, 0
        %1204 = vmatprep.subr.bf16.mxu0 0
        %1205 = vmatpush1.bf16.msra.mxu0 %v1202
        %1206 = vmatprep.subr.bf16.mxu0 0
        %1207 = vmatpush1.bf16.msra.mxu0 0
        %1208 = vmatprep.subr.bf16.mxu0 0
        %1209 = vmatpush1.bf16.msra.mxu0 0
        %1210 = vmatprep.subr.bf16.mxu0 0
        %1211 = vmatpush1.bf16.msra.mxu0 0
        %1212 = vmatprep.subr.bf16.mxu0 0
        %1213 = vmatpush1.bf16.msra.mxu0 0
        %1214 = vmatprep.subr.bf16.mxu0 0
        %1215 = vmatpush1.bf16.msra.mxu0 0
        %1216 = vmatprep.subr.bf16.mxu0 0
        %1217 = vmatpush1.bf16.msra.mxu0 0
        %1218 = vmatprep.subr.bf16.mxu0 0
        %1219 = vmatpush1.bf16.msra.mxu0 0
        %1220 = vmatprep.subr.bf16.mxu0 0
        %1221 = vmatpush1.bf16.msra.mxu0 0
        %1222 = vmatprep.subr.bf16.mxu0 0
        %1223 = vmatpush1.bf16.msra.mxu0 0
        %1224 = vmatprep.subr.bf16.mxu0 0
        %1225 = vmatpush1.bf16.msra.mxu0 0
        %1226 = vmatprep.subr.bf16.mxu0 0
        %1227 = vmatpush1.bf16.msra.mxu0 0
        %1228 = vmatprep.subr.bf16.mxu0 0
        %1229 = vmatpush1.bf16.msra.mxu0 0
        %1230 = vmatprep.subr.bf16.mxu0 0
        %1231 = vmatpush1.bf16.msra.mxu0 0
        %1232 = vmatprep.subr.bf16.mxu0 0
        %1233 = vmatpush1.bf16.msra.mxu0 0
        %1234 = vmatprep.subr.bf16.mxu0 0
        %1235 = vmatpush1.bf16.msra.mxu0 0
        %1236 = vmatprep.mubr.bf16.mxu0 0
        %1237 = vmatmul.mubr.bf16.gmra.mrb[0].mxu0 %v426
        %v1238 = vpop.f32.mrb[0].mxu0
        %v1239 = vadd.f32 0.0, %v1238
        %v1240 = vpop.f32.mrb[0].mxu0
        %v1241 = vpop.f32.mrb[0].mxu0
        %v1242 = vpop.f32.mrb[0].mxu0
        %1243 = vdwg.mxu0
        %v1244 = vadd.f32 %v1194, %v1239
        %1245 = vrot.lane.b32.xlu0 %v1109, 104
        %v1246 = vpop.permute.xlu0 %1245
        %v1248 = vsel %vm333, %v1246, 0
        %1250 = vmatprep.subr.bf16.mxu0 0
        %1251 = vmatpush1.bf16.msra.mxu0 %v1248
        %1252 = vmatprep.subr.bf16.mxu0 0
        %1253 = vmatpush1.bf16.msra.mxu0 0
        %1254 = vmatprep.subr.bf16.mxu0 0
        %1255 = vmatpush1.bf16.msra.mxu0 0
        %1256 = vmatprep.subr.bf16.mxu0 0
        %1257 = vmatpush1.bf16.msra.mxu0 0
        %1258 = vmatprep.subr.bf16.mxu0 0
        %1259 = vmatpush1.bf16.msra.mxu0 0
        %1260 = vmatprep.subr.bf16.mxu0 0
        %1261 = vmatpush1.bf16.msra.mxu0 0
        %1262 = vmatprep.subr.bf16.mxu0 0
        %1263 = vmatpush1.bf16.msra.mxu0 0
        %1264 = vmatprep.subr.bf16.mxu0 0
        %1265 = vmatpush1.bf16.msra.mxu0 0
        %1266 = vmatprep.subr.bf16.mxu0 0
        %1267 = vmatpush1.bf16.msra.mxu0 0
        %1268 = vmatprep.subr.bf16.mxu0 0
        %1269 = vmatpush1.bf16.msra.mxu0 0
        %1270 = vmatprep.subr.bf16.mxu0 0
        %1271 = vmatpush1.bf16.msra.mxu0 0
        %1272 = vmatprep.subr.bf16.mxu0 0
        %1273 = vmatpush1.bf16.msra.mxu0 0
        %1274 = vmatprep.subr.bf16.mxu0 0
        %1275 = vmatpush1.bf16.msra.mxu0 0
        %1276 = vmatprep.subr.bf16.mxu0 0
        %1277 = vmatpush1.bf16.msra.mxu0 0
        %1278 = vmatprep.subr.bf16.mxu0 0
        %1279 = vmatpush1.bf16.msra.mxu0 0
        %1280 = vmatprep.subr.bf16.mxu0 0
        %1281 = vmatpush1.bf16.msra.mxu0 0
        %1282 = vmatprep.mubr.bf16.mxu0 0
        %1283 = vmatmul.mubr.bf16.gmra.mrb[0].mxu0 %v475
        %v1284 = vpop.f32.mrb[0].mxu0
        %v1285 = vadd.f32 0.0, %v1284
        %v1286 = vpop.f32.mrb[0].mxu0
        %v1287 = vpop.f32.mrb[0].mxu0
        %v1288 = vpop.f32.mrb[0].mxu0
        %1289 = vdwg.mxu0
        %v1290 = vadd.f32 %v1244, %v1285
        %v1291 = vadd.f32 %v1290, %v524
        %v1292 = vmax.f32 %v1291, 0.0
        %v1293 = vpack.c.bf16 %v1292, %v1292
        %v1296 = vunpack.c.l.s4 1966171168
        %v1297 = vunpack.c.0.s8 %v1296
        %v1298 = vlaneseq
        %v1299 = vshrl.u32 %v1298, 7
        %v1300 = vsub.s32 %v1297, %v1299
        %v1301 = vrot.slane %v1293, %v1300
        %v1302 = vcombine.high %v1301, %v1301
        %v1304 = vunpack.c.l.s4 1966171168
        %v1305 = vunpack.c.0.s8 %v1304
        %v1306 = vlaneseq
        %v1307 = vshrl.u32 %v1306, 7
        %v1308 = vsub.s32 %v1305, %v1307
        %v1309 = vrot.slane %v1301, %v1308
        %v1311 = vunpack.c.l.s4 1966171168
        %v1312 = vunpack.c.0.s8 %v1311
        %v1313 = vlaneseq
        %v1314 = vshrl.u32 %v1313, 7
        %v1315 = vsub.s32 %v1312, %v1314
        %v1316 = vrot.slane %v1302, %v1315
        %v1317 = vcombine.high %v1309, %v1309
        %v1318 = vcombine.high %v1316, %v1316
        %v1319 = vunpack.i.l.s16 %v1309
        %v1320 = vunpack.i.h.s16 %v1309
        %v1321 = vunpack.i.l.s16 %v1316
        %v1322 = vunpack.i.h.s16 %v1316
        %v1323 = vunpack.i.l.s16 %v1317
        %v1324 = vunpack.i.h.s16 %v1317
        %v1325 = vunpack.i.l.s16 %v1318
        %v1326 = vunpack.i.h.s16 %v1318
        %v1327 = vpack.i.b16 %v1319, %v1319
        %v1328 = vpack.i.b16 %v1320, %v1320
        %v1329 = vpack.i.b16 %v1321, %v1321
        %v1330 = vpack.i.b16 %v1322, %v1322
        %v1331 = vpack.i.b16 %v1323, %v1323
        %v1332 = vpack.i.b16 %v1324, %v1324
        %v1333 = vpack.i.b16 %v1325, %v1325
        %v1334 = vpack.i.b16 %v1326, %v1326
        %v1336 = vunpack.c.l.s4 286326784
        %v1337 = vunpack.c.0.s8 %v1336
        %v1338 = vlaneseq
        %v1339 = vshrl.u32 %v1338, 7
        %v1340 = vsub.s32 %v1337, %v1339
        %v1341 = vrot.slane %v1327, %v1340
        %v1343 = vunpack.c.l.s4 286326784
        %v1344 = vunpack.c.0.s8 %v1343
        %v1345 = vlaneseq
        %v1346 = vshrl.u32 %v1345, 7
        %v1347 = vsub.s32 %v1344, %v1346
        %v1348 = vrot.slane %v1328, %v1347
        %v1350 = vunpack.c.l.s4 286326784
        %v1351 = vunpack.c.0.s8 %v1350
        %v1352 = vlaneseq
        %v1353 = vshrl.u32 %v1352, 7
        %v1354 = vsub.s32 %v1351, %v1353
        %v1355 = vrot.slane %v1329, %v1354
        %v1357 = vunpack.c.l.s4 286326784
        %v1358 = vunpack.c.0.s8 %v1357
        %v1359 = vlaneseq
        %v1360 = vshrl.u32 %v1359, 7
        %v1361 = vsub.s32 %v1358, %v1360
        %v1362 = vrot.slane %v1330, %v1361
        %v1364 = vunpack.c.l.s4 286326784
        %v1365 = vunpack.c.0.s8 %v1364
        %v1366 = vlaneseq
        %v1367 = vshrl.u32 %v1366, 7
        %v1368 = vsub.s32 %v1365, %v1367
        %v1369 = vrot.slane %v1331, %v1368
        %v1371 = vunpack.c.l.s4 286326784
        %v1372 = vunpack.c.0.s8 %v1371
        %v1373 = vlaneseq
        %v1374 = vshrl.u32 %v1373, 7
        %v1375 = vsub.s32 %v1372, %v1374
        %v1376 = vrot.slane %v1332, %v1375
        %v1378 = vunpack.c.l.s4 286326784
        %v1379 = vunpack.c.0.s8 %v1378
        %v1380 = vlaneseq
        %v1381 = vshrl.u32 %v1380, 7
        %v1382 = vsub.s32 %v1379, %v1381
        %v1383 = vrot.slane %v1333, %v1382
        %v1385 = vunpack.c.l.s4 286326784
        %v1386 = vunpack.c.0.s8 %v1385
        %v1387 = vlaneseq
        %v1388 = vshrl.u32 %v1387, 7
        %v1389 = vsub.s32 %v1386, %v1388
        %v1390 = vrot.slane %v1334, %v1389
        %vm1399 = vcmask 58369
        %vm1400 = vsmask.f32 1280
        %vm1401 = vmand %vm1399, %vm1400
        %v1402 = vld [vmem:[%s232] sm:$0x2]
        %v1403 = vsel %vm1401, %v1341, %v1402
        %1404 = vst [vmem:[%s232] sm:$0x2] %v1403
        %v1405 = vld [vmem:[%s232 + $0x4] sm:$0x2]
        %v1406 = vsel %vm1401, %v1348, %v1405
        %1407 = vst [vmem:[%s232 + $0x4] sm:$0x2] %v1406
        %v1408 = vld [vmem:[%s232 + $0x8] sm:$0x2]
        %v1409 = vsel %vm1401, %v1355, %v1408
        %1410 = vst [vmem:[%s232 + $0x8] sm:$0x2] %v1409
        %v1411 = vld [vmem:[%s232 + $0xc] sm:$0x2]
        %v1412 = vsel %vm1401, %v1362, %v1411
        %1413 = vst [vmem:[%s232 + $0xc] sm:$0x2] %v1412
        %v1414 = vld [vmem:[%s232 + $0x10] sm:$0x2]
        %v1415 = vsel %vm1401, %v1369, %v1414
        %1416 = vst [vmem:[%s232 + $0x10] sm:$0x2] %v1415
        %v1417 = vld [vmem:[%s232 + $0x14] sm:$0x2]
        %v1418 = vsel %vm1401, %v1376, %v1417
        %1419 = vst [vmem:[%s232 + $0x14] sm:$0x2] %v1418
        %v1420 = vld [vmem:[%s232 + $0x18] sm:$0x2]
        %v1421 = vsel %vm1401, %v1383, %v1420
        %1422 = vst [vmem:[%s232 + $0x18] sm:$0x2] %v1421
        %v1423 = vld [vmem:[%s232 + $0x1c] sm:$0x2]
        %v1424 = vsel %vm1401, %v1390, %v1423
        %1425 = vst [vmem:[%s232 + $0x1c] sm:$0x2] %v1424
        %v1426 = vld [vmem:[%s208 + $0x3] sm:$0x1]
        %v1427 = vld [vmem:[%s208 + $0xb] sm:$0x1]
        %v1428 = vld [vmem:[%s208 + $0x13] sm:$0x1]
        %v1429 = vld [vmem:[%s208 + $0x1b] sm:$0x1]
        %v1430 = vpack.c.bf16 %v1426, %v1426
        %v1431 = vpack.c.bf16 %v1427, %v1427
        %v1432 = vpack.c.bf16 %v1428, %v1428
        %v1433 = vpack.c.bf16 %v1429, %v1429
        %v1438 = vunpack.c.l.b16 %v1430
        %v1439 = vunpack.c.l.b16 %v1431
        %v1440 = vunpack.c.l.b16 %v1432
        %v1441 = vunpack.c.l.b16 %v1433
        %v1442 = vrot.slane %v1439, 7
        %v1443 = vsel %vm260, %v1442, %v1438
        %v1444 = vrot.slane %v1440, 6
        %v1445 = vsel %vm263, %v1444, %v1443
        %v1446 = vrot.slane %v1441, 5
        %v1447 = vsel %vm266, %v1446, %v1445
        %v1448 = vpack.c.b16 %v1447, %v1447
        %v1450 = vsel %vm281, %v1448, 0
        %1452 = vmatprep.subr.bf16.mxu0 0
        %1453 = vmatpush1.bf16.msra.mxu0 %v277
        %1454 = vmatprep.subr.bf16.mxu0 0
        %1455 = vmatpush1.bf16.msra.mxu0 %v278
        %1456 = vmatprep.subr.bf16.mxu0 0
        %1457 = vmatpush1.bf16.msra.mxu0 0
        %1458 = vmatprep.subr.bf16.mxu0 0
        %1459 = vmatpush1.bf16.msra.mxu0 0
        %1460 = vmatprep.subr.bf16.mxu0 0
        %1461 = vmatpush1.bf16.msra.mxu0 0
        %1462 = vmatprep.subr.bf16.mxu0 0
        %1463 = vmatpush1.bf16.msra.mxu0 0
        %1464 = vmatprep.subr.bf16.mxu0 0
        %1465 = vmatpush1.bf16.msra.mxu0 0
        %1466 = vmatprep.subr.bf16.mxu0 0
        %1467 = vmatpush1.bf16.msra.mxu0 0
        %1468 = vmatprep.subr.bf16.mxu0 0
        %1469 = vmatpush1.bf16.msra.mxu0 0
        %1470 = vmatprep.subr.bf16.mxu0 0
        %1471 = vmatpush1.bf16.msra.mxu0 0
        %1472 = vmatprep.subr.bf16.mxu0 0
        %1473 = vmatpush1.bf16.msra.mxu0 0
        %1474 = vmatprep.subr.bf16.mxu0 0
        %1475 = vmatpush1.bf16.msra.mxu0 0
        %1476 = vmatprep.subr.bf16.mxu0 0
        %1477 = vmatpush1.bf16.msra.mxu0 0
        %1478 = vmatprep.subr.bf16.mxu0 0
        %1479 = vmatpush1.bf16.msra.mxu0 0
        %1480 = vmatprep.subr.bf16.mxu0 0
        %1481 = vmatpush1.bf16.msra.mxu0 0
        %1482 = vmatprep.subr.bf16.mxu0 0
        %1483 = vmatpush1.bf16.msra.mxu0 0
        %1484 = vmatprep.mubr.bf16.mxu0 0
        %1485 = vmatmul.mubr.bf16.gmra.mrb[0].mxu0 %v1450
        %v1486 = vpop.f32.mrb[0].mxu0
        %v1487 = vadd.f32 0.0, %v1486
        %v1488 = vpop.f32.mrb[0].mxu0
        %v1489 = vpop.f32.mrb[0].mxu0
        %v1490 = vpop.f32.mrb[0].mxu0
        %1491 = vdwg.mxu0
        %v1492 = vpack.c.bf16 %v1487, %v1487
        %1494 = vrot.lane.b32.xlu0 %v1492, 120
        %v1495 = vpop.permute.xlu0 %1494
        %v1497 = vsel %vm333, %v1495, 0
        %1499 = vmatprep.subr.bf16.mxu0 0
        %1500 = vmatpush1.bf16.msra.mxu0 %v1497
        %1501 = vmatprep.subr.bf16.mxu0 0
        %1502 = vmatpush1.bf16.msra.mxu0 0
        %1503 = vmatprep.subr.bf16.mxu0 0
        %1504 = vmatpush1.bf16.msra.mxu0 0
        %1505 = vmatprep.subr.bf16.mxu0 0
        %1506 = vmatpush1.bf16.msra.mxu0 0
        %1507 = vmatprep.subr.bf16.mxu0 0
        %1508 = vmatpush1.bf16.msra.mxu0 0
        %1509 = vmatprep.subr.bf16.mxu0 0
        %1510 = vmatpush1.bf16.msra.mxu0 0
        %1511 = vmatprep.subr.bf16.mxu0 0
        %1512 = vmatpush1.bf16.msra.mxu0 0
        %1513 = vmatprep.subr.bf16.mxu0 0
        %1514 = vmatpush1.bf16.msra.mxu0 0
        %1515 = vmatprep.subr.bf16.mxu0 0
        %1516 = vmatpush1.bf16.msra.mxu0 0
        %1517 = vmatprep.subr.bf16.mxu0 0
        %1518 = vmatpush1.bf16.msra.mxu0 0
        %1519 = vmatprep.subr.bf16.mxu0 0
        %1520 = vmatpush1.bf16.msra.mxu0 0
        %1521 = vmatprep.subr.bf16.mxu0 0
        %1522 = vmatpush1.bf16.msra.mxu0 0
        %1523 = vmatprep.subr.bf16.mxu0 0
        %1524 = vmatpush1.bf16.msra.mxu0 0
        %1525 = vmatprep.subr.bf16.mxu0 0
        %1526 = vmatpush1.bf16.msra.mxu0 0
        %1527 = vmatprep.subr.bf16.mxu0 0
        %1528 = vmatpush1.bf16.msra.mxu0 0
        %1529 = vmatprep.subr.bf16.mxu0 0
        %1530 = vmatpush1.bf16.msra.mxu0 0
        %1531 = vmatprep.mubr.bf16.mxu0 0
        %1532 = vmatmul.mubr.bf16.gmra.mrb[0].mxu0 %v331
        %v1533 = vpop.f32.mrb[0].mxu0
        %v1534 = vadd.f32 0.0, %v1533
        %v1535 = vpop.f32.mrb[0].mxu0
        %v1536 = vpop.f32.mrb[0].mxu0
        %v1537 = vpop.f32.mrb[0].mxu0
        %1538 = vdwg.mxu0
        %v1540 = vsel %vm333, %v1492, 0
        %1542 = vmatprep.subr.bf16.mxu0 0
        %1543 = vmatpush1.bf16.msra.mxu0 %v1540
        %1544 = vmatprep.subr.bf16.mxu0 0
        %1545 = vmatpush1.bf16.msra.mxu0 0
        %1546 = vmatprep.subr.bf16.mxu0 0
        %1547 = vmatpush1.bf16.msra.mxu0 0
        %1548 = vmatprep.subr.bf16.mxu0 0
        %1549 = vmatpush1.bf16.msra.mxu0 0
        %1550 = vmatprep.subr.bf16.mxu0 0
        %1551 = vmatpush1.bf16.msra.mxu0 0
        %1552 = vmatprep.subr.bf16.mxu0 0
        %1553 = vmatpush1.bf16.msra.mxu0 0
        %1554 = vmatprep.subr.bf16.mxu0 0
        %1555 = vmatpush1.bf16.msra.mxu0 0
        %1556 = vmatprep.subr.bf16.mxu0 0
        %1557 = vmatpush1.bf16.msra.mxu0 0
        %1558 = vmatprep.subr.bf16.mxu0 0
        %1559 = vmatpush1.bf16.msra.mxu0 0
        %1560 = vmatprep.subr.bf16.mxu0 0
        %1561 = vmatpush1.bf16.msra.mxu0 0
        %1562 = vmatprep.subr.bf16.mxu0 0
        %1563 = vmatpush1.bf16.msra.mxu0 0
        %1564 = vmatprep.subr.bf16.mxu0 0
        %1565 = vmatpush1.bf16.msra.mxu0 0
        %1566 = vmatprep.subr.bf16.mxu0 0
        %1567 = vmatpush1.bf16.msra.mxu0 0
        %1568 = vmatprep.subr.bf16.mxu0 0
        %1569 = vmatpush1.bf16.msra.mxu0 0
        %1570 = vmatprep.subr.bf16.mxu0 0
        %1571 = vmatpush1.bf16.msra.mxu0 0
        %1572 = vmatprep.subr.bf16.mxu0 0
        %1573 = vmatpush1.bf16.msra.mxu0 0
        %1574 = vmatprep.mubr.bf16.mxu0 0
        %1575 = vmatmul.mubr.bf16.gmra.mrb[0].mxu0 %v378
        %v1576 = vpop.f32.mrb[0].mxu0
        %v1577 = vadd.f32 %v1534, %v1576
        %v1578 = vpop.f32.mrb[0].mxu0
        %v1579 = vpop.f32.mrb[0].mxu0
        %v1580 = vpop.f32.mrb[0].mxu0
        %1581 = vdwg.mxu0
        %1582 = vrot.lane.b32.xlu0 %v1492, 112
        %v1583 = vpop.permute.xlu0 %1582
        %v1585 = vsel %vm333, %v1583, 0
        %1587 = vmatprep.subr.bf16.mxu0 0
        %1588 = vmatpush1.bf16.msra.mxu0 %v1585
        %1589 = vmatprep.subr.bf16.mxu0 0
        %1590 = vmatpush1.bf16.msra.mxu0 0
        %1591 = vmatprep.subr.bf16.mxu0 0
        %1592 = vmatpush1.bf16.msra.mxu0 0
        %1593 = vmatprep.subr.bf16.mxu0 0
        %1594 = vmatpush1.bf16.msra.mxu0 0
        %1595 = vmatprep.subr.bf16.mxu0 0
        %1596 = vmatpush1.bf16.msra.mxu0 0
        %1597 = vmatprep.subr.bf16.mxu0 0
        %1598 = vmatpush1.bf16.msra.mxu0 0
        %1599 = vmatprep.subr.bf16.mxu0 0
        %1600 = vmatpush1.bf16.msra.mxu0 0
        %1601 = vmatprep.subr.bf16.mxu0 0
        %1602 = vmatpush1.bf16.msra.mxu0 0
        %1603 = vmatprep.subr.bf16.mxu0 0
        %1604 = vmatpush1.bf16.msra.mxu0 0
        %1605 = vmatprep.subr.bf16.mxu0 0
        %1606 = vmatpush1.bf16.msra.mxu0 0
        %1607 = vmatprep.subr.bf16.mxu0 0
        %1608 = vmatpush1.bf16.msra.mxu0 0
        %1609 = vmatprep.subr.bf16.mxu0 0
        %1610 = vmatpush1.bf16.msra.mxu0 0
        %1611 = vmatprep.subr.bf16.mxu0 0
        %1612 = vmatpush1.bf16.msra.mxu0 0
        %1613 = vmatprep.subr.bf16.mxu0 0
        %1614 = vmatpush1.bf16.msra.mxu0 0
        %1615 = vmatprep.subr.bf16.mxu0 0
        %1616 = vmatpush1.bf16.msra.mxu0 0
        %1617 = vmatprep.subr.bf16.mxu0 0
        %1618 = vmatpush1.bf16.msra.mxu0 0
        %1619 = vmatprep.mubr.bf16.mxu0 0
        %1620 = vmatmul.mubr.bf16.gmra.mrb[0].mxu0 %v426
        %v1621 = vpop.f32.mrb[0].mxu0
        %v1622 = vadd.f32 0.0, %v1621
        %v1623 = vpop.f32.mrb[0].mxu0
        %v1624 = vpop.f32.mrb[0].mxu0
        %v1625 = vpop.f32.mrb[0].mxu0
        %1626 = vdwg.mxu0
        %v1627 = vadd.f32 %v1577, %v1622
        %1628 = vrot.lane.b32.xlu0 %v1492, 104
        %v1629 = vpop.permute.xlu0 %1628
        %v1631 = vsel %vm333, %v1629, 0
        %1633 = vmatprep.subr.bf16.mxu0 0
        %1634 = vmatpush1.bf16.msra.mxu0 %v1631
        %1635 = vmatprep.subr.bf16.mxu0 0
        %1636 = vmatpush1.bf16.msra.mxu0 0
        %1637 = vmatprep.subr.bf16.mxu0 0
        %1638 = vmatpush1.bf16.msra.mxu0 0
        %1639 = vmatprep.subr.bf16.mxu0 0
        %1640 = vmatpush1.bf16.msra.mxu0 0
        %1641 = vmatprep.subr.bf16.mxu0 0
        %1642 = vmatpush1.bf16.msra.mxu0 0
        %1643 = vmatprep.subr.bf16.mxu0 0
        %1644 = vmatpush1.bf16.msra.mxu0 0
        %1645 = vmatprep.subr.bf16.mxu0 0
        %1646 = vmatpush1.bf16.msra.mxu0 0
        %1647 = vmatprep.subr.bf16.mxu0 0
        %1648 = vmatpush1.bf16.msra.mxu0 0
        %1649 = vmatprep.subr.bf16.mxu0 0
        %1650 = vmatpush1.bf16.msra.mxu0 0
        %1651 = vmatprep.subr.bf16.mxu0 0
        %1652 = vmatpush1.bf16.msra.mxu0 0
        %1653 = vmatprep.subr.bf16.mxu0 0
        %1654 = vmatpush1.bf16.msra.mxu0 0
        %1655 = vmatprep.subr.bf16.mxu0 0
        %1656 = vmatpush1.bf16.msra.mxu0 0
        %1657 = vmatprep.subr.bf16.mxu0 0
        %1658 = vmatpush1.bf16.msra.mxu0 0
        %1659 = vmatprep.subr.bf16.mxu0 0
        %1660 = vmatpush1.bf16.msra.mxu0 0
        %1661 = vmatprep.subr.bf16.mxu0 0
        %1662 = vmatpush1.bf16.msra.mxu0 0
        %1663 = vmatprep.subr.bf16.mxu0 0
        %1664 = vmatpush1.bf16.msra.mxu0 0
        %1665 = vmatprep.mubr.bf16.mxu0 0
        %1666 = vmatmul.mubr.bf16.gmra.mrb[0].mxu0 %v475
        %v1667 = vpop.f32.mrb[0].mxu0
        %v1668 = vadd.f32 0.0, %v1667
        %v1669 = vpop.f32.mrb[0].mxu0
        %v1670 = vpop.f32.mrb[0].mxu0
        %v1671 = vpop.f32.mrb[0].mxu0
        %1672 = vdwg.mxu0
        %v1673 = vadd.f32 %v1627, %v1668
        %v1674 = vadd.f32 %v1673, %v524
        %v1675 = vmax.f32 %v1674, 0.0
        %v1676 = vpack.c.bf16 %v1675, %v1675
        %v1679 = vunpack.c.l.s4 1966171168
        %v1680 = vunpack.c.0.s8 %v1679
        %v1681 = vlaneseq
        %v1682 = vshrl.u32 %v1681, 7
        %v1683 = vsub.s32 %v1680, %v1682
        %v1684 = vrot.slane %v1676, %v1683
        %v1685 = vcombine.high %v1684, %v1684
        %v1687 = vunpack.c.l.s4 1966171168
        %v1688 = vunpack.c.0.s8 %v1687
        %v1689 = vlaneseq
        %v1690 = vshrl.u32 %v1689, 7
        %v1691 = vsub.s32 %v1688, %v1690
        %v1692 = vrot.slane %v1684, %v1691
        %v1694 = vunpack.c.l.s4 1966171168
        %v1695 = vunpack.c.0.s8 %v1694
        %v1696 = vlaneseq
        %v1697 = vshrl.u32 %v1696, 7
        %v1698 = vsub.s32 %v1695, %v1697
        %v1699 = vrot.slane %v1685, %v1698
        %v1700 = vcombine.high %v1692, %v1692
        %v1701 = vcombine.high %v1699, %v1699
        %v1702 = vunpack.i.l.s16 %v1692
        %v1703 = vunpack.i.h.s16 %v1692
        %v1704 = vunpack.i.l.s16 %v1699
        %v1705 = vunpack.i.h.s16 %v1699
        %v1706 = vunpack.i.l.s16 %v1700
        %v1707 = vunpack.i.h.s16 %v1700
        %v1708 = vunpack.i.l.s16 %v1701
        %v1709 = vunpack.i.h.s16 %v1701
        %v1710 = vpack.i.b16 %v1702, %v1702
        %v1711 = vpack.i.b16 %v1703, %v1703
        %v1712 = vpack.i.b16 %v1704, %v1704
        %v1713 = vpack.i.b16 %v1705, %v1705
        %v1714 = vpack.i.b16 %v1706, %v1706
        %v1715 = vpack.i.b16 %v1707, %v1707
        %v1716 = vpack.i.b16 %v1708, %v1708
        %v1717 = vpack.i.b16 %v1709, %v1709
        %v1719 = vunpack.c.l.s4 286326784
        %v1720 = vunpack.c.0.s8 %v1719
        %v1721 = vlaneseq
        %v1722 = vshrl.u32 %v1721, 7
        %v1723 = vsub.s32 %v1720, %v1722
        %v1724 = vrot.slane %v1710, %v1723
        %v1726 = vunpack.c.l.s4 286326784
        %v1727 = vunpack.c.0.s8 %v1726
        %v1728 = vlaneseq
        %v1729 = vshrl.u32 %v1728, 7
        %v1730 = vsub.s32 %v1727, %v1729
        %v1731 = vrot.slane %v1711, %v1730
        %v1733 = vunpack.c.l.s4 286326784
        %v1734 = vunpack.c.0.s8 %v1733
        %v1735 = vlaneseq
        %v1736 = vshrl.u32 %v1735, 7
        %v1737 = vsub.s32 %v1734, %v1736
        %v1738 = vrot.slane %v1712, %v1737
        %v1740 = vunpack.c.l.s4 286326784
        %v1741 = vunpack.c.0.s8 %v1740
        %v1742 = vlaneseq
        %v1743 = vshrl.u32 %v1742, 7
        %v1744 = vsub.s32 %v1741, %v1743
        %v1745 = vrot.slane %v1713, %v1744
        %v1747 = vunpack.c.l.s4 286326784
        %v1748 = vunpack.c.0.s8 %v1747
        %v1749 = vlaneseq
        %v1750 = vshrl.u32 %v1749, 7
        %v1751 = vsub.s32 %v1748, %v1750
        %v1752 = vrot.slane %v1714, %v1751
        %v1754 = vunpack.c.l.s4 286326784
        %v1755 = vunpack.c.0.s8 %v1754
        %v1756 = vlaneseq
        %v1757 = vshrl.u32 %v1756, 7
        %v1758 = vsub.s32 %v1755, %v1757
        %v1759 = vrot.slane %v1715, %v1758
        %v1761 = vunpack.c.l.s4 286326784
        %v1762 = vunpack.c.0.s8 %v1761
        %v1763 = vlaneseq
        %v1764 = vshrl.u32 %v1763, 7
        %v1765 = vsub.s32 %v1762, %v1764
        %v1766 = vrot.slane %v1716, %v1765
        %v1768 = vunpack.c.l.s4 286326784
        %v1769 = vunpack.c.0.s8 %v1768
        %v1770 = vlaneseq
        %v1771 = vshrl.u32 %v1770, 7
        %v1772 = vsub.s32 %v1769, %v1771
        %v1773 = vrot.slane %v1717, %v1772
        %vm1782 = vsmask.f32 7942
        %vm1783 = vmand %vm1399, %vm1782
        %v1784 = vld [vmem:[%s232] sm:$0x2]
        %v1785 = vsel %vm1783, %v1724, %v1784
        %1786 = vst [vmem:[%s232] sm:$0x2] %v1785
        %v1787 = vld [vmem:[%s232 + $0x4] sm:$0x2]
        %v1788 = vsel %vm1783, %v1731, %v1787
        %1789 = vst [vmem:[%s232 + $0x4] sm:$0x2] %v1788
        %v1790 = vld [vmem:[%s232 + $0x8] sm:$0x2]
        %v1791 = vsel %vm1783, %v1738, %v1790
        %1792 = vst [vmem:[%s232 + $0x8] sm:$0x2] %v1791
        %v1793 = vld [vmem:[%s232 + $0xc] sm:$0x2]
        %v1794 = vsel %vm1783, %v1745, %v1793
        %1795 = vst [vmem:[%s232 + $0xc] sm:$0x2] %v1794
        %v1796 = vld [vmem:[%s232 + $0x10] sm:$0x2]
        %v1797 = vsel %vm1783, %v1752, %v1796
        %1798 = vst [vmem:[%s232 + $0x10] sm:$0x2] %v1797
        %v1799 = vld [vmem:[%s232 + $0x14] sm:$0x2]
        %v1800 = vsel %vm1783, %v1759, %v1799
        %1801 = vst [vmem:[%s232 + $0x14] sm:$0x2] %v1800
        %v1802 = vld [vmem:[%s232 + $0x18] sm:$0x2]
        %v1803 = vsel %vm1783, %v1766, %v1802
        %1804 = vst [vmem:[%s232 + $0x18] sm:$0x2] %v1803
        %v1805 = vld [vmem:[%s232 + $0x1c] sm:$0x2]
        %v1806 = vsel %vm1783, %v1773, %v1805
        %1807 = vst [vmem:[%s232 + $0x1c] sm:$0x2] %v1806
        %v1808 = vld [vmem:[%s208 + $0x4] sm:$0x1]
        %v1809 = vld [vmem:[%s208 + $0xc] sm:$0x1]
        %v1810 = vld [vmem:[%s208 + $0x14] sm:$0x1]
        %v1811 = vld [vmem:[%s208 + $0x1c] sm:$0x1]
        %v1812 = vpack.c.bf16 %v1808, %v1808
        %v1813 = vpack.c.bf16 %v1809, %v1809
        %v1814 = vpack.c.bf16 %v1810, %v1810
        %v1815 = vpack.c.bf16 %v1811, %v1811
        %v1820 = vunpack.c.l.b16 %v1812
        %v1821 = vunpack.c.l.b16 %v1813
        %v1822 = vunpack.c.l.b16 %v1814
        %v1823 = vunpack.c.l.b16 %v1815
        %v1824 = vrot.slane %v1821, 7
        %v1825 = vsel %vm260, %v1824, %v1820
        %v1826 = vrot.slane %v1822, 6
        %v1827 = vsel %vm263, %v1826, %v1825
        %v1828 = vrot.slane %v1823, 5
        %v1829 = vsel %vm266, %v1828, %v1827
        %v1830 = vpack.c.b16 %v1829, %v1829
        %v1832 = vsel %vm281, %v1830, 0
        %1834 = vmatprep.subr.bf16.mxu0 0
        %1835 = vmatpush1.bf16.msra.mxu0 %v277
        %1836 = vmatprep.subr.bf16.mxu0 0
        %1837 = vmatpush1.bf16.msra.mxu0 %v278
        %1838 = vmatprep.subr.bf16.mxu0 0
        %1839 = vmatpush1.bf16.msra.mxu0 0
        %1840 = vmatprep.subr.bf16.mxu0 0
        %1841 = vmatpush1.bf16.msra.mxu0 0
        %1842 = vmatprep.subr.bf16.mxu0 0
        %1843 = vmatpush1.bf16.msra.mxu0 0
        %1844 = vmatprep.subr.bf16.mxu0 0
        %1845 = vmatpush1.bf16.msra.mxu0 0
        %1846 = vmatprep.subr.bf16.mxu0 0
        %1847 = vmatpush1.bf16.msra.mxu0 0
        %1848 = vmatprep.subr.bf16.mxu0 0
        %1849 = vmatpush1.bf16.msra.mxu0 0
        %1850 = vmatprep.subr.bf16.mxu0 0
        %1851 = vmatpush1.bf16.msra.mxu0 0
        %1852 = vmatprep.subr.bf16.mxu0 0
        %1853 = vmatpush1.bf16.msra.mxu0 0
        %1854 = vmatprep.subr.bf16.mxu0 0
        %1855 = vmatpush1.bf16.msra.mxu0 0
        %1856 = vmatprep.subr.bf16.mxu0 0
        %1857 = vmatpush1.bf16.msra.mxu0 0
        %1858 = vmatprep.subr.bf16.mxu0 0
        %1859 = vmatpush1.bf16.msra.mxu0 0
        %1860 = vmatprep.subr.bf16.mxu0 0
        %1861 = vmatpush1.bf16.msra.mxu0 0
        %1862 = vmatprep.subr.bf16.mxu0 0
        %1863 = vmatpush1.bf16.msra.mxu0 0
        %1864 = vmatprep.subr.bf16.mxu0 0
        %1865 = vmatpush1.bf16.msra.mxu0 0
        %1866 = vmatprep.mubr.bf16.mxu0 0
        %1867 = vmatmul.mubr.bf16.gmra.mrb[0].mxu0 %v1832
        %v1868 = vpop.f32.mrb[0].mxu0
        %v1869 = vadd.f32 0.0, %v1868
        %v1870 = vpop.f32.mrb[0].mxu0
        %v1871 = vpop.f32.mrb[0].mxu0
        %v1872 = vpop.f32.mrb[0].mxu0
        %1873 = vdwg.mxu0
        %v1874 = vpack.c.bf16 %v1869, %v1869
        %1876 = vrot.lane.b32.xlu0 %v1874, 120
        %v1877 = vpop.permute.xlu0 %1876
        %v1879 = vsel %vm333, %v1877, 0
        %1881 = vmatprep.subr.bf16.mxu0 0
        %1882 = vmatpush1.bf16.msra.mxu0 %v1879
        %1883 = vmatprep.subr.bf16.mxu0 0
        %1884 = vmatpush1.bf16.msra.mxu0 0
        %1885 = vmatprep.subr.bf16.mxu0 0
        %1886 = vmatpush1.bf16.msra.mxu0 0
        %1887 = vmatprep.subr.bf16.mxu0 0
        %1888 = vmatpush1.bf16.msra.mxu0 0
        %1889 = vmatprep.subr.bf16.mxu0 0
        %1890 = vmatpush1.bf16.msra.mxu0 0
        %1891 = vmatprep.subr.bf16.mxu0 0
        %1892 = vmatpush1.bf16.msra.mxu0 0
        %1893 = vmatprep.subr.bf16.mxu0 0
        %1894 = vmatpush1.bf16.msra.mxu0 0
        %1895 = vmatprep.subr.bf16.mxu0 0
        %1896 = vmatpush1.bf16.msra.mxu0 0
        %1897 = vmatprep.subr.bf16.mxu0 0
        %1898 = vmatpush1.bf16.msra.mxu0 0
        %1899 = vmatprep.subr.bf16.mxu0 0
        %1900 = vmatpush1.bf16.msra.mxu0 0
        %1901 = vmatprep.subr.bf16.mxu0 0
        %1902 = vmatpush1.bf16.msra.mxu0 0
        %1903 = vmatprep.subr.bf16.mxu0 0
        %1904 = vmatpush1.bf16.msra.mxu0 0
        %1905 = vmatprep.subr.bf16.mxu0 0
        %1906 = vmatpush1.bf16.msra.mxu0 0
        %1907 = vmatprep.subr.bf16.mxu0 0
        %1908 = vmatpush1.bf16.msra.mxu0 0
        %1909 = vmatprep.subr.bf16.mxu0 0
        %1910 = vmatpush1.bf16.msra.mxu0 0
        %1911 = vmatprep.subr.bf16.mxu0 0
        %1912 = vmatpush1.bf16.msra.mxu0 0
        %1913 = vmatprep.mubr.bf16.mxu0 0
        %1914 = vmatmul.mubr.bf16.gmra.mrb[0].mxu0 %v331
        %v1915 = vpop.f32.mrb[0].mxu0
        %v1916 = vadd.f32 0.0, %v1915
        %v1917 = vpop.f32.mrb[0].mxu0
        %v1918 = vpop.f32.mrb[0].mxu0
        %v1919 = vpop.f32.mrb[0].mxu0
        %1920 = vdwg.mxu0
        %v1922 = vsel %vm333, %v1874, 0
        %1924 = vmatprep.subr.bf16.mxu0 0
        %1925 = vmatpush1.bf16.msra.mxu0 %v1922
        %1926 = vmatprep.subr.bf16.mxu0 0
        %1927 = vmatpush1.bf16.msra.mxu0 0
        %1928 = vmatprep.subr.bf16.mxu0 0
        %1929 = vmatpush1.bf16.msra.mxu0 0
        %1930 = vmatprep.subr.bf16.mxu0 0
        %1931 = vmatpush1.bf16.msra.mxu0 0
        %1932 = vmatprep.subr.bf16.mxu0 0
        %1933 = vmatpush1.bf16.msra.mxu0 0
        %1934 = vmatprep.subr.bf16.mxu0 0
        %1935 = vmatpush1.bf16.msra.mxu0 0
        %1936 = vmatprep.subr.bf16.mxu0 0
        %1937 = vmatpush1.bf16.msra.mxu0 0
        %1938 = vmatprep.subr.bf16.mxu0 0
        %1939 = vmatpush1.bf16.msra.mxu0 0
        %1940 = vmatprep.subr.bf16.mxu0 0
        %1941 = vmatpush1.bf16.msra.mxu0 0
        %1942 = vmatprep.subr.bf16.mxu0 0
        %1943 = vmatpush1.bf16.msra.mxu0 0
        %1944 = vmatprep.subr.bf16.mxu0 0
        %1945 = vmatpush1.bf16.msra.mxu0 0
        %1946 = vmatprep.subr.bf16.mxu0 0
        %1947 = vmatpush1.bf16.msra.mxu0 0
        %1948 = vmatprep.subr.bf16.mxu0 0
        %1949 = vmatpush1.bf16.msra.mxu0 0
        %1950 = vmatprep.subr.bf16.mxu0 0
        %1951 = vmatpush1.bf16.msra.mxu0 0
        %1952 = vmatprep.subr.bf16.mxu0 0
        %1953 = vmatpush1.bf16.msra.mxu0 0
        %1954 = vmatprep.subr.bf16.mxu0 0
        %1955 = vmatpush1.bf16.msra.mxu0 0
        %1956 = vmatprep.mubr.bf16.mxu0 0
        %1957 = vmatmul.mubr.bf16.gmra.mrb[0].mxu0 %v378
        %v1958 = vpop.f32.mrb[0].mxu0
        %v1959 = vadd.f32 %v1916, %v1958
        %v1960 = vpop.f32.mrb[0].mxu0
        %v1961 = vpop.f32.mrb[0].mxu0
        %v1962 = vpop.f32.mrb[0].mxu0
        %1963 = vdwg.mxu0
        %1964 = vrot.lane.b32.xlu0 %v1874, 112
        %v1965 = vpop.permute.xlu0 %1964
        %v1967 = vsel %vm333, %v1965, 0
        %1969 = vmatprep.subr.bf16.mxu0 0
        %1970 = vmatpush1.bf16.msra.mxu0 %v1967
        %1971 = vmatprep.subr.bf16.mxu0 0
        %1972 = vmatpush1.bf16.msra.mxu0 0
        %1973 = vmatprep.subr.bf16.mxu0 0
        %1974 = vmatpush1.bf16.msra.mxu0 0
        %1975 = vmatprep.subr.bf16.mxu0 0
        %1976 = vmatpush1.bf16.msra.mxu0 0
        %1977 = vmatprep.subr.bf16.mxu0 0
        %1978 = vmatpush1.bf16.msra.mxu0 0
        %1979 = vmatprep.subr.bf16.mxu0 0
        %1980 = vmatpush1.bf16.msra.mxu0 0
        %1981 = vmatprep.subr.bf16.mxu0 0
        %1982 = vmatpush1.bf16.msra.mxu0 0
        %1983 = vmatprep.subr.bf16.mxu0 0
        %1984 = vmatpush1.bf16.msra.mxu0 0
        %1985 = vmatprep.subr.bf16.mxu0 0
        %1986 = vmatpush1.bf16.msra.mxu0 0
        %1987 = vmatprep.subr.bf16.mxu0 0
        %1988 = vmatpush1.bf16.msra.mxu0 0
        %1989 = vmatprep.subr.bf16.mxu0 0
        %1990 = vmatpush1.bf16.msra.mxu0 0
        %1991 = vmatprep.subr.bf16.mxu0 0
        %1992 = vmatpush1.bf16.msra.mxu0 0
        %1993 = vmatprep.subr.bf16.mxu0 0
        %1994 = vmatpush1.bf16.msra.mxu0 0
        %1995 = vmatprep.subr.bf16.mxu0 0
        %1996 = vmatpush1.bf16.msra.mxu0 0
        %1997 = vmatprep.subr.bf16.mxu0 0
        %1998 = vmatpush1.bf16.msra.mxu0 0
        %1999 = vmatprep.subr.bf16.mxu0 0
        %2000 = vmatpush1.bf16.msra.mxu0 0
        %2001 = vmatprep.mubr.bf16.mxu0 0
        %2002 = vmatmul.mubr.bf16.gmra.mrb[0].mxu0 %v426
        %v2003 = vpop.f32.mrb[0].mxu0
        %v2004 = vadd.f32 0.0, %v2003
        %v2005 = vpop.f32.mrb[0].mxu0
        %v2006 = vpop.f32.mrb[0].mxu0
        %v2007 = vpop.f32.mrb[0].mxu0
        %2008 = vdwg.mxu0
        %v2009 = vadd.f32 %v1959, %v2004
        %2010 = vrot.lane.b32.xlu0 %v1874, 104
        %v2011 = vpop.permute.xlu0 %2010
        %v2013 = vsel %vm333, %v2011, 0
        %2015 = vmatprep.subr.bf16.mxu0 0
        %2016 = vmatpush1.bf16.msra.mxu0 %v2013
        %2017 = vmatprep.subr.bf16.mxu0 0
        %2018 = vmatpush1.bf16.msra.mxu0 0
        %2019 = vmatprep.subr.bf16.mxu0 0
        %2020 = vmatpush1.bf16.msra.mxu0 0
        %2021 = vmatprep.subr.bf16.mxu0 0
        %2022 = vmatpush1.bf16.msra.mxu0 0
        %2023 = vmatprep.subr.bf16.mxu0 0
        %2024 = vmatpush1.bf16.msra.mxu0 0
        %2025 = vmatprep.subr.bf16.mxu0 0
        %2026 = vmatpush1.bf16.msra.mxu0 0
        %2027 = vmatprep.subr.bf16.mxu0 0
        %2028 = vmatpush1.bf16.msra.mxu0 0
        %2029 = vmatprep.subr.bf16.mxu0 0
        %2030 = vmatpush1.bf16.msra.mxu0 0
        %2031 = vmatprep.subr.bf16.mxu0 0
        %2032 = vmatpush1.bf16.msra.mxu0 0
        %2033 = vmatprep.subr.bf16.mxu0 0
        %2034 = vmatpush1.bf16.msra.mxu0 0
        %2035 = vmatprep.subr.bf16.mxu0 0
        %2036 = vmatpush1.bf16.msra.mxu0 0
        %2037 = vmatprep.subr.bf16.mxu0 0
        %2038 = vmatpush1.bf16.msra.mxu0 0
        %2039 = vmatprep.subr.bf16.mxu0 0
        %2040 = vmatpush1.bf16.msra.mxu0 0
        %2041 = vmatprep.subr.bf16.mxu0 0
        %2042 = vmatpush1.bf16.msra.mxu0 0
        %2043 = vmatprep.subr.bf16.mxu0 0
        %2044 = vmatpush1.bf16.msra.mxu0 0
        %2045 = vmatprep.subr.bf16.mxu0 0
        %2046 = vmatpush1.bf16.msra.mxu0 0
        %2047 = vmatprep.mubr.bf16.mxu0 0
        %2048 = vmatmul.mubr.bf16.gmra.mrb[0].mxu0 %v475
        %v2049 = vpop.f32.mrb[0].mxu0
        %v2050 = vadd.f32 0.0, %v2049
        %v2051 = vpop.f32.mrb[0].mxu0
        %v2052 = vpop.f32.mrb[0].mxu0
        %v2053 = vpop.f32.mrb[0].mxu0
        %2054 = vdwg.mxu0
        %v2055 = vadd.f32 %v2009, %v2050
        %v2056 = vadd.f32 %v2055, %v524
        %v2057 = vmax.f32 %v2056, 0.0
        %v2058 = vpack.c.bf16 %v2057, %v2057
        %v2061 = vunpack.c.l.s4 1966171168
        %v2062 = vunpack.c.0.s8 %v2061
        %v2063 = vlaneseq
        %v2064 = vshrl.u32 %v2063, 7
        %v2065 = vsub.s32 %v2062, %v2064
        %v2066 = vrot.slane %v2058, %v2065
        %v2067 = vcombine.high %v2066, %v2066
        %v2069 = vunpack.c.l.s4 1966171168
        %v2070 = vunpack.c.0.s8 %v2069
        %v2071 = vlaneseq
        %v2072 = vshrl.u32 %v2071, 7
        %v2073 = vsub.s32 %v2070, %v2072
        %v2074 = vrot.slane %v2066, %v2073
        %v2076 = vunpack.c.l.s4 1966171168
        %v2077 = vunpack.c.0.s8 %v2076
        %v2078 = vlaneseq
        %v2079 = vshrl.u32 %v2078, 7
        %v2080 = vsub.s32 %v2077, %v2079
        %v2081 = vrot.slane %v2067, %v2080
        %v2082 = vcombine.high %v2074, %v2074
        %v2083 = vcombine.high %v2081, %v2081
        %v2084 = vunpack.i.l.s16 %v2074
        %v2085 = vunpack.i.h.s16 %v2074
        %v2086 = vunpack.i.l.s16 %v2081
        %v2087 = vunpack.i.h.s16 %v2081
        %v2088 = vunpack.i.l.s16 %v2082
        %v2089 = vunpack.i.h.s16 %v2082
        %v2090 = vunpack.i.l.s16 %v2083
        %v2091 = vunpack.i.h.s16 %v2083
        %v2092 = vpack.i.b16 %v2084, %v2084
        %v2093 = vpack.i.b16 %v2085, %v2085
        %v2094 = vpack.i.b16 %v2086, %v2086
        %v2095 = vpack.i.b16 %v2087, %v2087
        %v2096 = vpack.i.b16 %v2088, %v2088
        %v2097 = vpack.i.b16 %v2089, %v2089
        %v2098 = vpack.i.b16 %v2090, %v2090
        %v2099 = vpack.i.b16 %v2091, %v2091
        %v2101 = vunpack.c.l.s4 286326784
        %v2102 = vunpack.c.0.s8 %v2101
        %v2103 = vlaneseq
        %v2104 = vshrl.u32 %v2103, 7
        %v2105 = vsub.s32 %v2102, %v2104
        %v2106 = vrot.slane %v2092, %v2105
        %v2108 = vunpack.c.l.s4 286326784
        %v2109 = vunpack.c.0.s8 %v2108
        %v2110 = vlaneseq
        %v2111 = vshrl.u32 %v2110, 7
        %v2112 = vsub.s32 %v2109, %v2111
        %v2113 = vrot.slane %v2093, %v2112
        %v2115 = vunpack.c.l.s4 286326784
        %v2116 = vunpack.c.0.s8 %v2115
        %v2117 = vlaneseq
        %v2118 = vshrl.u32 %v2117, 7
        %v2119 = vsub.s32 %v2116, %v2118
        %v2120 = vrot.slane %v2094, %v2119
        %v2122 = vunpack.c.l.s4 286326784
        %v2123 = vunpack.c.0.s8 %v2122
        %v2124 = vlaneseq
        %v2125 = vshrl.u32 %v2124, 7
        %v2126 = vsub.s32 %v2123, %v2125
        %v2127 = vrot.slane %v2095, %v2126
        %v2129 = vunpack.c.l.s4 286326784
        %v2130 = vunpack.c.0.s8 %v2129
        %v2131 = vlaneseq
        %v2132 = vshrl.u32 %v2131, 7
        %v2133 = vsub.s32 %v2130, %v2132
        %v2134 = vrot.slane %v2096, %v2133
        %v2136 = vunpack.c.l.s4 286326784
        %v2137 = vunpack.c.0.s8 %v2136
        %v2138 = vlaneseq
        %v2139 = vshrl.u32 %v2138, 7
        %v2140 = vsub.s32 %v2137, %v2139
        %v2141 = vrot.slane %v2097, %v2140
        %v2143 = vunpack.c.l.s4 286326784
        %v2144 = vunpack.c.0.s8 %v2143
        %v2145 = vlaneseq
        %v2146 = vshrl.u32 %v2145, 7
        %v2147 = vsub.s32 %v2144, %v2146
        %v2148 = vrot.slane %v2098, %v2147
        %v2150 = vunpack.c.l.s4 286326784
        %v2151 = vunpack.c.0.s8 %v2150
        %v2152 = vlaneseq
        %v2153 = vshrl.u32 %v2152, 7
        %v2154 = vsub.s32 %v2151, %v2153
        %v2155 = vrot.slane %v2099, %v2154
        %vm2164 = vcmask 59394
        %vm2165 = vsmask.f32 2304
        %vm2166 = vmand %vm2164, %vm2165
        %v2167 = vld [vmem:[%s232] sm:$0x4]
        %v2168 = vsel %vm2166, %v2106, %v2167
        %2169 = vst [vmem:[%s232] sm:$0x4] %v2168
        %v2170 = vld [vmem:[%s232 + $0x4] sm:$0x4]
        %v2171 = vsel %vm2166, %v2113, %v2170
        %2172 = vst [vmem:[%s232 + $0x4] sm:$0x4] %v2171
        %v2173 = vld [vmem:[%s232 + $0x8] sm:$0x4]
        %v2174 = vsel %vm2166, %v2120, %v2173
        %2175 = vst [vmem:[%s232 + $0x8] sm:$0x4] %v2174
        %v2176 = vld [vmem:[%s232 + $0xc] sm:$0x4]
        %v2177 = vsel %vm2166, %v2127, %v2176
        %2178 = vst [vmem:[%s232 + $0xc] sm:$0x4] %v2177
        %v2179 = vld [vmem:[%s232 + $0x10] sm:$0x4]
        %v2180 = vsel %vm2166, %v2134, %v2179
        %2181 = vst [vmem:[%s232 + $0x10] sm:$0x4] %v2180
        %v2182 = vld [vmem:[%s232 + $0x14] sm:$0x4]
        %v2183 = vsel %vm2166, %v2141, %v2182
        %2184 = vst [vmem:[%s232 + $0x14] sm:$0x4] %v2183
        %v2185 = vld [vmem:[%s232 + $0x18] sm:$0x4]
        %v2186 = vsel %vm2166, %v2148, %v2185
        %2187 = vst [vmem:[%s232 + $0x18] sm:$0x4] %v2186
        %v2188 = vld [vmem:[%s232 + $0x1c] sm:$0x4]
        %v2189 = vsel %vm2166, %v2155, %v2188
        %2190 = vst [vmem:[%s232 + $0x1c] sm:$0x4] %v2189
        %v2191 = vld [vmem:[%s208 + $0x5] sm:$0x1]
        %v2192 = vld [vmem:[%s208 + $0xd] sm:$0x1]
        %v2193 = vld [vmem:[%s208 + $0x15] sm:$0x1]
        %v2194 = vld [vmem:[%s208 + $0x1d] sm:$0x1]
        %v2195 = vpack.c.bf16 %v2191, %v2191
        %v2196 = vpack.c.bf16 %v2192, %v2192
        %v2197 = vpack.c.bf16 %v2193, %v2193
        %v2198 = vpack.c.bf16 %v2194, %v2194
        %v2203 = vunpack.c.l.b16 %v2195
        %v2204 = vunpack.c.l.b16 %v2196
        %v2205 = vunpack.c.l.b16 %v2197
        %v2206 = vunpack.c.l.b16 %v2198
        %v2207 = vrot.slane %v2204, 7
        %v2208 = vsel %vm260, %v2207, %v2203
        %v2209 = vrot.slane %v2205, 6
        %v2210 = vsel %vm263, %v2209, %v2208
        %v2211 = vrot.slane %v2206, 5
        %v2212 = vsel %vm266, %v2211, %v2210
        %v2213 = vpack.c.b16 %v2212, %v2212
        %v2215 = vsel %vm281, %v2213, 0
        %2217 = vmatprep.subr.bf16.mxu0 0
        %2218 = vmatpush1.bf16.msra.mxu0 %v277
        %2219 = vmatprep.subr.bf16.mxu0 0
        %2220 = vmatpush1.bf16.msra.mxu0 %v278
        %2221 = vmatprep.subr.bf16.mxu0 0
        %2222 = vmatpush1.bf16.msra.mxu0 0
        %2223 = vmatprep.subr.bf16.mxu0 0
        %2224 = vmatpush1.bf16.msra.mxu0 0
        %2225 = vmatprep.subr.bf16.mxu0 0
        %2226 = vmatpush1.bf16.msra.mxu0 0
        %2227 = vmatprep.subr.bf16.mxu0 0
        %2228 = vmatpush1.bf16.msra.mxu0 0
        %2229 = vmatprep.subr.bf16.mxu0 0
        %2230 = vmatpush1.bf16.msra.mxu0 0
        %2231 = vmatprep.subr.bf16.mxu0 0
        %2232 = vmatpush1.bf16.msra.mxu0 0
        %2233 = vmatprep.subr.bf16.mxu0 0
        %2234 = vmatpush1.bf16.msra.mxu0 0
        %2235 = vmatprep.subr.bf16.mxu0 0
        %2236 = vmatpush1.bf16.msra.mxu0 0
        %2237 = vmatprep.subr.bf16.mxu0 0
        %2238 = vmatpush1.bf16.msra.mxu0 0
        %2239 = vmatprep.subr.bf16.mxu0 0
        %2240 = vmatpush1.bf16.msra.mxu0 0
        %2241 = vmatprep.subr.bf16.mxu0 0
        %2242 = vmatpush1.bf16.msra.mxu0 0
        %2243 = vmatprep.subr.bf16.mxu0 0
        %2244 = vmatpush1.bf16.msra.mxu0 0
        %2245 = vmatprep.subr.bf16.mxu0 0
        %2246 = vmatpush1.bf16.msra.mxu0 0
        %2247 = vmatprep.subr.bf16.mxu0 0
        %2248 = vmatpush1.bf16.msra.mxu0 0
        %2249 = vmatprep.mubr.bf16.mxu0 0
        %2250 = vmatmul.mubr.bf16.gmra.mrb[0].mxu0 %v2215
        %v2251 = vpop.f32.mrb[0].mxu0
        %v2252 = vadd.f32 0.0, %v2251
        %v2253 = vpop.f32.mrb[0].mxu0
        %v2254 = vpop.f32.mrb[0].mxu0
        %v2255 = vpop.f32.mrb[0].mxu0
        %2256 = vdwg.mxu0
        %v2257 = vpack.c.bf16 %v2252, %v2252
        %2259 = vrot.lane.b32.xlu0 %v2257, 120
        %v2260 = vpop.permute.xlu0 %2259
        %v2262 = vsel %vm333, %v2260, 0
        %2264 = vmatprep.subr.bf16.mxu0 0
        %2265 = vmatpush1.bf16.msra.mxu0 %v2262
        %2266 = vmatprep.subr.bf16.mxu0 0
        %2267 = vmatpush1.bf16.msra.mxu0 0
        %2268 = vmatprep.subr.bf16.mxu0 0
        %2269 = vmatpush1.bf16.msra.mxu0 0
        %2270 = vmatprep.subr.bf16.mxu0 0
        %2271 = vmatpush1.bf16.msra.mxu0 0
        %2272 = vmatprep.subr.bf16.mxu0 0
        %2273 = vmatpush1.bf16.msra.mxu0 0
        %2274 = vmatprep.subr.bf16.mxu0 0
        %2275 = vmatpush1.bf16.msra.mxu0 0
        %2276 = vmatprep.subr.bf16.mxu0 0
        %2277 = vmatpush1.bf16.msra.mxu0 0
        %2278 = vmatprep.subr.bf16.mxu0 0
        %2279 = vmatpush1.bf16.msra.mxu0 0
        %2280 = vmatprep.subr.bf16.mxu0 0
        %2281 = vmatpush1.bf16.msra.mxu0 0
        %2282 = vmatprep.subr.bf16.mxu0 0
        %2283 = vmatpush1.bf16.msra.mxu0 0
        %2284 = vmatprep.subr.bf16.mxu0 0
        %2285 = vmatpush1.bf16.msra.mxu0 0
        %2286 = vmatprep.subr.bf16.mxu0 0
        %2287 = vmatpush1.bf16.msra.mxu0 0
        %2288 = vmatprep.subr.bf16.mxu0 0
        %2289 = vmatpush1.bf16.msra.mxu0 0
        %2290 = vmatprep.subr.bf16.mxu0 0
        %2291 = vmatpush1.bf16.msra.mxu0 0
        %2292 = vmatprep.subr.bf16.mxu0 0
        %2293 = vmatpush1.bf16.msra.mxu0 0
        %2294 = vmatprep.subr.bf16.mxu0 0
        %2295 = vmatpush1.bf16.msra.mxu0 0
        %2296 = vmatprep.mubr.bf16.mxu0 0
        %2297 = vmatmul.mubr.bf16.gmra.mrb[0].mxu0 %v331
        %v2298 = vpop.f32.mrb[0].mxu0
        %v2299 = vadd.f32 0.0, %v2298
        %v2300 = vpop.f32.mrb[0].mxu0
        %v2301 = vpop.f32.mrb[0].mxu0
        %v2302 = vpop.f32.mrb[0].mxu0
        %2303 = vdwg.mxu0
        %v2305 = vsel %vm333, %v2257, 0
        %2307 = vmatprep.subr.bf16.mxu0 0
        %2308 = vmatpush1.bf16.msra.mxu0 %v2305
        %2309 = vmatprep.subr.bf16.mxu0 0
        %2310 = vmatpush1.bf16.msra.mxu0 0
        %2311 = vmatprep.subr.bf16.mxu0 0
        %2312 = vmatpush1.bf16.msra.mxu0 0
        %2313 = vmatprep.subr.bf16.mxu0 0
        %2314 = vmatpush1.bf16.msra.mxu0 0
        %2315 = vmatprep.subr.bf16.mxu0 0
        %2316 = vmatpush1.bf16.msra.mxu0 0
        %2317 = vmatprep.subr.bf16.mxu0 0
        %2318 = vmatpush1.bf16.msra.mxu0 0
        %2319 = vmatprep.subr.bf16.mxu0 0
        %2320 = vmatpush1.bf16.msra.mxu0 0
        %2321 = vmatprep.subr.bf16.mxu0 0
        %2322 = vmatpush1.bf16.msra.mxu0 0
        %2323 = vmatprep.subr.bf16.mxu0 0
        %2324 = vmatpush1.bf16.msra.mxu0 0
        %2325 = vmatprep.subr.bf16.mxu0 0
        %2326 = vmatpush1.bf16.msra.mxu0 0
        %2327 = vmatprep.subr.bf16.mxu0 0
        %2328 = vmatpush1.bf16.msra.mxu0 0
        %2329 = vmatprep.subr.bf16.mxu0 0
        %2330 = vmatpush1.bf16.msra.mxu0 0
        %2331 = vmatprep.subr.bf16.mxu0 0
        %2332 = vmatpush1.bf16.msra.mxu0 0
        %2333 = vmatprep.subr.bf16.mxu0 0
        %2334 = vmatpush1.bf16.msra.mxu0 0
        %2335 = vmatprep.subr.bf16.mxu0 0
        %2336 = vmatpush1.bf16.msra.mxu0 0
        %2337 = vmatprep.subr.bf16.mxu0 0
        %2338 = vmatpush1.bf16.msra.mxu0 0
        %2339 = vmatprep.mubr.bf16.mxu0 0
        %2340 = vmatmul.mubr.bf16.gmra.mrb[0].mxu0 %v378
        %v2341 = vpop.f32.mrb[0].mxu0
        %v2342 = vadd.f32 %v2299, %v2341
        %v2343 = vpop.f32.mrb[0].mxu0
        %v2344 = vpop.f32.mrb[0].mxu0
        %v2345 = vpop.f32.mrb[0].mxu0
        %2346 = vdwg.mxu0
        %2347 = vrot.lane.b32.xlu0 %v2257, 112
        %v2348 = vpop.permute.xlu0 %2347
        %v2350 = vsel %vm333, %v2348, 0
        %2352 = vmatprep.subr.bf16.mxu0 0
        %2353 = vmatpush1.bf16.msra.mxu0 %v2350
        %2354 = vmatprep.subr.bf16.mxu0 0
        %2355 = vmatpush1.bf16.msra.mxu0 0
        %2356 = vmatprep.subr.bf16.mxu0 0
        %2357 = vmatpush1.bf16.msra.mxu0 0
        %2358 = vmatprep.subr.bf16.mxu0 0
        %2359 = vmatpush1.bf16.msra.mxu0 0
        %2360 = vmatprep.subr.bf16.mxu0 0
        %2361 = vmatpush1.bf16.msra.mxu0 0
        %2362 = vmatprep.subr.bf16.mxu0 0
        %2363 = vmatpush1.bf16.msra.mxu0 0
        %2364 = vmatprep.subr.bf16.mxu0 0
        %2365 = vmatpush1.bf16.msra.mxu0 0
        %2366 = vmatprep.subr.bf16.mxu0 0
        %2367 = vmatpush1.bf16.msra.mxu0 0
        %2368 = vmatprep.subr.bf16.mxu0 0
        %2369 = vmatpush1.bf16.msra.mxu0 0
        %2370 = vmatprep.subr.bf16.mxu0 0
        %2371 = vmatpush1.bf16.msra.mxu0 0
        %2372 = vmatprep.subr.bf16.mxu0 0
        %2373 = vmatpush1.bf16.msra.mxu0 0
        %2374 = vmatprep.subr.bf16.mxu0 0
        %2375 = vmatpush1.bf16.msra.mxu0 0
        %2376 = vmatprep.subr.bf16.mxu0 0
        %2377 = vmatpush1.bf16.msra.mxu0 0
        %2378 = vmatprep.subr.bf16.mxu0 0
        %2379 = vmatpush1.bf16.msra.mxu0 0
        %2380 = vmatprep.subr.bf16.mxu0 0
        %2381 = vmatpush1.bf16.msra.mxu0 0
        %2382 = vmatprep.subr.bf16.mxu0 0
        %2383 = vmatpush1.bf16.msra.mxu0 0
        %2384 = vmatprep.mubr.bf16.mxu0 0
        %2385 = vmatmul.mubr.bf16.gmra.mrb[0].mxu0 %v426
        %v2386 = vpop.f32.mrb[0].mxu0
        %v2387 = vadd.f32 0.0, %v2386
        %v2388 = vpop.f32.mrb[0].mxu0
        %v2389 = vpop.f32.mrb[0].mxu0
        %v2390 = vpop.f32.mrb[0].mxu0
        %2391 = vdwg.mxu0
        %v2392 = vadd.f32 %v2342, %v2387
        %2393 = vrot.lane.b32.xlu0 %v2257, 104
        %v2394 = vpop.permute.xlu0 %2393
        %v2396 = vsel %vm333, %v2394, 0
        %2398 = vmatprep.subr.bf16.mxu0 0
        %2399 = vmatpush1.bf16.msra.mxu0 %v2396
        %2400 = vmatprep.subr.bf16.mxu0 0
        %2401 = vmatpush1.bf16.msra.mxu0 0
        %2402 = vmatprep.subr.bf16.mxu0 0
        %2403 = vmatpush1.bf16.msra.mxu0 0
        %2404 = vmatprep.subr.bf16.mxu0 0
        %2405 = vmatpush1.bf16.msra.mxu0 0
        %2406 = vmatprep.subr.bf16.mxu0 0
        %2407 = vmatpush1.bf16.msra.mxu0 0
        %2408 = vmatprep.subr.bf16.mxu0 0
        %2409 = vmatpush1.bf16.msra.mxu0 0
        %2410 = vmatprep.subr.bf16.mxu0 0
        %2411 = vmatpush1.bf16.msra.mxu0 0
        %2412 = vmatprep.subr.bf16.mxu0 0
        %2413 = vmatpush1.bf16.msra.mxu0 0
        %2414 = vmatprep.subr.bf16.mxu0 0
        %2415 = vmatpush1.bf16.msra.mxu0 0
        %2416 = vmatprep.subr.bf16.mxu0 0
        %2417 = vmatpush1.bf16.msra.mxu0 0
        %2418 = vmatprep.subr.bf16.mxu0 0
        %2419 = vmatpush1.bf16.msra.mxu0 0
        %2420 = vmatprep.subr.bf16.mxu0 0
        %2421 = vmatpush1.bf16.msra.mxu0 0
        %2422 = vmatprep.subr.bf16.mxu0 0
        %2423 = vmatpush1.bf16.msra.mxu0 0
        %2424 = vmatprep.subr.bf16.mxu0 0
        %2425 = vmatpush1.bf16.msra.mxu0 0
        %2426 = vmatprep.subr.bf16.mxu0 0
        %2427 = vmatpush1.bf16.msra.mxu0 0
        %2428 = vmatprep.subr.bf16.mxu0 0
        %2429 = vmatpush1.bf16.msra.mxu0 0
        %2430 = vmatprep.mubr.bf16.mxu0 0
        %2431 = vmatmul.mubr.bf16.gmra.mrb[0].mxu0 %v475
        %v2432 = vpop.f32.mrb[0].mxu0
        %v2433 = vadd.f32 0.0, %v2432
        %v2434 = vpop.f32.mrb[0].mxu0
        %v2435 = vpop.f32.mrb[0].mxu0
        %v2436 = vpop.f32.mrb[0].mxu0
        %2437 = vdwg.mxu0
        %v2438 = vadd.f32 %v2392, %v2433
        %v2439 = vadd.f32 %v2438, %v524
        %v2440 = vmax.f32 %v2439, 0.0
        %v2441 = vpack.c.bf16 %v2440, %v2440
        %v2444 = vunpack.c.l.s4 1966171168
        %v2445 = vunpack.c.0.s8 %v2444
        %v2446 = vlaneseq
        %v2447 = vshrl.u32 %v2446, 7
        %v2448 = vsub.s32 %v2445, %v2447
        %v2449 = vrot.slane %v2441, %v2448
        %v2450 = vcombine.high %v2449, %v2449
        %v2452 = vunpack.c.l.s4 1966171168
        %v2453 = vunpack.c.0.s8 %v2452
        %v2454 = vlaneseq
        %v2455 = vshrl.u32 %v2454, 7
        %v2456 = vsub.s32 %v2453, %v2455
        %v2457 = vrot.slane %v2449, %v2456
        %v2459 = vunpack.c.l.s4 1966171168
        %v2460 = vunpack.c.0.s8 %v2459
        %v2461 = vlaneseq
        %v2462 = vshrl.u32 %v2461, 7
        %v2463 = vsub.s32 %v2460, %v2462
        %v2464 = vrot.slane %v2450, %v2463
        %v2465 = vcombine.high %v2457, %v2457
        %v2466 = vcombine.high %v2464, %v2464
        %v2467 = vunpack.i.l.s16 %v2457
        %v2468 = vunpack.i.h.s16 %v2457
        %v2469 = vunpack.i.l.s16 %v2464
        %v2470 = vunpack.i.h.s16 %v2464
        %v2471 = vunpack.i.l.s16 %v2465
        %v2472 = vunpack.i.h.s16 %v2465
        %v2473 = vunpack.i.l.s16 %v2466
        %v2474 = vunpack.i.h.s16 %v2466
        %v2475 = vpack.i.b16 %v2467, %v2467
        %v2476 = vpack.i.b16 %v2468, %v2468
        %v2477 = vpack.i.b16 %v2469, %v2469
        %v2478 = vpack.i.b16 %v2470, %v2470
        %v2479 = vpack.i.b16 %v2471, %v2471
        %v2480 = vpack.i.b16 %v2472, %v2472
        %v2481 = vpack.i.b16 %v2473, %v2473
        %v2482 = vpack.i.b16 %v2474, %v2474
        %v2484 = vunpack.c.l.s4 286326784
        %v2485 = vunpack.c.0.s8 %v2484
        %v2486 = vlaneseq
        %v2487 = vshrl.u32 %v2486, 7
        %v2488 = vsub.s32 %v2485, %v2487
        %v2489 = vrot.slane %v2475, %v2488
        %v2491 = vunpack.c.l.s4 286326784
        %v2492 = vunpack.c.0.s8 %v2491
        %v2493 = vlaneseq
        %v2494 = vshrl.u32 %v2493, 7
        %v2495 = vsub.s32 %v2492, %v2494
        %v2496 = vrot.slane %v2476, %v2495
        %v2498 = vunpack.c.l.s4 286326784
        %v2499 = vunpack.c.0.s8 %v2498
        %v2500 = vlaneseq
        %v2501 = vshrl.u32 %v2500, 7
        %v2502 = vsub.s32 %v2499, %v2501
        %v2503 = vrot.slane %v2477, %v2502
        %v2505 = vunpack.c.l.s4 286326784
        %v2506 = vunpack.c.0.s8 %v2505
        %v2507 = vlaneseq
        %v2508 = vshrl.u32 %v2507, 7
        %v2509 = vsub.s32 %v2506, %v2508
        %v2510 = vrot.slane %v2478, %v2509
        %v2512 = vunpack.c.l.s4 286326784
        %v2513 = vunpack.c.0.s8 %v2512
        %v2514 = vlaneseq
        %v2515 = vshrl.u32 %v2514, 7
        %v2516 = vsub.s32 %v2513, %v2515
        %v2517 = vrot.slane %v2479, %v2516
        %v2519 = vunpack.c.l.s4 286326784
        %v2520 = vunpack.c.0.s8 %v2519
        %v2521 = vlaneseq
        %v2522 = vshrl.u32 %v2521, 7
        %v2523 = vsub.s32 %v2520, %v2522
        %v2524 = vrot.slane %v2480, %v2523
        %v2526 = vunpack.c.l.s4 286326784
        %v2527 = vunpack.c.0.s8 %v2526
        %v2528 = vlaneseq
        %v2529 = vshrl.u32 %v2528, 7
        %v2530 = vsub.s32 %v2527, %v2529
        %v2531 = vrot.slane %v2481, %v2530
        %v2533 = vunpack.c.l.s4 286326784
        %v2534 = vunpack.c.0.s8 %v2533
        %v2535 = vlaneseq
        %v2536 = vshrl.u32 %v2535, 7
        %v2537 = vsub.s32 %v2534, %v2536
        %v2538 = vrot.slane %v2482, %v2537
        %vm2547 = vsmask.f32 7946
        %vm2548 = vmand %vm2164, %vm2547
        %v2549 = vld [vmem:[%s232] sm:$0x4]
        %v2550 = vsel %vm2548, %v2489, %v2549
        %2551 = vst [vmem:[%s232] sm:$0x4] %v2550
        %v2552 = vld [vmem:[%s232 + $0x4] sm:$0x4]
        %v2553 = vsel %vm2548, %v2496, %v2552
        %2554 = vst [vmem:[%s232 + $0x4] sm:$0x4] %v2553
        %v2555 = vld [vmem:[%s232 + $0x8] sm:$0x4]
        %v2556 = vsel %vm2548, %v2503, %v2555
        %2557 = vst [vmem:[%s232 + $0x8] sm:$0x4] %v2556
        %v2558 = vld [vmem:[%s232 + $0xc] sm:$0x4]
        %v2559 = vsel %vm2548, %v2510, %v2558
        %2560 = vst [vmem:[%s232 + $0xc] sm:$0x4] %v2559
        %v2561 = vld [vmem:[%s232 + $0x10] sm:$0x4]
        %v2562 = vsel %vm2548, %v2517, %v2561
        %2563 = vst [vmem:[%s232 + $0x10] sm:$0x4] %v2562
        %v2564 = vld [vmem:[%s232 + $0x14] sm:$0x4]
        %v2565 = vsel %vm2548, %v2524, %v2564
        %2566 = vst [vmem:[%s232 + $0x14] sm:$0x4] %v2565
        %v2567 = vld [vmem:[%s232 + $0x18] sm:$0x4]
        %v2568 = vsel %vm2548, %v2531, %v2567
        %2569 = vst [vmem:[%s232 + $0x18] sm:$0x4] %v2568
        %v2570 = vld [vmem:[%s232 + $0x1c] sm:$0x4]
        %v2571 = vsel %vm2548, %v2538, %v2570
        %2572 = vst [vmem:[%s232 + $0x1c] sm:$0x4] %v2571
        %v2573 = vld [vmem:[%s208 + $0x6] sm:$0x1]
        %v2574 = vld [vmem:[%s208 + $0xe] sm:$0x1]
        %v2575 = vld [vmem:[%s208 + $0x16] sm:$0x1]
        %v2576 = vld [vmem:[%s208 + $0x1e] sm:$0x1]
        %v2577 = vpack.c.bf16 %v2573, %v2573
        %v2578 = vpack.c.bf16 %v2574, %v2574
        %v2579 = vpack.c.bf16 %v2575, %v2575
        %v2580 = vpack.c.bf16 %v2576, %v2576
        %v2585 = vunpack.c.l.b16 %v2577
        %v2586 = vunpack.c.l.b16 %v2578
        %v2587 = vunpack.c.l.b16 %v2579
        %v2588 = vunpack.c.l.b16 %v2580
        %v2589 = vrot.slane %v2586, 7
        %v2590 = vsel %vm260, %v2589, %v2585
        %v2591 = vrot.slane %v2587, 6
        %v2592 = vsel %vm263, %v2591, %v2590
        %v2593 = vrot.slane %v2588, 5
        %v2594 = vsel %vm266, %v2593, %v2592
        %v2595 = vpack.c.b16 %v2594, %v2594
        %v2597 = vsel %vm281, %v2595, 0
        %2599 = vmatprep.subr.bf16.mxu0 0
        %2600 = vmatpush1.bf16.msra.mxu0 %v277
        %2601 = vmatprep.subr.bf16.mxu0 0
        %2602 = vmatpush1.bf16.msra.mxu0 %v278
        %2603 = vmatprep.subr.bf16.mxu0 0
        %2604 = vmatpush1.bf16.msra.mxu0 0
        %2605 = vmatprep.subr.bf16.mxu0 0
        %2606 = vmatpush1.bf16.msra.mxu0 0
        %2607 = vmatprep.subr.bf16.mxu0 0
        %2608 = vmatpush1.bf16.msra.mxu0 0
        %2609 = vmatprep.subr.bf16.mxu0 0
        %2610 = vmatpush1.bf16.msra.mxu0 0
        %2611 = vmatprep.subr.bf16.mxu0 0
        %2612 = vmatpush1.bf16.msra.mxu0 0
        %2613 = vmatprep.subr.bf16.mxu0 0
        %2614 = vmatpush1.bf16.msra.mxu0 0
        %2615 = vmatprep.subr.bf16.mxu0 0
        %2616 = vmatpush1.bf16.msra.mxu0 0
        %2617 = vmatprep.subr.bf16.mxu0 0
        %2618 = vmatpush1.bf16.msra.mxu0 0
        %2619 = vmatprep.subr.bf16.mxu0 0
        %2620 = vmatpush1.bf16.msra.mxu0 0
        %2621 = vmatprep.subr.bf16.mxu0 0
        %2622 = vmatpush1.bf16.msra.mxu0 0
        %2623 = vmatprep.subr.bf16.mxu0 0
        %2624 = vmatpush1.bf16.msra.mxu0 0
        %2625 = vmatprep.subr.bf16.mxu0 0
        %2626 = vmatpush1.bf16.msra.mxu0 0
        %2627 = vmatprep.subr.bf16.mxu0 0
        %2628 = vmatpush1.bf16.msra.mxu0 0
        %2629 = vmatprep.subr.bf16.mxu0 0
        %2630 = vmatpush1.bf16.msra.mxu0 0
        %2631 = vmatprep.mubr.bf16.mxu0 0
        %2632 = vmatmul.mubr.bf16.gmra.mrb[0].mxu0 %v2597
        %v2633 = vpop.f32.mrb[0].mxu0
        %v2634 = vadd.f32 0.0, %v2633
        %v2635 = vpop.f32.mrb[0].mxu0
        %v2636 = vpop.f32.mrb[0].mxu0
        %v2637 = vpop.f32.mrb[0].mxu0
        %2638 = vdwg.mxu0
        %v2639 = vpack.c.bf16 %v2634, %v2634
        %2641 = vrot.lane.b32.xlu0 %v2639, 120
        %v2642 = vpop.permute.xlu0 %2641
        %v2644 = vsel %vm333, %v2642, 0
        %2646 = vmatprep.subr.bf16.mxu0 0
        %2647 = vmatpush1.bf16.msra.mxu0 %v2644
        %2648 = vmatprep.subr.bf16.mxu0 0
        %2649 = vmatpush1.bf16.msra.mxu0 0
        %2650 = vmatprep.subr.bf16.mxu0 0
        %2651 = vmatpush1.bf16.msra.mxu0 0
        %2652 = vmatprep.subr.bf16.mxu0 0
        %2653 = vmatpush1.bf16.msra.mxu0 0
        %2654 = vmatprep.subr.bf16.mxu0 0
        %2655 = vmatpush1.bf16.msra.mxu0 0
        %2656 = vmatprep.subr.bf16.mxu0 0
        %2657 = vmatpush1.bf16.msra.mxu0 0
        %2658 = vmatprep.subr.bf16.mxu0 0
        %2659 = vmatpush1.bf16.msra.mxu0 0
        %2660 = vmatprep.subr.bf16.mxu0 0
        %2661 = vmatpush1.bf16.msra.mxu0 0
        %2662 = vmatprep.subr.bf16.mxu0 0
        %2663 = vmatpush1.bf16.msra.mxu0 0
        %2664 = vmatprep.subr.bf16.mxu0 0
        %2665 = vmatpush1.bf16.msra.mxu0 0
        %2666 = vmatprep.subr.bf16.mxu0 0
        %2667 = vmatpush1.bf16.msra.mxu0 0
        %2668 = vmatprep.subr.bf16.mxu0 0
        %2669 = vmatpush1.bf16.msra.mxu0 0
        %2670 = vmatprep.subr.bf16.mxu0 0
        %2671 = vmatpush1.bf16.msra.mxu0 0
        %2672 = vmatprep.subr.bf16.mxu0 0
        %2673 = vmatpush1.bf16.msra.mxu0 0
        %2674 = vmatprep.subr.bf16.mxu0 0
        %2675 = vmatpush1.bf16.msra.mxu0 0
        %2676 = vmatprep.subr.bf16.mxu0 0
        %2677 = vmatpush1.bf16.msra.mxu0 0
        %2678 = vmatprep.mubr.bf16.mxu0 0
        %2679 = vmatmul.mubr.bf16.gmra.mrb[0].mxu0 %v331
        %v2680 = vpop.f32.mrb[0].mxu0
        %v2681 = vadd.f32 0.0, %v2680
        %v2682 = vpop.f32.mrb[0].mxu0
        %v2683 = vpop.f32.mrb[0].mxu0
        %v2684 = vpop.f32.mrb[0].mxu0
        %2685 = vdwg.mxu0
        %v2687 = vsel %vm333, %v2639, 0
        %2689 = vmatprep.subr.bf16.mxu0 0
        %2690 = vmatpush1.bf16.msra.mxu0 %v2687
        %2691 = vmatprep.subr.bf16.mxu0 0
        %2692 = vmatpush1.bf16.msra.mxu0 0
        %2693 = vmatprep.subr.bf16.mxu0 0
        %2694 = vmatpush1.bf16.msra.mxu0 0
        %2695 = vmatprep.subr.bf16.mxu0 0
        %2696 = vmatpush1.bf16.msra.mxu0 0
        %2697 = vmatprep.subr.bf16.mxu0 0
        %2698 = vmatpush1.bf16.msra.mxu0 0
        %2699 = vmatprep.subr.bf16.mxu0 0
        %2700 = vmatpush1.bf16.msra.mxu0 0
        %2701 = vmatprep.subr.bf16.mxu0 0
        %2702 = vmatpush1.bf16.msra.mxu0 0
        %2703 = vmatprep.subr.bf16.mxu0 0
        %2704 = vmatpush1.bf16.msra.mxu0 0
        %2705 = vmatprep.subr.bf16.mxu0 0
        %2706 = vmatpush1.bf16.msra.mxu0 0
        %2707 = vmatprep.subr.bf16.mxu0 0
        %2708 = vmatpush1.bf16.msra.mxu0 0
        %2709 = vmatprep.subr.bf16.mxu0 0
        %2710 = vmatpush1.bf16.msra.mxu0 0
        %2711 = vmatprep.subr.bf16.mxu0 0
        %2712 = vmatpush1.bf16.msra.mxu0 0
        %2713 = vmatprep.subr.bf16.mxu0 0
        %2714 = vmatpush1.bf16.msra.mxu0 0
        %2715 = vmatprep.subr.bf16.mxu0 0
        %2716 = vmatpush1.bf16.msra.mxu0 0
        %2717 = vmatprep.subr.bf16.mxu0 0
        %2718 = vmatpush1.bf16.msra.mxu0 0
        %2719 = vmatprep.subr.bf16.mxu0 0
        %2720 = vmatpush1.bf16.msra.mxu0 0
        %2721 = vmatprep.mubr.bf16.mxu0 0
        %2722 = vmatmul.mubr.bf16.gmra.mrb[0].mxu0 %v378
        %v2723 = vpop.f32.mrb[0].mxu0
        %v2724 = vadd.f32 %v2681, %v2723
        %v2725 = vpop.f32.mrb[0].mxu0
        %v2726 = vpop.f32.mrb[0].mxu0
        %v2727 = vpop.f32.mrb[0].mxu0
        %2728 = vdwg.mxu0
        %2729 = vrot.lane.b32.xlu0 %v2639, 112
        %v2730 = vpop.permute.xlu0 %2729
        %v2732 = vsel %vm333, %v2730, 0
        %2734 = vmatprep.subr.bf16.mxu0 0
        %2735 = vmatpush1.bf16.msra.mxu0 %v2732
        %2736 = vmatprep.subr.bf16.mxu0 0
        %2737 = vmatpush1.bf16.msra.mxu0 0
        %2738 = vmatprep.subr.bf16.mxu0 0
        %2739 = vmatpush1.bf16.msra.mxu0 0
        %2740 = vmatprep.subr.bf16.mxu0 0
        %2741 = vmatpush1.bf16.msra.mxu0 0
        %2742 = vmatprep.subr.bf16.mxu0 0
        %2743 = vmatpush1.bf16.msra.mxu0 0
        %2744 = vmatprep.subr.bf16.mxu0 0
        %2745 = vmatpush1.bf16.msra.mxu0 0
        %2746 = vmatprep.subr.bf16.mxu0 0
        %2747 = vmatpush1.bf16.msra.mxu0 0
        %2748 = vmatprep.subr.bf16.mxu0 0
        %2749 = vmatpush1.bf16.msra.mxu0 0
        %2750 = vmatprep.subr.bf16.mxu0 0
        %2751 = vmatpush1.bf16.msra.mxu0 0
        %2752 = vmatprep.subr.bf16.mxu0 0
        %2753 = vmatpush1.bf16.msra.mxu0 0
        %2754 = vmatprep.subr.bf16.mxu0 0
        %2755 = vmatpush1.bf16.msra.mxu0 0
        %2756 = vmatprep.subr.bf16.mxu0 0
        %2757 = vmatpush1.bf16.msra.mxu0 0
        %2758 = vmatprep.subr.bf16.mxu0 0
        %2759 = vmatpush1.bf16.msra.mxu0 0
        %2760 = vmatprep.subr.bf16.mxu0 0
        %2761 = vmatpush1.bf16.msra.mxu0 0
        %2762 = vmatprep.subr.bf16.mxu0 0
        %2763 = vmatpush1.bf16.msra.mxu0 0
        %2764 = vmatprep.subr.bf16.mxu0 0
        %2765 = vmatpush1.bf16.msra.mxu0 0
        %2766 = vmatprep.mubr.bf16.mxu0 0
        %2767 = vmatmul.mubr.bf16.gmra.mrb[0].mxu0 %v426
        %v2768 = vpop.f32.mrb[0].mxu0
        %v2769 = vadd.f32 0.0, %v2768
        %v2770 = vpop.f32.mrb[0].mxu0
        %v2771 = vpop.f32.mrb[0].mxu0
        %v2772 = vpop.f32.mrb[0].mxu0
        %2773 = vdwg.mxu0
        %v2774 = vadd.f32 %v2724, %v2769
        %2775 = vrot.lane.b32.xlu0 %v2639, 104
        %v2776 = vpop.permute.xlu0 %2775
        %v2778 = vsel %vm333, %v2776, 0
        %2780 = vmatprep.subr.bf16.mxu0 0
        %2781 = vmatpush1.bf16.msra.mxu0 %v2778
        %2782 = vmatprep.subr.bf16.mxu0 0
        %2783 = vmatpush1.bf16.msra.mxu0 0
        %2784 = vmatprep.subr.bf16.mxu0 0
        %2785 = vmatpush1.bf16.msra.mxu0 0
        %2786 = vmatprep.subr.bf16.mxu0 0
        %2787 = vmatpush1.bf16.msra.mxu0 0
        %2788 = vmatprep.subr.bf16.mxu0 0
        %2789 = vmatpush1.bf16.msra.mxu0 0
        %2790 = vmatprep.subr.bf16.mxu0 0
        %2791 = vmatpush1.bf16.msra.mxu0 0
        %2792 = vmatprep.subr.bf16.mxu0 0
        %2793 = vmatpush1.bf16.msra.mxu0 0
        %2794 = vmatprep.subr.bf16.mxu0 0
        %2795 = vmatpush1.bf16.msra.mxu0 0
        %2796 = vmatprep.subr.bf16.mxu0 0
        %2797 = vmatpush1.bf16.msra.mxu0 0
        %2798 = vmatprep.subr.bf16.mxu0 0
        %2799 = vmatpush1.bf16.msra.mxu0 0
        %2800 = vmatprep.subr.bf16.mxu0 0
        %2801 = vmatpush1.bf16.msra.mxu0 0
        %2802 = vmatprep.subr.bf16.mxu0 0
        %2803 = vmatpush1.bf16.msra.mxu0 0
        %2804 = vmatprep.subr.bf16.mxu0 0
        %2805 = vmatpush1.bf16.msra.mxu0 0
        %2806 = vmatprep.subr.bf16.mxu0 0
        %2807 = vmatpush1.bf16.msra.mxu0 0
        %2808 = vmatprep.subr.bf16.mxu0 0
        %2809 = vmatpush1.bf16.msra.mxu0 0
        %2810 = vmatprep.subr.bf16.mxu0 0
        %2811 = vmatpush1.bf16.msra.mxu0 0
        %2812 = vmatprep.mubr.bf16.mxu0 0
        %2813 = vmatmul.mubr.bf16.gmra.mrb[0].mxu0 %v475
        %v2814 = vpop.f32.mrb[0].mxu0
        %v2815 = vadd.f32 0.0, %v2814
        %v2816 = vpop.f32.mrb[0].mxu0
        %v2817 = vpop.f32.mrb[0].mxu0
        %v2818 = vpop.f32.mrb[0].mxu0
        %2819 = vdwg.mxu0
        %v2820 = vadd.f32 %v2774, %v2815
        %v2821 = vadd.f32 %v2820, %v524
        %v2822 = vmax.f32 %v2821, 0.0
        %v2823 = vpack.c.bf16 %v2822, %v2822
        %v2826 = vunpack.c.l.s4 1966171168
        %v2827 = vunpack.c.0.s8 %v2826
        %v2828 = vlaneseq
        %v2829 = vshrl.u32 %v2828, 7
        %v2830 = vsub.s32 %v2827, %v2829
        %v2831 = vrot.slane %v2823, %v2830
        %v2832 = vcombine.high %v2831, %v2831
        %v2834 = vunpack.c.l.s4 1966171168
        %v2835 = vunpack.c.0.s8 %v2834
        %v2836 = vlaneseq
        %v2837 = vshrl.u32 %v2836, 7
        %v2838 = vsub.s32 %v2835, %v2837
        %v2839 = vrot.slane %v2831, %v2838
        %v2841 = vunpack.c.l.s4 1966171168
        %v2842 = vunpack.c.0.s8 %v2841
        %v2843 = vlaneseq
        %v2844 = vshrl.u32 %v2843, 7
        %v2845 = vsub.s32 %v2842, %v2844
        %v2846 = vrot.slane %v2832, %v2845
        %v2847 = vcombine.high %v2839, %v2839
        %v2848 = vcombine.high %v2846, %v2846
        %v2849 = vunpack.i.l.s16 %v2839
        %v2850 = vunpack.i.h.s16 %v2839
        %v2851 = vunpack.i.l.s16 %v2846
        %v2852 = vunpack.i.h.s16 %v2846
        %v2853 = vunpack.i.l.s16 %v2847
        %v2854 = vunpack.i.h.s16 %v2847
        %v2855 = vunpack.i.l.s16 %v2848
        %v2856 = vunpack.i.h.s16 %v2848
        %v2857 = vpack.i.b16 %v2849, %v2849
        %v2858 = vpack.i.b16 %v2850, %v2850
        %v2859 = vpack.i.b16 %v2851, %v2851
        %v2860 = vpack.i.b16 %v2852, %v2852
        %v2861 = vpack.i.b16 %v2853, %v2853
        %v2862 = vpack.i.b16 %v2854, %v2854
        %v2863 = vpack.i.b16 %v2855, %v2855
        %v2864 = vpack.i.b16 %v2856, %v2856
        %v2866 = vunpack.c.l.s4 286326784
        %v2867 = vunpack.c.0.s8 %v2866
        %v2868 = vlaneseq
        %v2869 = vshrl.u32 %v2868, 7
        %v2870 = vsub.s32 %v2867, %v2869
        %v2871 = vrot.slane %v2857, %v2870
        %v2873 = vunpack.c.l.s4 286326784
        %v2874 = vunpack.c.0.s8 %v2873
        %v2875 = vlaneseq
        %v2876 = vshrl.u32 %v2875, 7
        %v2877 = vsub.s32 %v2874, %v2876
        %v2878 = vrot.slane %v2858, %v2877
        %v2880 = vunpack.c.l.s4 286326784
        %v2881 = vunpack.c.0.s8 %v2880
        %v2882 = vlaneseq
        %v2883 = vshrl.u32 %v2882, 7
        %v2884 = vsub.s32 %v2881, %v2883
        %v2885 = vrot.slane %v2859, %v2884
        %v2887 = vunpack.c.l.s4 286326784
        %v2888 = vunpack.c.0.s8 %v2887
        %v2889 = vlaneseq
        %v2890 = vshrl.u32 %v2889, 7
        %v2891 = vsub.s32 %v2888, %v2890
        %v2892 = vrot.slane %v2860, %v2891
        %v2894 = vunpack.c.l.s4 286326784
        %v2895 = vunpack.c.0.s8 %v2894
        %v2896 = vlaneseq
        %v2897 = vshrl.u32 %v2896, 7
        %v2898 = vsub.s32 %v2895, %v2897
        %v2899 = vrot.slane %v2861, %v2898
        %v2901 = vunpack.c.l.s4 286326784
        %v2902 = vunpack.c.0.s8 %v2901
        %v2903 = vlaneseq
        %v2904 = vshrl.u32 %v2903, 7
        %v2905 = vsub.s32 %v2902, %v2904
        %v2906 = vrot.slane %v2862, %v2905
        %v2908 = vunpack.c.l.s4 286326784
        %v2909 = vunpack.c.0.s8 %v2908
        %v2910 = vlaneseq
        %v2911 = vshrl.u32 %v2910, 7
        %v2912 = vsub.s32 %v2909, %v2911
        %v2913 = vrot.slane %v2863, %v2912
        %v2915 = vunpack.c.l.s4 286326784
        %v2916 = vunpack.c.0.s8 %v2915
        %v2917 = vlaneseq
        %v2918 = vshrl.u32 %v2917, 7
        %v2919 = vsub.s32 %v2916, %v2918
        %v2920 = vrot.slane %v2864, %v2919
        %vm2929 = vcmask 60419
        %vm2930 = vsmask.f32 3328
        %vm2931 = vmand %vm2929, %vm2930
        %v2932 = vld [vmem:[%s232] sm:$0x8]
        %v2933 = vsel %vm2931, %v2871, %v2932
        %2934 = vst [vmem:[%s232] sm:$0x8] %v2933
        %v2935 = vld [vmem:[%s232 + $0x4] sm:$0x8]
        %v2936 = vsel %vm2931, %v2878, %v2935
        %2937 = vst [vmem:[%s232 + $0x4] sm:$0x8] %v2936
        %v2938 = vld [vmem:[%s232 + $0x8] sm:$0x8]
        %v2939 = vsel %vm2931, %v2885, %v2938
        %2940 = vst [vmem:[%s232 + $0x8] sm:$0x8] %v2939
        %v2941 = vld [vmem:[%s232 + $0xc] sm:$0x8]
        %v2942 = vsel %vm2931, %v2892, %v2941
        %2943 = vst [vmem:[%s232 + $0xc] sm:$0x8] %v2942
        %v2944 = vld [vmem:[%s232 + $0x10] sm:$0x8]
        %v2945 = vsel %vm2931, %v2899, %v2944
        %2946 = vst [vmem:[%s232 + $0x10] sm:$0x8] %v2945
        %v2947 = vld [vmem:[%s232 + $0x14] sm:$0x8]
        %v2948 = vsel %vm2931, %v2906, %v2947
        %2949 = vst [vmem:[%s232 + $0x14] sm:$0x8] %v2948
        %v2950 = vld [vmem:[%s232 + $0x18] sm:$0x8]
        %v2951 = vsel %vm2931, %v2913, %v2950
        %2952 = vst [vmem:[%s232 + $0x18] sm:$0x8] %v2951
        %v2953 = vld [vmem:[%s232 + $0x1c] sm:$0x8]
        %v2954 = vsel %vm2931, %v2920, %v2953
        %2955 = vst [vmem:[%s232 + $0x1c] sm:$0x8] %v2954
        %v2956 = vld [vmem:[%s208 + $0x7] sm:$0x1]
        %v2957 = vld [vmem:[%s208 + $0xf] sm:$0x1]
        %v2958 = vld [vmem:[%s208 + $0x17] sm:$0x1]
        %v2959 = vld [vmem:[%s208 + $0x1f] sm:$0x1]
        %v2960 = vpack.c.bf16 %v2956, %v2956
        %v2961 = vpack.c.bf16 %v2957, %v2957
        %v2962 = vpack.c.bf16 %v2958, %v2958
        %v2963 = vpack.c.bf16 %v2959, %v2959
        %v2968 = vunpack.c.l.b16 %v2960
        %v2969 = vunpack.c.l.b16 %v2961
        %v2970 = vunpack.c.l.b16 %v2962
        %v2971 = vunpack.c.l.b16 %v2963
        %v2972 = vrot.slane %v2969, 7
        %v2973 = vsel %vm260, %v2972, %v2968
        %v2974 = vrot.slane %v2970, 6
        %v2975 = vsel %vm263, %v2974, %v2973
        %v2976 = vrot.slane %v2971, 5
        %v2977 = vsel %vm266, %v2976, %v2975
        %v2978 = vpack.c.b16 %v2977, %v2977
        %v2980 = vsel %vm281, %v2978, 0
        %2982 = vmatprep.subr.bf16.mxu0 0
        %2983 = vmatpush1.bf16.msra.mxu0 %v277
        %2984 = vmatprep.subr.bf16.mxu0 0
        %2985 = vmatpush1.bf16.msra.mxu0 %v278
        %2986 = vmatprep.subr.bf16.mxu0 0
        %2987 = vmatpush1.bf16.msra.mxu0 0
        %2988 = vmatprep.subr.bf16.mxu0 0
        %2989 = vmatpush1.bf16.msra.mxu0 0
        %2990 = vmatprep.subr.bf16.mxu0 0
        %2991 = vmatpush1.bf16.msra.mxu0 0
        %2992 = vmatprep.subr.bf16.mxu0 0
        %2993 = vmatpush1.bf16.msra.mxu0 0
        %2994 = vmatprep.subr.bf16.mxu0 0
        %2995 = vmatpush1.bf16.msra.mxu0 0
        %2996 = vmatprep.subr.bf16.mxu0 0
        %2997 = vmatpush1.bf16.msra.mxu0 0
        %2998 = vmatprep.subr.bf16.mxu0 0
        %2999 = vmatpush1.bf16.msra.mxu0 0
        %3000 = vmatprep.subr.bf16.mxu0 0
        %3001 = vmatpush1.bf16.msra.mxu0 0
        %3002 = vmatprep.subr.bf16.mxu0 0
        %3003 = vmatpush1.bf16.msra.mxu0 0
        %3004 = vmatprep.subr.bf16.mxu0 0
        %3005 = vmatpush1.bf16.msra.mxu0 0
        %3006 = vmatprep.subr.bf16.mxu0 0
        %3007 = vmatpush1.bf16.msra.mxu0 0
        %3008 = vmatprep.subr.bf16.mxu0 0
        %3009 = vmatpush1.bf16.msra.mxu0 0
        %3010 = vmatprep.subr.bf16.mxu0 0
        %3011 = vmatpush1.bf16.msra.mxu0 0
        %3012 = vmatprep.subr.bf16.mxu0 0
        %3013 = vmatpush1.bf16.msra.mxu0 0
        %3014 = vmatprep.mubr.bf16.mxu0 0
        %3015 = vmatmul.mubr.bf16.gmra.mrb[0].mxu0 %v2980
        %v3016 = vpop.f32.mrb[0].mxu0
        %v3017 = vadd.f32 0.0, %v3016
        %v3018 = vpop.f32.mrb[0].mxu0
        %v3019 = vpop.f32.mrb[0].mxu0
        %v3020 = vpop.f32.mrb[0].mxu0
        %3021 = vdwg.mxu0
        %v3022 = vpack.c.bf16 %v3017, %v3017
        %3024 = vrot.lane.b32.xlu0 %v3022, 120
        %v3025 = vpop.permute.xlu0 %3024
        %v3027 = vsel %vm333, %v3025, 0
        %3029 = vmatprep.subr.bf16.mxu0 0
        %3030 = vmatpush1.bf16.msra.mxu0 %v3027
        %3031 = vmatprep.subr.bf16.mxu0 0
        %3032 = vmatpush1.bf16.msra.mxu0 0
        %3033 = vmatprep.subr.bf16.mxu0 0
        %3034 = vmatpush1.bf16.msra.mxu0 0
        %3035 = vmatprep.subr.bf16.mxu0 0
        %3036 = vmatpush1.bf16.msra.mxu0 0
        %3037 = vmatprep.subr.bf16.mxu0 0
        %3038 = vmatpush1.bf16.msra.mxu0 0
        %3039 = vmatprep.subr.bf16.mxu0 0
        %3040 = vmatpush1.bf16.msra.mxu0 0
        %3041 = vmatprep.subr.bf16.mxu0 0
        %3042 = vmatpush1.bf16.msra.mxu0 0
        %3043 = vmatprep.subr.bf16.mxu0 0
        %3044 = vmatpush1.bf16.msra.mxu0 0
        %3045 = vmatprep.subr.bf16.mxu0 0
        %3046 = vmatpush1.bf16.msra.mxu0 0
        %3047 = vmatprep.subr.bf16.mxu0 0
        %3048 = vmatpush1.bf16.msra.mxu0 0
        %3049 = vmatprep.subr.bf16.mxu0 0
        %3050 = vmatpush1.bf16.msra.mxu0 0
        %3051 = vmatprep.subr.bf16.mxu0 0
        %3052 = vmatpush1.bf16.msra.mxu0 0
        %3053 = vmatprep.subr.bf16.mxu0 0
        %3054 = vmatpush1.bf16.msra.mxu0 0
        %3055 = vmatprep.subr.bf16.mxu0 0
        %3056 = vmatpush1.bf16.msra.mxu0 0
        %3057 = vmatprep.subr.bf16.mxu0 0
        %3058 = vmatpush1.bf16.msra.mxu0 0
        %3059 = vmatprep.subr.bf16.mxu0 0
        %3060 = vmatpush1.bf16.msra.mxu0 0
        %3061 = vmatprep.mubr.bf16.mxu0 0
        %3062 = vmatmul.mubr.bf16.gmra.mrb[0].mxu0 %v331
        %v3063 = vpop.f32.mrb[0].mxu0
        %v3064 = vadd.f32 0.0, %v3063
        %v3065 = vpop.f32.mrb[0].mxu0
        %v3066 = vpop.f32.mrb[0].mxu0
        %v3067 = vpop.f32.mrb[0].mxu0
        %3068 = vdwg.mxu0
        %v3070 = vsel %vm333, %v3022, 0
        %3072 = vmatprep.subr.bf16.mxu0 0
        %3073 = vmatpush1.bf16.msra.mxu0 %v3070
        %3074 = vmatprep.subr.bf16.mxu0 0
        %3075 = vmatpush1.bf16.msra.mxu0 0
        %3076 = vmatprep.subr.bf16.mxu0 0
        %3077 = vmatpush1.bf16.msra.mxu0 0
        %3078 = vmatprep.subr.bf16.mxu0 0
        %3079 = vmatpush1.bf16.msra.mxu0 0
        %3080 = vmatprep.subr.bf16.mxu0 0
        %3081 = vmatpush1.bf16.msra.mxu0 0
        %3082 = vmatprep.subr.bf16.mxu0 0
        %3083 = vmatpush1.bf16.msra.mxu0 0
        %3084 = vmatprep.subr.bf16.mxu0 0
        %3085 = vmatpush1.bf16.msra.mxu0 0
        %3086 = vmatprep.subr.bf16.mxu0 0
        %3087 = vmatpush1.bf16.msra.mxu0 0
        %3088 = vmatprep.subr.bf16.mxu0 0
        %3089 = vmatpush1.bf16.msra.mxu0 0
        %3090 = vmatprep.subr.bf16.mxu0 0
        %3091 = vmatpush1.bf16.msra.mxu0 0
        %3092 = vmatprep.subr.bf16.mxu0 0
        %3093 = vmatpush1.bf16.msra.mxu0 0
        %3094 = vmatprep.subr.bf16.mxu0 0
        %3095 = vmatpush1.bf16.msra.mxu0 0
        %3096 = vmatprep.subr.bf16.mxu0 0
        %3097 = vmatpush1.bf16.msra.mxu0 0
        %3098 = vmatprep.subr.bf16.mxu0 0
        %3099 = vmatpush1.bf16.msra.mxu0 0
        %3100 = vmatprep.subr.bf16.mxu0 0
        %3101 = vmatpush1.bf16.msra.mxu0 0
        %3102 = vmatprep.subr.bf16.mxu0 0
        %3103 = vmatpush1.bf16.msra.mxu0 0
        %3104 = vmatprep.mubr.bf16.mxu0 0
        %3105 = vmatmul.mubr.bf16.gmra.mrb[0].mxu0 %v378
        %v3106 = vpop.f32.mrb[0].mxu0
        %v3107 = vadd.f32 %v3064, %v3106
        %v3108 = vpop.f32.mrb[0].mxu0
        %v3109 = vpop.f32.mrb[0].mxu0
        %v3110 = vpop.f32.mrb[0].mxu0
        %3111 = vdwg.mxu0
        %3112 = vrot.lane.b32.xlu0 %v3022, 112
        %v3113 = vpop.permute.xlu0 %3112
        %v3115 = vsel %vm333, %v3113, 0
        %3117 = vmatprep.subr.bf16.mxu0 0
        %3118 = vmatpush1.bf16.msra.mxu0 %v3115
        %3119 = vmatprep.subr.bf16.mxu0 0
        %3120 = vmatpush1.bf16.msra.mxu0 0
        %3121 = vmatprep.subr.bf16.mxu0 0
        %3122 = vmatpush1.bf16.msra.mxu0 0
        %3123 = vmatprep.subr.bf16.mxu0 0
        %3124 = vmatpush1.bf16.msra.mxu0 0
        %3125 = vmatprep.subr.bf16.mxu0 0
        %3126 = vmatpush1.bf16.msra.mxu0 0
        %3127 = vmatprep.subr.bf16.mxu0 0
        %3128 = vmatpush1.bf16.msra.mxu0 0
        %3129 = vmatprep.subr.bf16.mxu0 0
        %3130 = vmatpush1.bf16.msra.mxu0 0
        %3131 = vmatprep.subr.bf16.mxu0 0
        %3132 = vmatpush1.bf16.msra.mxu0 0
        %3133 = vmatprep.subr.bf16.mxu0 0
        %3134 = vmatpush1.bf16.msra.mxu0 0
        %3135 = vmatprep.subr.bf16.mxu0 0
        %3136 = vmatpush1.bf16.msra.mxu0 0
        %3137 = vmatprep.subr.bf16.mxu0 0
        %3138 = vmatpush1.bf16.msra.mxu0 0
        %3139 = vmatprep.subr.bf16.mxu0 0
        %3140 = vmatpush1.bf16.msra.mxu0 0
        %3141 = vmatprep.subr.bf16.mxu0 0
        %3142 = vmatpush1.bf16.msra.mxu0 0
        %3143 = vmatprep.subr.bf16.mxu0 0
        %3144 = vmatpush1.bf16.msra.mxu0 0
        %3145 = vmatprep.subr.bf16.mxu0 0
        %3146 = vmatpush1.bf16.msra.mxu0 0
        %3147 = vmatprep.subr.bf16.mxu0 0
        %3148 = vmatpush1.bf16.msra.mxu0 0
        %3149 = vmatprep.mubr.bf16.mxu0 0
        %3150 = vmatmul.mubr.bf16.gmra.mrb[0].mxu0 %v426
        %v3151 = vpop.f32.mrb[0].mxu0
        %v3152 = vadd.f32 0.0, %v3151
        %v3153 = vpop.f32.mrb[0].mxu0
        %v3154 = vpop.f32.mrb[0].mxu0
        %v3155 = vpop.f32.mrb[0].mxu0
        %3156 = vdwg.mxu0
        %v3157 = vadd.f32 %v3107, %v3152
        %3158 = vrot.lane.b32.xlu0 %v3022, 104
        %v3159 = vpop.permute.xlu0 %3158
        %v3161 = vsel %vm333, %v3159, 0
        %3163 = vmatprep.subr.bf16.mxu0 0
        %3164 = vmatpush1.bf16.msra.mxu0 %v3161
        %3165 = vmatprep.subr.bf16.mxu0 0
        %3166 = vmatpush1.bf16.msra.mxu0 0
        %3167 = vmatprep.subr.bf16.mxu0 0
        %3168 = vmatpush1.bf16.msra.mxu0 0
        %3169 = vmatprep.subr.bf16.mxu0 0
        %3170 = vmatpush1.bf16.msra.mxu0 0
        %3171 = vmatprep.subr.bf16.mxu0 0
        %3172 = vmatpush1.bf16.msra.mxu0 0
        %3173 = vmatprep.subr.bf16.mxu0 0
        %3174 = vmatpush1.bf16.msra.mxu0 0
        %3175 = vmatprep.subr.bf16.mxu0 0
        %3176 = vmatpush1.bf16.msra.mxu0 0
        %3177 = vmatprep.subr.bf16.mxu0 0
        %3178 = vmatpush1.bf16.msra.mxu0 0
        %3179 = vmatprep.subr.bf16.mxu0 0
        %3180 = vmatpush1.bf16.msra.mxu0 0
        %3181 = vmatprep.subr.bf16.mxu0 0
        %3182 = vmatpush1.bf16.msra.mxu0 0
        %3183 = vmatprep.subr.bf16.mxu0 0
        %3184 = vmatpush1.bf16.msra.mxu0 0
        %3185 = vmatprep.subr.bf16.mxu0 0
        %3186 = vmatpush1.bf16.msra.mxu0 0
        %3187 = vmatprep.subr.bf16.mxu0 0
        %3188 = vmatpush1.bf16.msra.mxu0 0
        %3189 = vmatprep.subr.bf16.mxu0 0
        %3190 = vmatpush1.bf16.msra.mxu0 0
        %3191 = vmatprep.subr.bf16.mxu0 0
        %3192 = vmatpush1.bf16.msra.mxu0 0
        %3193 = vmatprep.subr.bf16.mxu0 0
        %3194 = vmatpush1.bf16.msra.mxu0 0
        %3195 = vmatprep.mubr.bf16.mxu0 0
        %3196 = vmatmul.mubr.bf16.gmra.mrb[0].mxu0 %v475
        %v3197 = vpop.f32.mrb[0].mxu0
        %v3198 = vadd.f32 0.0, %v3197
        %v3199 = vpop.f32.mrb[0].mxu0
        %v3200 = vpop.f32.mrb[0].mxu0
        %v3201 = vpop.f32.mrb[0].mxu0
        %3202 = vdwg.mxu0
        %v3203 = vadd.f32 %v3157, %v3198
        %v3204 = vadd.f32 %v3203, %v524
        %v3205 = vmax.f32 %v3204, 0.0
        %v3206 = vpack.c.bf16 %v3205, %v3205
        %v3209 = vunpack.c.l.s4 1966171168
        %v3210 = vunpack.c.0.s8 %v3209
        %v3211 = vlaneseq
        %v3212 = vshrl.u32 %v3211, 7
        %v3213 = vsub.s32 %v3210, %v3212
        %v3214 = vrot.slane %v3206, %v3213
        %v3215 = vcombine.high %v3214, %v3214
        %v3217 = vunpack.c.l.s4 1966171168
        %v3218 = vunpack.c.0.s8 %v3217
        %v3219 = vlaneseq
        %v3220 = vshrl.u32 %v3219, 7
        %v3221 = vsub.s32 %v3218, %v3220
        %v3222 = vrot.slane %v3214, %v3221
        %v3224 = vunpack.c.l.s4 1966171168
        %v3225 = vunpack.c.0.s8 %v3224
        %v3226 = vlaneseq
        %v3227 = vshrl.u32 %v3226, 7
        %v3228 = vsub.s32 %v3225, %v3227
        %v3229 = vrot.slane %v3215, %v3228
        %v3230 = vcombine.high %v3222, %v3222
        %v3231 = vcombine.high %v3229, %v3229
        %v3232 = vunpack.i.l.s16 %v3222
        %v3233 = vunpack.i.h.s16 %v3222
        %v3234 = vunpack.i.l.s16 %v3229
        %v3235 = vunpack.i.h.s16 %v3229
        %v3236 = vunpack.i.l.s16 %v3230
        %v3237 = vunpack.i.h.s16 %v3230
        %v3238 = vunpack.i.l.s16 %v3231
        %v3239 = vunpack.i.h.s16 %v3231
        %v3240 = vpack.i.b16 %v3232, %v3232
        %v3241 = vpack.i.b16 %v3233, %v3233
        %v3242 = vpack.i.b16 %v3234, %v3234
        %v3243 = vpack.i.b16 %v3235, %v3235
        %v3244 = vpack.i.b16 %v3236, %v3236
        %v3245 = vpack.i.b16 %v3237, %v3237
        %v3246 = vpack.i.b16 %v3238, %v3238
        %v3247 = vpack.i.b16 %v3239, %v3239
        %v3249 = vunpack.c.l.s4 286326784
        %v3250 = vunpack.c.0.s8 %v3249
        %v3251 = vlaneseq
        %v3252 = vshrl.u32 %v3251, 7
        %v3253 = vsub.s32 %v3250, %v3252
        %v3254 = vrot.slane %v3240, %v3253
        %v3256 = vunpack.c.l.s4 286326784
        %v3257 = vunpack.c.0.s8 %v3256
        %v3258 = vlaneseq
        %v3259 = vshrl.u32 %v3258, 7
        %v3260 = vsub.s32 %v3257, %v3259
        %v3261 = vrot.slane %v3241, %v3260
        %v3263 = vunpack.c.l.s4 286326784
        %v3264 = vunpack.c.0.s8 %v3263
        %v3265 = vlaneseq
        %v3266 = vshrl.u32 %v3265, 7
        %v3267 = vsub.s32 %v3264, %v3266
        %v3268 = vrot.slane %v3242, %v3267
        %v3270 = vunpack.c.l.s4 286326784
        %v3271 = vunpack.c.0.s8 %v3270
        %v3272 = vlaneseq
        %v3273 = vshrl.u32 %v3272, 7
        %v3274 = vsub.s32 %v3271, %v3273
        %v3275 = vrot.slane %v3243, %v3274
        %v3277 = vunpack.c.l.s4 286326784
        %v3278 = vunpack.c.0.s8 %v3277
        %v3279 = vlaneseq
        %v3280 = vshrl.u32 %v3279, 7
        %v3281 = vsub.s32 %v3278, %v3280
        %v3282 = vrot.slane %v3244, %v3281
        %v3284 = vunpack.c.l.s4 286326784
        %v3285 = vunpack.c.0.s8 %v3284
        %v3286 = vlaneseq
        %v3287 = vshrl.u32 %v3286, 7
        %v3288 = vsub.s32 %v3285, %v3287
        %v3289 = vrot.slane %v3245, %v3288
        %v3291 = vunpack.c.l.s4 286326784
        %v3292 = vunpack.c.0.s8 %v3291
        %v3293 = vlaneseq
        %v3294 = vshrl.u32 %v3293, 7
        %v3295 = vsub.s32 %v3292, %v3294
        %v3296 = vrot.slane %v3246, %v3295
        %v3298 = vunpack.c.l.s4 286326784
        %v3299 = vunpack.c.0.s8 %v3298
        %v3300 = vlaneseq
        %v3301 = vshrl.u32 %v3300, 7
        %v3302 = vsub.s32 %v3299, %v3301
        %v3303 = vrot.slane %v3247, %v3302
        %vm3312 = vsmask.f32 7950
        %vm3313 = vmand %vm2929, %vm3312
        %v3314 = vld [vmem:[%s232] sm:$0x8]
        %v3315 = vsel %vm3313, %v3254, %v3314
        %3316 = vst [vmem:[%s232] sm:$0x8] %v3315
        %v3317 = vld [vmem:[%s232 + $0x4] sm:$0x8]
        %v3318 = vsel %vm3313, %v3261, %v3317
        %3319 = vst [vmem:[%s232 + $0x4] sm:$0x8] %v3318
        %v3320 = vld [vmem:[%s232 + $0x8] sm:$0x8]
        %v3321 = vsel %vm3313, %v3268, %v3320
        %3322 = vst [vmem:[%s232 + $0x8] sm:$0x8] %v3321
        %v3323 = vld [vmem:[%s232 + $0xc] sm:$0x8]
        %v3324 = vsel %vm3313, %v3275, %v3323
        %3325 = vst [vmem:[%s232 + $0xc] sm:$0x8] %v3324
        %v3326 = vld [vmem:[%s232 + $0x10] sm:$0x8]
        %v3327 = vsel %vm3313, %v3282, %v3326
        %3328 = vst [vmem:[%s232 + $0x10] sm:$0x8] %v3327
        %v3329 = vld [vmem:[%s232 + $0x14] sm:$0x8]
        %v3330 = vsel %vm3313, %v3289, %v3329
        %3331 = vst [vmem:[%s232 + $0x14] sm:$0x8] %v3330
        %v3332 = vld [vmem:[%s232 + $0x18] sm:$0x8]
        %v3333 = vsel %vm3313, %v3296, %v3332
        %3334 = vst [vmem:[%s232 + $0x18] sm:$0x8] %v3333
        %v3335 = vld [vmem:[%s232 + $0x1c] sm:$0x8]
        %v3336 = vsel %vm3313, %v3303, %v3335
        %3337 = vst [vmem:[%s232 + $0x1c] sm:$0x8] %v3336
        %s3338 = sand.u32 %s134, 1
        %s3339 = scalar_lea.sflag [#allocation4], %s3338
        %s3340 = sand.u32 %s134, 1
        %s3341 = smul.addr %s3340, 32
        %s3342 = scalar_lea.vmem [#allocation5], %s3341
        // Predicated region
        $region41: #{tpu_custom_call.1} parent=35 // pred_check
          %p3343 = pneg %p144
        $region42: #{tpu_custom_call.1} parent=35 // pred_check_branch
          %3345 = sbr.rel (%p3343) target = $region44
        $region43: #{tpu_custom_call.1} parent=35 // pred_region
          %s3347 = ssub.s32 512, 512
          %3348 = vsyncadd %s3339, %s3347
          %s3349 = smul.addr %s25, 8
          %s3350 = sadd.s32 %s26, %s3349
          %s3351 = smul.addr %s3350, 64
          %s3352 = scalar_lea.hbm %s4, %s3351
          %s3353 = sshll.u32 %s3342, 4
          %s3354 = int_to_ptr.vmem [resolvable:$true] %s3353
          %3359 = dma.vmem_to_hbm [thread:$0]  %s3354, 512, %s3352, %s3339, 64, 64, 4
        $region44: #{tpu_custom_call.1} parent=35 // pred_fallthru
          _
      $region36: #{tpu_custom_call.1} parent=5 // pred_fallthru
        _
      %p3360 = scmp.le.s32.totalorder 2, %s16
      // Predicated region
      $region45: #{tpu_custom_call.1} parent=5 // pred_check
        %p3361 = pneg %p3360
      $region46: #{tpu_custom_call.1} parent=5 // pred_check_branch
        %3363 = sbr.rel (%p3361) target = $region48
      $region47: #{tpu_custom_call.1} parent=5 // pred_region
        %s3364 = ssub.s32 %s16, 2
        // Predicated region
        $region49: #{tpu_custom_call.1} parent=47 // pred_check
          %p3365 = pneg %p150
        $region50: #{tpu_custom_call.1} parent=47 // pred_check_branch
          %3367 = sbr.rel (%p3365) target = $region52
        $region51: #{tpu_custom_call.1} parent=47 // pred_region
          %s3368 = sand.u32 %s135, 1
          %s3369 = scalar_lea.sflag [#allocation4], %s3368
          %s3370 = sand.u32 %s135, 1
          %s3371 = smul.addr %s3370, 32
          %s3372 = scalar_lea.vmem [#allocation5], %s3371
          %3373 = dma.done %s3369, 512
        $region52: #{tpu_custom_call.1} parent=47 // pred_fallthru
          _
      $region48: #{tpu_custom_call.1} parent=5 // pred_fallthru
        _
    $region6: #{tpu_custom_call.1} parent=1 // loop_footer
      %s20 = sadd.s32 1, %s16
    $region7: #{tpu_custom_call.1} parent=1 // loop_footer_branch
      %15 = sbr.rel target = $region3
    $region8: #{tpu_custom_call.1} parent=1 // loop_exit
      _
    %3374 = vsyncpa [#allocation3], 1
    %s3375 = scalar_lea.sflag [#allocation3], 1
    %3376 = vsyncpa %s3375, 1
    %3377 = vsyncpa [#allocation4], 1
    %s3378 = scalar_lea.sflag [#allocation4], 1
    %3379 = vsyncpa %s3378, 1

</llo_original>
